<compile_context>
chip_gen: v7x
topology: tpu7x:2x2x1
jax: 0.10.0
libtpu: 0.0.40
codegen_flags: <defaults>
</compile_context>

<pallas_src>
import functools

import jax
import jax.numpy as jnp
from jax import lax
from jax.experimental import pallas as pl
from jax.experimental.pallas import tpu as pltpu


# ---------------------------------------------------------------------------
# Generation-aware tuning knobs
# ---------------------------------------------------------------------------

def _tpu_tuning():
    """Returns (vmem_limit_bytes, dwconv MAC compute dtype) for the local chip."""
    kind = ""
    try:
        kind = jax.devices()[0].device_kind.lower()
    except Exception:
        pass
    if "v7" in kind:
        vmem = 48 * 1024 * 1024          # 64 MiB physical on v7x: keep headroom
    elif "v5" in kind or "v6" in kind:
        vmem = 100 * 1024 * 1024         # 128 MiB physical on v5e/v6e
    else:
        vmem = 64 * 1024 * 1024
    # v6e/v7x VALUs are bf16-capable; v5e is not (keep f32 MACs there).
    dw_dtype = jnp.bfloat16 if ("v6" in kind or "v7" in kind) else jnp.float32
    return vmem, dw_dtype


# ---------------------------------------------------------------------------
# In-kernel helpers (register values in channels-first (C, HW) form)
# ---------------------------------------------------------------------------

def _layernorm_affine(x, w_eff, b_eff, eps=1e-5):
    # WithBias LayerNorm over channels with the LN affine and modulation folded
    # on the host: w_eff = ln_w*(1+scale), b_eff = ln_b*(1+scale)+shift.
    mu = jnp.mean(x, axis=0, keepdims=True)
    xc = x - mu
    var = jnp.mean(xc * xc, axis=0, keepdims=True)
    return xc * lax.rsqrt(var + eps) * w_eff + b_eff


def _dwconv3x3_flat(x, w9_ref, b_ref, H, W, compute_dtype):
    # 3x3 depthwise conv (padding=1) on x: (C, H*W), flat spatial on lanes.
    # No concatenate copies: pltpu.roll provides the shifts (XLU slot, f32),
    # 2 column masks handle the horizontal halo (reused across all 3 rows),
    # 2 row masks handle the vertical halo (applied to the per-row weighted
    # sums so only 2 vertical rolls are needed).  MAC multiplies in
    # `compute_dtype` (bf16 on v6e/v7x), accumulation in f32.
    C, HW = x.shape
    flat = lax.broadcasted_iota(jnp.int32, (1, HW), 1)
    col = flat % W

    # Horizontally shifted + masked variants (f32 rolls, then cast for MACs).
    left = jnp.where(col >= 1, pltpu.roll(x, shift=1, axis=1), 0.0)        # (i, j-1)
    right = jnp.where(col <= W - 2, pltpu.roll(x, shift=HW - 1, axis=1), 0.0)  # (i, j+1)

    xc = x.astype(compute_dtype)
    hl = left.astype(compute_dtype)
    hr = right.astype(compute_dtype)
    w9 = w9_ref[...]                                     # (9, C, 1) in compute dtype

    s_m1 = hl * w9[0] + xc * w9[1] + hr * w9[2]          # taps from row i-1
    s_0 = hl * w9[3] + xc * w9[4] + hr * w9[5]           # taps from row i
    s_p1 = hl * w9[6] + xc * w9[7] + hr * w9[8]          # taps from row i+1

    up = jnp.where(flat >= W,                            # valid iff i >= 1
                   pltpu.roll(s_m1.astype(jnp.float32), shift=W, axis=1), 0.0)
    down = jnp.where(flat < (H - 1) * W,                 # valid iff i <= H-2
                     pltpu.roll(s_p1.astype(jnp.float32), shift=HW - W, axis=1), 0.0)
    return s_0.astype(jnp.float32) + up + down + b_ref[...]


# ---------------------------------------------------------------------------
# Fused Pallas kernels (one grid step = one batch image)
# ---------------------------------------------------------------------------

def attn_block_kernel(x_ref, w_eff_ref, b_eff_ref,
                      qkv_w_ref, qkv_b_ref, dw_w_ref, dw_b_ref,
                      proj_w_ref, proj_b_ref, temp_ref, bias_ref, o_ref,
                      *, H, W, num_heads, dw_dtype):
    del num_heads  # head structure is carried by temp_ref / bias_ref
    x = x_ref[0]                                              # (C, HW) f32
    C, HW = x.shape

    y = _layernorm_affine(x, w_eff_ref[0], b_eff_ref[0])
    # qkv 1x1 conv: (3C, C) @ (C, HW), bf16 operands, f32 accumulation.
    qkv = jnp.dot(qkv_w_ref[...], y.astype(jnp.bfloat16),
                  preferred_element_type=jnp.float32) + qkv_b_ref[...]
    qkv = _dwconv3x3_flat(qkv, dw_w_ref, dw_b_ref, H, W, dw_dtype)

    q, k, v = qkv[:C], qkv[C:2 * C], qkv[2 * C:]
    # F.normalize(dim=-1): x / max(||x||, 1e-12)   (rsqrt goes to the EUP slot)
    qn = q * lax.rsqrt(jnp.maximum(jnp.sum(q * q, -1, keepdims=True), 1e-24))
    kn = k * lax.rsqrt(jnp.maximum(jnp.sum(k * k, -1, keepdims=True), 1e-24))

    # Fused block-diagonal multi-head attention: one (C,C) gram on the MXU.
    s = lax.dot_general(qn.astype(jnp.bfloat16), kn.astype(jnp.bfloat16),
                        (((1,), (1,)), ((), ())),
                        preferred_element_type=jnp.float32)    # (C, C)
    s = s * temp_ref[...] + bias_ref[...]       # per-head temperature + -1e30 off-block
    s = s - jnp.max(s, axis=-1, keepdims=True)
    e = jnp.exp(s)
    p = e * pl.reciprocal(jnp.sum(e, axis=-1, keepdims=True), approx=True)
    att_out = jnp.dot(p.astype(jnp.bfloat16), v.astype(jnp.bfloat16),
                      preferred_element_type=jnp.float32)      # (C, HW)

    out = (jnp.dot(proj_w_ref[...], att_out.astype(jnp.bfloat16),
                   preferred_element_type=jnp.float32)
           + proj_b_ref[...] + x)                              # residual add
    o_ref[0] = out


def ffn_block_kernel(x_ref, w_eff_ref, b_eff_ref,
                     pin_w_ref, pin_b_ref, dw_w_ref, dw_b_ref,
                     pout_w_ref, pout_b_ref, o_ref, *, H, W, hidden, dw_dtype):
    x = x_ref[0]                                               # (C, HW) f32
    y = _layernorm_affine(x, w_eff_ref[0], b_eff_ref[0])
    h2 = jnp.dot(pin_w_ref[...], y.astype(jnp.bfloat16),
                 preferred_element_type=jnp.float32) + pin_b_ref[...]
    h2 = _dwconv3x3_flat(h2, dw_w_ref, dw_b_ref, H, W, dw_dtype)   # (2*hidden, HW)
    x1, x2 = h2[:hidden], h2[hidden:]
    g = 0.5 * x1 * (1.0 + lax.erf(x1 * 0.7071067811865476)) * x2   # gelu(x1)*x2
    out = (jnp.dot(pout_w_ref[...], g.astype(jnp.bfloat16),
                   preferred_element_type=jnp.float32)
           + pout_b_ref[...] + x)                              # residual add
    o_ref[0] = out


# ---------------------------------------------------------------------------
# Wrappers (glue only: reshapes, dtype casts, BlockSpecs)
# ---------------------------------------------------------------------------

def _col(v):
    return v.reshape(-1, 1)


def _dw9(w):
    # (C, 3, 3) depthwise taps -> (9, C, 1), tap index = (di+1)*3 + (dj+1)
    C = w.shape[0]
    return jnp.transpose(w, (1, 2, 0)).reshape(9, C, 1)


def attention_branch(x3, w_eff, b_eff, p, H, W, num_heads):
    B, C, HW = x3.shape
    C3 = 3 * C
    ch = C // num_heads
    vmem_limit, dw_dtype = _tpu_tuning()
    kernel = functools.partial(attn_block_kernel, H=H, W=W,
                               num_heads=num_heads, dw_dtype=dw_dtype)
    per_b = lambda b: (b, 0, 0)
    rep2 = lambda b: (0, 0)
    rep3 = lambda b: (0, 0, 0)

    # Per-head temperature as a (C,1) column, block-diagonal softmax bias (C,C).
    temp_col = jnp.repeat(p['temperature'].reshape(num_heads), ch).reshape(C, 1)
    head_id = jnp.arange(C, dtype=jnp.int32) // ch
    attn_bias = jnp.where(head_id[:, None] == head_id[None, :], 0.0,
                          -1e30).astype(jnp.float32)

    return pl.pallas_call(
        kernel,
        out_shape=jax.ShapeDtypeStruct((B, C, HW), jnp.float32),
        grid=(B,),
        in_specs=[
            pl.BlockSpec((1, C, HW), per_b),                   # x
            pl.BlockSpec((1, C, 1), per_b),                    # folded LN weight
            pl.BlockSpec((1, C, 1), per_b),                    # folded LN bias
            pl.BlockSpec((C3, C), rep2),                       # qkv 1x1 w (bf16)
            pl.BlockSpec((C3, 1), rep2),                       # qkv 1x1 b
            pl.BlockSpec((9, C3, 1), rep3),                    # qkv dwconv taps
            pl.BlockSpec((C3, 1), rep2),                       # qkv dwconv bias
            pl.BlockSpec((C, C), rep2),                        # project_out w (bf16)
            pl.BlockSpec((C, 1), rep2),                        # project_out b
            pl.BlockSpec((C, 1), rep2),                        # per-head temperature
            pl.BlockSpec((C, C), rep2),                        # block-diag bias
        ],
        out_specs=pl.BlockSpec((1, C, HW), per_b),
        input_output_aliases={0: 0},                           # reuse x's buffer
        compiler_params=pltpu.CompilerParams(
            dimension_semantics=("parallel",), vmem_limit_bytes=vmem_limit),
    )(x3, w_eff, b_eff,
      p['qkv_w'].astype(jnp.bfloat16), _col(p['qkv_b']),
      _dw9(p['qkv_dw_w']).astype(dw_dtype), _col(p['qkv_dw_b']),
      p['proj_w'].astype(jnp.bfloat16), _col(p['proj_b']),
      temp_col, attn_bias)


def ffn_branch(x3, w_eff, b_eff, p, H, W):
    B, C, HW = x3.shape
    hidden = p['pout_w'].shape[1]
    H2 = 2 * hidden
    vmem_limit, dw_dtype = _tpu_tuning()
    kernel = functools.partial(ffn_block_kernel, H=H, W=W,
                               hidden=hidden, dw_dtype=dw_dtype)
    per_b = lambda b: (b, 0, 0)
    rep2 = lambda b: (0, 0)
    rep3 = lambda b: (0, 0, 0)
    return pl.pallas_call(
        kernel,
        out_shape=jax.ShapeDtypeStruct((B, C, HW), jnp.float32),
        grid=(B,),
        in_specs=[
            pl.BlockSpec((1, C, HW), per_b),                   # x
            pl.BlockSpec((1, C, 1), per_b),                    # folded LN weight
            pl.BlockSpec((1, C, 1), per_b),                    # folded LN bias
            pl.BlockSpec((H2, C), rep2),                       # project_in w (bf16)
            pl.BlockSpec((H2, 1), rep2),                       # project_in b
            pl.BlockSpec((9, H2, 1), rep3),                    # dwconv taps
            pl.BlockSpec((H2, 1), rep2),                       # dwconv bias
            pl.BlockSpec((C, hidden), rep2),                   # project_out w (bf16)
            pl.BlockSpec((C, 1), rep2),                        # project_out b
        ],
        out_specs=pl.BlockSpec((1, C, HW), per_b),
        input_output_aliases={0: 0},                           # reuse x's buffer
        compiler_params=pltpu.CompilerParams(
            dimension_semantics=("parallel",), vmem_limit_bytes=vmem_limit),
    )(x3, w_eff, b_eff,
      p['pin_w'].astype(jnp.bfloat16), _col(p['pin_b']),
      _dw9(p['ffn_dw_w']).astype(dw_dtype), _col(p['ffn_dw_b']),
      p['pout_w'].astype(jnp.bfloat16), _col(p['pout_b']))


# ---------------------------------------------------------------------------
# TransformerBlock forward
# ---------------------------------------------------------------------------

def transformer_block_forward(x, t, k, params, *, num_heads):
    """x: (B, C, H, W) NCHW like PyTorch.  Returns (x_out, t, k)."""
    B, C, H, W = x.shape
    HW = H * W
    dim = C

    # NCHW -> channels-first flat (B, C, HW): pure reshape, no transpose.
    x3 = x.reshape(B, C, HW).astype(jnp.float32)

    # modulation: Mish(t + k) -> Linear(embed_dim, 4*dim).  Tiny; plain XLA.
    tk = t + k
    m = tk * jnp.tanh(jax.nn.softplus(tk))          # numerically stable Mish
    mod = m @ params['mod_w'].T + params['mod_b']   # (B, 4*dim)
    shift_attn, scale_attn, shift_ffn, scale_ffn = jnp.split(mod, 4, axis=1)

    # Fold LN affine + modulation:  modulate(LN(x)) = xhat*w_eff + b_eff
    w1_eff = (params['ln1_w'][None, :] * (1.0 + scale_attn)).reshape(B, dim, 1)
    b1_eff = (params['ln1_b'][None, :] * (1.0 + scale_attn)
              + shift_attn).reshape(B, dim, 1)
    w2_eff = (params['ln2_w'][None, :] * (1.0 + scale_ffn)).reshape(B, dim, 1)
    b2_eff = (params['ln2_b'][None, :] * (1.0 + scale_ffn)
              + shift_ffn).reshape(B, dim, 1)

    # x = x + Attention(modulate(norm1(x)))   -- one fused kernel
    x3 = attention_branch(x3, w1_eff, b1_eff, params, H, W, num_heads)
    # x = x + FeedForward(modulate(norm2(x))) -- one fused kernel
    x3 = ffn_branch(x3, w2_eff, b2_eff, params, H, W)

    x_out = x3.reshape(B, C, H, W).astype(x.dtype)
    return x_out, t, k


# ---------------------------------------------------------------------------
# Deterministic parameter init (synthetic weights, shapes match the module)
# ---------------------------------------------------------------------------

def init_params(key, dim, num_heads, ffn_expansion_factor, embed_dim):
    hidden = int(dim * ffn_expansion_factor)
    ks = jax.random.split(key, 14)

    def w(kk, shape, scale=0.1):
        return scale * jax.random.normal(kk, shape, jnp.float32)

    return dict(
        # LayerNorms (WithBias): weight=1, bias=0
        ln1_w=jnp.ones((dim,), jnp.float32), ln1_b=jnp.zeros((dim,), jnp.float32),
        ln2_w=jnp.ones((dim,), jnp.float32), ln2_b=jnp.zeros((dim,), jnp.float32),
        # Attention (Conv2d 1x1 weights stored squeezed as (Cout, Cin))
        temperature=jnp.ones((num_heads, 1, 1), jnp.float32),
        qkv_w=w(ks[0], (3 * dim, dim)), qkv_b=w(ks[1], (3 * dim,), 0.01),
        qkv_dw_w=w(ks[2], (3 * dim, 3, 3)), qkv_dw_b=w(ks[3], (3 * dim,), 0.01),
        proj_w=w(ks[4], (dim, dim)), proj_b=w(ks[5], (dim,), 0.01),
        # FeedForward
        pin_w=w(ks[6], (2 * hidden, dim)), pin_b=w(ks[7], (2 * hidden,), 0.01),
        ffn_dw_w=w(ks[8], (2 * hidden, 3, 3)), ffn_dw_b=w(ks[9], (2 * hidden,), 0.01),
        pout_w=w(ks[10], (dim, hidden)), pout_b=w(ks[11], (dim,), 0.01),
        # modulation = Mish -> Linear(embed_dim, 4*dim), PyTorch (out, in) layout
        mod_w=w(ks[12], (4 * dim, embed_dim)), mod_b=w(ks[13], (4 * dim,), 0.01),
    )


# ---------------------------------------------------------------------------

if __name__ == "__main__":
    B, dim, H, W = 2, 16, 16, 16
    num_heads = 2
    ffn_expansion_factor = 2.0
    embed_dim = 10

    key = jax.random.PRNGKey(0)
    kx, kt, kk_, kp = jax.random.split(key, 4)
    x = jax.random.normal(kx, (B, dim, H, W), jnp.float32)
    t = jax.random.normal(kt, (B, embed_dim), jnp.float32)
    kc = jax.random.normal(kk_, (B, embed_dim), jnp.float32)

    params = init_params(kp, dim, num_heads, ffn_expansion_factor, embed_dim)

    fwd = jax.jit(functools.partial(transformer_block_forward,
                                    num_heads=num_heads))
    x_out, t_out, k_out = fwd(x, t, kc, params)
    jax.block_until_ready(x_out)
    assert x_out.shape == (B, dim, H, W)
    assert bool(jnp.all(jnp.isfinite(x_out)))
    print("KERNEL_OK")
</pallas_src>

<mosaic_0001>
module attributes {stable_mosaic.version = 11 : i64} {
  func.func @attn_block_kernel(%arg0: i32, %arg1: memref<1x16x256xf32, #tpu.memory_space<vmem>>, %arg2: memref<1x16x1xf32, #tpu.memory_space<vmem>>, %arg3: memref<1x16x1xf32, #tpu.memory_space<vmem>>, %arg4: memref<48x16xbf16, #tpu.memory_space<vmem>>, %arg5: memref<48x1xf32, #tpu.memory_space<vmem>>, %arg6: memref<9x48x1xf32, #tpu.memory_space<vmem>>, %arg7: memref<48x1xf32, #tpu.memory_space<vmem>>, %arg8: memref<16x16xbf16, #tpu.memory_space<vmem>>, %arg9: memref<16x1xf32, #tpu.memory_space<vmem>>, %arg10: memref<16x1xf32, #tpu.memory_space<vmem>>, %arg11: memref<16x16xf32, #tpu.memory_space<vmem>>, %arg12: memref<1x16x256xf32, #tpu.memory_space<vmem>>) attributes {dimension_semantics = [#tpu.dimension_semantics<parallel>], iteration_bounds = array<i64: 2>, scalar_prefetch = 0 : i64, scratch_operands = 0 : i64, tpu.core_type = #tpu.core_type<tc>, window_params = [{transform_indices = @transform_0, window_bounds = array<i64: 1, 16, 256>}, {transform_indices = @transform_1, window_bounds = array<i64: 1, 16, 1>}, {transform_indices = @transform_2, window_bounds = array<i64: 1, 16, 1>}, {pipeline_mode = #tpu.pipeline_mode<synchronous>, transform_indices = @transform_3, window_bounds = array<i64: 48, 16>}, {pipeline_mode = #tpu.pipeline_mode<synchronous>, transform_indices = @transform_4, window_bounds = array<i64: 48, 1>}, {pipeline_mode = #tpu.pipeline_mode<synchronous>, transform_indices = @transform_5, window_bounds = array<i64: 9, 48, 1>}, {pipeline_mode = #tpu.pipeline_mode<synchronous>, transform_indices = @transform_6, window_bounds = array<i64: 48, 1>}, {pipeline_mode = #tpu.pipeline_mode<synchronous>, transform_indices = @transform_7, window_bounds = array<i64: 16, 16>}, {pipeline_mode = #tpu.pipeline_mode<synchronous>, transform_indices = @transform_8, window_bounds = array<i64: 16, 1>}, {pipeline_mode = #tpu.pipeline_mode<synchronous>, transform_indices = @transform_9, window_bounds = array<i64: 16, 1>}, {pipeline_mode = #tpu.pipeline_mode<synchronous>, transform_indices = @transform_10, window_bounds = array<i64: 16, 16>}, {transform_indices = @transform_11, window_bounds = array<i64: 1, 16, 256>}]} {
    %c0 = arith.constant 0 : index
    %c0_0 = arith.constant 0 : index
    %c0_1 = arith.constant 0 : index
    %0 = vector.load %arg1[%c0, %c0_0, %c0_1] : memref<1x16x256xf32, #tpu.memory_space<vmem>>, vector<1x16x256xf32>
    %1 = vector.shape_cast %0 : vector<1x16x256xf32> to vector<16x256xf32>
    %c0_2 = arith.constant 0 : index
    %c0_3 = arith.constant 0 : index
    %c0_4 = arith.constant 0 : index
    %2 = vector.load %arg2[%c0_2, %c0_3, %c0_4] : memref<1x16x1xf32, #tpu.memory_space<vmem>>, vector<1x16x1xf32>
    %3 = vector.shape_cast %2 : vector<1x16x1xf32> to vector<16x1xf32>
    %c0_5 = arith.constant 0 : index
    %c0_6 = arith.constant 0 : index
    %c0_7 = arith.constant 0 : index
    %4 = vector.load %arg3[%c0_5, %c0_6, %c0_7] : memref<1x16x1xf32, #tpu.memory_space<vmem>>, vector<1x16x1xf32>
    %5 = vector.shape_cast %4 : vector<1x16x1xf32> to vector<16x1xf32>
    %cst = arith.constant dense<0.000000e+00> : vector<256xf32>
    %6 = vector.multi_reduction <add>, %1, %cst [0] : vector<16x256xf32> to vector<256xf32>
    %7 = vector.shape_cast %6 : vector<256xf32> to vector<1x256xf32>
    %cst_8 = arith.constant 1.600000e+01 : f32
    %8 = vector.broadcast %cst_8 : f32 to vector<1x256xf32>
    %9 = arith.divf %7, %8 : vector<1x256xf32>
    %10 = vector.broadcast %9 : vector<1x256xf32> to vector<16x256xf32>
    %11 = arith.subf %1, %10 : vector<16x256xf32>
    %12 = arith.mulf %11, %11 : vector<16x256xf32>
    %cst_9 = arith.constant dense<0.000000e+00> : vector<256xf32>
    %13 = vector.multi_reduction <add>, %12, %cst_9 [0] : vector<16x256xf32> to vector<256xf32>
    %14 = vector.shape_cast %13 : vector<256xf32> to vector<1x256xf32>
    %cst_10 = arith.constant 1.600000e+01 : f32
    %15 = vector.broadcast %cst_10 : f32 to vector<1x256xf32>
    %16 = arith.divf %14, %15 : vector<1x256xf32>
    %cst_11 = arith.constant 9.99999974E-6 : f32
    %17 = vector.broadcast %cst_11 : f32 to vector<1x256xf32>
    %18 = arith.addf %16, %17 : vector<1x256xf32>
    %19 = math.rsqrt %18 : vector<1x256xf32>
    %20 = vector.broadcast %19 : vector<1x256xf32> to vector<16x256xf32>
    %21 = arith.mulf %11, %20 : vector<16x256xf32>
    %22 = vector.broadcast %3 : vector<16x1xf32> to vector<16x256xf32>
    %23 = arith.mulf %21, %22 : vector<16x256xf32>
    %24 = vector.broadcast %5 : vector<16x1xf32> to vector<16x256xf32>
    %25 = arith.addf %23, %24 : vector<16x256xf32>
    %c0_12 = arith.constant 0 : index
    %c0_13 = arith.constant 0 : index
    %26 = vector.load %arg4[%c0_12, %c0_13] : memref<48x16xbf16, #tpu.memory_space<vmem>>, vector<48x16xbf16>
    %27 = arith.truncf %25 : vector<16x256xf32> to vector<16x256xbf16>
    %cst_14 = arith.constant dense<0.000000e+00> : vector<48x256xf32>
    %28 = tpu.matmul %26, %27, %cst_14 {dimension_numbers = #tpu.dot_dimension_numbers<[1], [0], [0], [1], [0, 0, 1, 1], [], []>} : vector<48x16xbf16>, vector<16x256xbf16>, vector<48x256xf32> -> vector<48x256xf32>
    %c0_15 = arith.constant 0 : index
    %c0_16 = arith.constant 0 : index
    %29 = vector.load %arg5[%c0_15, %c0_16] : memref<48x1xf32, #tpu.memory_space<vmem>>, vector<48x1xf32>
    %30 = vector.broadcast %29 : vector<48x1xf32> to vector<48x256xf32>
    %31 = arith.addf %28, %30 : vector<48x256xf32>
    %32 = tpu.iota {dimensions = array<i32: 1>} : vector<1x256xi32>
    %c16_i32 = arith.constant 16 : i32
    %c0_i32 = arith.constant 0 : i32
    %33 = arith.cmpi eq, %c16_i32, %c0_i32 : i32
    %c1_i32 = arith.constant 1 : i32
    %34 = arith.select %33, %c1_i32, %c16_i32 : i32
    %35 = vector.broadcast %34 : i32 to vector<1x256xi32>
    %36 = arith.remsi %32, %35 : vector<1x256xi32>
    %c0_i32_17 = arith.constant 0 : i32
    %37 = vector.broadcast %c0_i32_17 : i32 to vector<1x256xi32>
    %38 = arith.cmpi ne, %36, %37 : vector<1x256xi32>
    %c0_i32_18 = arith.constant 0 : i32
    %39 = vector.broadcast %c0_i32_18 : i32 to vector<1x256xi32>
    %40 = arith.cmpi slt, %36, %39 : vector<1x256xi32>
    %c0_i32_19 = arith.constant 0 : i32
    %41 = arith.cmpi slt, %34, %c0_i32_19 : i32
    %42 = vector.broadcast %41 : i1 to vector<1x256xi1>
    %43 = vector.broadcast %42 : vector<1x256xi1> to vector<1x256xi1>
    %44 = arith.xori %40, %43 : vector<1x256xi1>
    %45 = arith.andi %44, %38 : vector<1x256xi1>
    %46 = vector.broadcast %34 : i32 to vector<1x256xi32>
    %47 = arith.addi %36, %46 : vector<1x256xi32>
    %48 = arith.select %45, %47, %36 : vector<1x256xi1>, vector<1x256xi32>
    %c1_i32_20 = arith.constant 1 : i32
    %49 = vector.broadcast %c1_i32_20 : i32 to vector<1x256xi32>
    %50 = arith.cmpi sge, %48, %49 : vector<1x256xi32>
    %c1_i32_21 = arith.constant 1 : i32
    %51 = tpu.dynamic_rotate %31 by %c1_i32_21 dim 1 : vector<48x256xf32>, i32 -> vector<48x256xf32>
    %cst_22 = arith.constant 0.000000e+00 : f32
    %52 = vector.shape_cast %50 : vector<1x256xi1> to vector<1x256xi1>
    %53 = vector.broadcast %52 : vector<1x256xi1> to vector<48x256xi1>
    %54 = vector.broadcast %cst_22 : f32 to vector<48x256xf32>
    %55 = arith.select %53, %51, %54 : vector<48x256xi1>, vector<48x256xf32>
    %c14_i32 = arith.constant 14 : i32
    %56 = vector.broadcast %c14_i32 : i32 to vector<1x256xi32>
    %57 = arith.cmpi sle, %48, %56 : vector<1x256xi32>
    %c255_i32 = arith.constant 255 : i32
    %58 = tpu.dynamic_rotate %31 by %c255_i32 dim 1 : vector<48x256xf32>, i32 -> vector<48x256xf32>
    %cst_23 = arith.constant 0.000000e+00 : f32
    %59 = vector.shape_cast %57 : vector<1x256xi1> to vector<1x256xi1>
    %60 = vector.broadcast %59 : vector<1x256xi1> to vector<48x256xi1>
    %61 = vector.broadcast %cst_23 : f32 to vector<48x256xf32>
    %62 = arith.select %60, %58, %61 : vector<48x256xi1>, vector<48x256xf32>
    %c0_24 = arith.constant 0 : index
    %c0_25 = arith.constant 0 : index
    %c0_26 = arith.constant 0 : index
    %63 = vector.load %arg6[%c0_24, %c0_25, %c0_26] : memref<9x48x1xf32, #tpu.memory_space<vmem>>, vector<9x48x1xf32>
    %64 = vector.extract_strided_slice %63 {offsets = [0, 0, 0], sizes = [1, 48, 1], strides = [1, 1, 1]} : vector<9x48x1xf32> to vector<1x48x1xf32>
    %65 = vector.shape_cast %64 : vector<1x48x1xf32> to vector<48x1xf32>
    %66 = vector.broadcast %65 : vector<48x1xf32> to vector<48x256xf32>
    %67 = arith.mulf %55, %66 : vector<48x256xf32>
    %68 = vector.extract_strided_slice %63 {offsets = [1, 0, 0], sizes = [1, 48, 1], strides = [1, 1, 1]} : vector<9x48x1xf32> to vector<1x48x1xf32>
    %69 = vector.shape_cast %68 : vector<1x48x1xf32> to vector<48x1xf32>
    %70 = vector.broadcast %69 : vector<48x1xf32> to vector<48x256xf32>
    %71 = arith.mulf %31, %70 : vector<48x256xf32>
    %72 = arith.addf %67, %71 : vector<48x256xf32>
    %73 = vector.extract_strided_slice %63 {offsets = [2, 0, 0], sizes = [1, 48, 1], strides = [1, 1, 1]} : vector<9x48x1xf32> to vector<1x48x1xf32>
    %74 = vector.shape_cast %73 : vector<1x48x1xf32> to vector<48x1xf32>
    %75 = vector.broadcast %74 : vector<48x1xf32> to vector<48x256xf32>
    %76 = arith.mulf %62, %75 : vector<48x256xf32>
    %77 = arith.addf %72, %76 : vector<48x256xf32>
    %78 = vector.extract_strided_slice %63 {offsets = [3, 0, 0], sizes = [1, 48, 1], strides = [1, 1, 1]} : vector<9x48x1xf32> to vector<1x48x1xf32>
    %79 = vector.shape_cast %78 : vector<1x48x1xf32> to vector<48x1xf32>
    %80 = vector.broadcast %79 : vector<48x1xf32> to vector<48x256xf32>
    %81 = arith.mulf %55, %80 : vector<48x256xf32>
    %82 = vector.extract_strided_slice %63 {offsets = [4, 0, 0], sizes = [1, 48, 1], strides = [1, 1, 1]} : vector<9x48x1xf32> to vector<1x48x1xf32>
    %83 = vector.shape_cast %82 : vector<1x48x1xf32> to vector<48x1xf32>
    %84 = vector.broadcast %83 : vector<48x1xf32> to vector<48x256xf32>
    %85 = arith.mulf %31, %84 : vector<48x256xf32>
    %86 = arith.addf %81, %85 : vector<48x256xf32>
    %87 = vector.extract_strided_slice %63 {offsets = [5, 0, 0], sizes = [1, 48, 1], strides = [1, 1, 1]} : vector<9x48x1xf32> to vector<1x48x1xf32>
    %88 = vector.shape_cast %87 : vector<1x48x1xf32> to vector<48x1xf32>
    %89 = vector.broadcast %88 : vector<48x1xf32> to vector<48x256xf32>
    %90 = arith.mulf %62, %89 : vector<48x256xf32>
    %91 = arith.addf %86, %90 : vector<48x256xf32>
    %92 = vector.extract_strided_slice %63 {offsets = [6, 0, 0], sizes = [1, 48, 1], strides = [1, 1, 1]} : vector<9x48x1xf32> to vector<1x48x1xf32>
    %93 = vector.shape_cast %92 : vector<1x48x1xf32> to vector<48x1xf32>
    %94 = vector.broadcast %93 : vector<48x1xf32> to vector<48x256xf32>
    %95 = arith.mulf %55, %94 : vector<48x256xf32>
    %96 = vector.extract_strided_slice %63 {offsets = [7, 0, 0], sizes = [1, 48, 1], strides = [1, 1, 1]} : vector<9x48x1xf32> to vector<1x48x1xf32>
    %97 = vector.shape_cast %96 : vector<1x48x1xf32> to vector<48x1xf32>
    %98 = vector.broadcast %97 : vector<48x1xf32> to vector<48x256xf32>
    %99 = arith.mulf %31, %98 : vector<48x256xf32>
    %100 = arith.addf %95, %99 : vector<48x256xf32>
    %101 = vector.extract_strided_slice %63 {offsets = [8, 0, 0], sizes = [1, 48, 1], strides = [1, 1, 1]} : vector<9x48x1xf32> to vector<1x48x1xf32>
    %102 = vector.shape_cast %101 : vector<1x48x1xf32> to vector<48x1xf32>
    %103 = vector.broadcast %102 : vector<48x1xf32> to vector<48x256xf32>
    %104 = arith.mulf %62, %103 : vector<48x256xf32>
    %105 = arith.addf %100, %104 : vector<48x256xf32>
    %c16_i32_27 = arith.constant 16 : i32
    %106 = vector.broadcast %c16_i32_27 : i32 to vector<1x256xi32>
    %107 = arith.cmpi sge, %32, %106 : vector<1x256xi32>
    %c16_i32_28 = arith.constant 16 : i32
    %108 = tpu.dynamic_rotate %77 by %c16_i32_28 dim 1 : vector<48x256xf32>, i32 -> vector<48x256xf32>
    %cst_29 = arith.constant 0.000000e+00 : f32
    %109 = vector.shape_cast %107 : vector<1x256xi1> to vector<1x256xi1>
    %110 = vector.broadcast %109 : vector<1x256xi1> to vector<48x256xi1>
    %111 = vector.broadcast %cst_29 : f32 to vector<48x256xf32>
    %112 = arith.select %110, %108, %111 : vector<48x256xi1>, vector<48x256xf32>
    %c240_i32 = arith.constant 240 : i32
    %113 = vector.broadcast %c240_i32 : i32 to vector<1x256xi32>
    %114 = arith.cmpi slt, %32, %113 : vector<1x256xi32>
    %c240_i32_30 = arith.constant 240 : i32
    %115 = tpu.dynamic_rotate %105 by %c240_i32_30 dim 1 : vector<48x256xf32>, i32 -> vector<48x256xf32>
    %cst_31 = arith.constant 0.000000e+00 : f32
    %116 = vector.shape_cast %114 : vector<1x256xi1> to vector<1x256xi1>
    %117 = vector.broadcast %116 : vector<1x256xi1> to vector<48x256xi1>
    %118 = vector.broadcast %cst_31 : f32 to vector<48x256xf32>
    %119 = arith.select %117, %115, %118 : vector<48x256xi1>, vector<48x256xf32>
    %120 = arith.addf %91, %112 : vector<48x256xf32>
    %121 = arith.addf %120, %119 : vector<48x256xf32>
    %c0_32 = arith.constant 0 : index
    %c0_33 = arith.constant 0 : index
    %122 = vector.load %arg7[%c0_32, %c0_33] : memref<48x1xf32, #tpu.memory_space<vmem>>, vector<48x1xf32>
    %123 = vector.broadcast %122 : vector<48x1xf32> to vector<48x256xf32>
    %124 = arith.addf %121, %123 : vector<48x256xf32>
    %125 = vector.extract_strided_slice %124 {offsets = [0, 0], sizes = [16, 256], strides = [1, 1]} : vector<48x256xf32> to vector<16x256xf32>
    %126 = vector.extract_strided_slice %124 {offsets = [16, 0], sizes = [16, 256], strides = [1, 1]} : vector<48x256xf32> to vector<16x256xf32>
    %127 = vector.extract_strided_slice %124 {offsets = [32, 0], sizes = [16, 256], strides = [1, 1]} : vector<48x256xf32> to vector<16x256xf32>
    %128 = arith.mulf %125, %125 : vector<16x256xf32>
    %cst_34 = arith.constant dense<0.000000e+00> : vector<16xf32>
    %129 = vector.multi_reduction <add>, %128, %cst_34 [1] : vector<16x256xf32> to vector<16xf32>
    %130 = vector.shape_cast %129 : vector<16xf32> to vector<16x1xf32>
    %cst_35 = arith.constant 1.000000e-24 : f32
    %131 = vector.broadcast %cst_35 : f32 to vector<16x1xf32>
    %132 = arith.maximumf %130, %131 : vector<16x1xf32>
    %133 = math.rsqrt %132 : vector<16x1xf32>
    %134 = vector.broadcast %133 : vector<16x1xf32> to vector<16x256xf32>
    %135 = arith.mulf %125, %134 : vector<16x256xf32>
    %136 = arith.mulf %126, %126 : vector<16x256xf32>
    %cst_36 = arith.constant dense<0.000000e+00> : vector<16xf32>
    %137 = vector.multi_reduction <add>, %136, %cst_36 [1] : vector<16x256xf32> to vector<16xf32>
    %138 = vector.shape_cast %137 : vector<16xf32> to vector<16x1xf32>
    %cst_37 = arith.constant 1.000000e-24 : f32
    %139 = vector.broadcast %cst_37 : f32 to vector<16x1xf32>
    %140 = arith.maximumf %138, %139 : vector<16x1xf32>
    %141 = math.rsqrt %140 : vector<16x1xf32>
    %142 = vector.broadcast %141 : vector<16x1xf32> to vector<16x256xf32>
    %143 = arith.mulf %126, %142 : vector<16x256xf32>
    %144 = arith.truncf %135 : vector<16x256xf32> to vector<16x256xbf16>
    %145 = arith.truncf %143 : vector<16x256xf32> to vector<16x256xbf16>
    %cst_38 = arith.constant dense<0.000000e+00> : vector<16x16xf32>
    %146 = tpu.matmul %144, %145, %cst_38 {dimension_numbers = #tpu.dot_dimension_numbers<[1], [1], [0], [0], [0, 0, 1, 0], [], []>} : vector<16x256xbf16>, vector<16x256xbf16>, vector<16x16xf32> -> vector<16x16xf32>
    %c0_39 = arith.constant 0 : index
    %c0_40 = arith.constant 0 : index
    %147 = vector.load %arg10[%c0_39, %c0_40] : memref<16x1xf32, #tpu.memory_space<vmem>>, vector<16x1xf32>
    %148 = vector.broadcast %147 : vector<16x1xf32> to vector<16x16xf32>
    %149 = arith.mulf %146, %148 : vector<16x16xf32>
    %c0_41 = arith.constant 0 : index
    %c0_42 = arith.constant 0 : index
    %150 = vector.load %arg11[%c0_41, %c0_42] : memref<16x16xf32, #tpu.memory_space<vmem>>, vector<16x16xf32>
    %151 = arith.addf %149, %150 : vector<16x16xf32>
    %cst_43 = arith.constant dense<0xFF800000> : vector<16xf32>
    %152 = vector.multi_reduction <maximumf>, %151, %cst_43 [1] : vector<16x16xf32> to vector<16xf32>
    %153 = vector.shape_cast %152 : vector<16xf32> to vector<16x1xf32>
    %154 = vector.broadcast %153 : vector<16x1xf32> to vector<16x16xf32>
    %155 = arith.subf %151, %154 : vector<16x16xf32>
    %156 = math.exp %155 : vector<16x16xf32>
    %cst_44 = arith.constant dense<0.000000e+00> : vector<16xf32>
    %157 = vector.multi_reduction <add>, %156, %cst_44 [1] : vector<16x16xf32> to vector<16xf32>
    %158 = vector.shape_cast %157 : vector<16xf32> to vector<16x1xf32>
    %159 = tpu.reciprocal %158 {approx = true} : vector<16x1xf32> -> vector<16x1xf32>
    %160 = vector.broadcast %159 : vector<16x1xf32> to vector<16x16xf32>
    %161 = arith.mulf %156, %160 : vector<16x16xf32>
    %162 = arith.truncf %161 : vector<16x16xf32> to vector<16x16xbf16>
    %163 = arith.truncf %127 : vector<16x256xf32> to vector<16x256xbf16>
    %cst_45 = arith.constant dense<0.000000e+00> : vector<16x256xf32>
    %164 = tpu.matmul %162, %163, %cst_45 {dimension_numbers = #tpu.dot_dimension_numbers<[1], [0], [0], [1], [0, 0, 1, 1], [], []>} : vector<16x16xbf16>, vector<16x256xbf16>, vector<16x256xf32> -> vector<16x256xf32>
    %c0_46 = arith.constant 0 : index
    %c0_47 = arith.constant 0 : index
    %165 = vector.load %arg8[%c0_46, %c0_47] : memref<16x16xbf16, #tpu.memory_space<vmem>>, vector<16x16xbf16>
    %166 = arith.truncf %164 : vector<16x256xf32> to vector<16x256xbf16>
    %cst_48 = arith.constant dense<0.000000e+00> : vector<16x256xf32>
    %167 = tpu.matmul %165, %166, %cst_48 {dimension_numbers = #tpu.dot_dimension_numbers<[1], [0], [0], [1], [0, 0, 1, 1], [], []>} : vector<16x16xbf16>, vector<16x256xbf16>, vector<16x256xf32> -> vector<16x256xf32>
    %c0_49 = arith.constant 0 : index
    %c0_50 = arith.constant 0 : index
    %168 = vector.load %arg9[%c0_49, %c0_50] : memref<16x1xf32, #tpu.memory_space<vmem>>, vector<16x1xf32>
    %169 = vector.broadcast %168 : vector<16x1xf32> to vector<16x256xf32>
    %170 = arith.addf %167, %169 : vector<16x256xf32>
    %171 = arith.addf %170, %1 : vector<16x256xf32>
    %c0_51 = arith.constant 0 : index
    %c0_52 = arith.constant 0 : index
    %c0_53 = arith.constant 0 : index
    %172 = vector.load %arg12[%c0_51, %c0_52, %c0_53] : memref<1x16x256xf32, #tpu.memory_space<vmem>>, vector<1x16x256xf32>
    %173 = vector.shape_cast %172 : vector<1x16x256xf32> to vector<16x256xf32>
    %174 = vector.shape_cast %171 : vector<16x256xf32> to vector<1x16x256xf32>
    tpu.vector_store %arg12[%c0_51, %c0_52, %c0_53], %174 {strides = array<i32>} : memref<1x16x256xf32, #tpu.memory_space<vmem>>, vector<1x16x256xf32>,
    return
  }
  func.func @transform_0(%arg0: i32) -> (i32, i32, i32) {
    %c0_i32 = arith.constant 0 : i32
    %c0_i32_0 = arith.constant 0 : i32
    %c0_i32_1 = arith.constant 0 : i32
    return %arg0, %c0_i32, %c0_i32_0 : i32, i32, i32
  }
  func.func @transform_1(%arg0: i32) -> (i32, i32, i32) {
    %c0_i32 = arith.constant 0 : i32
    %c0_i32_0 = arith.constant 0 : i32
    %c0_i32_1 = arith.constant 0 : i32
    return %arg0, %c0_i32, %c0_i32_0 : i32, i32, i32
  }
  func.func @transform_2(%arg0: i32) -> (i32, i32, i32) {
    %c0_i32 = arith.constant 0 : i32
    %c0_i32_0 = arith.constant 0 : i32
    %c0_i32_1 = arith.constant 0 : i32
    return %arg0, %c0_i32, %c0_i32_0 : i32, i32, i32
  }
  func.func @transform_3(%arg0: i32) -> (i32, i32) {
    %c0_i32 = arith.constant 0 : i32
    %c0_i32_0 = arith.constant 0 : i32
    %c0_i32_1 = arith.constant 0 : i32
    return %c0_i32, %c0_i32_0 : i32, i32
  }
  func.func @transform_4(%arg0: i32) -> (i32, i32) {
    %c0_i32 = arith.constant 0 : i32
    %c0_i32_0 = arith.constant 0 : i32
    %c0_i32_1 = arith.constant 0 : i32
    return %c0_i32, %c0_i32_0 : i32, i32
  }
  func.func @transform_5(%arg0: i32) -> (i32, i32, i32) {
    %c0_i32 = arith.constant 0 : i32
    %c0_i32_0 = arith.constant 0 : i32
    %c0_i32_1 = arith.constant 0 : i32
    %c0_i32_2 = arith.constant 0 : i32
    return %c0_i32, %c0_i32_0, %c0_i32_1 : i32, i32, i32
  }
  func.func @transform_6(%arg0: i32) -> (i32, i32) {
    %c0_i32 = arith.constant 0 : i32
    %c0_i32_0 = arith.constant 0 : i32
    %c0_i32_1 = arith.constant 0 : i32
    return %c0_i32, %c0_i32_0 : i32, i32
  }
  func.func @transform_7(%arg0: i32) -> (i32, i32) {
    %c0_i32 = arith.constant 0 : i32
    %c0_i32_0 = arith.constant 0 : i32
    %c0_i32_1 = arith.constant 0 : i32
    return %c0_i32, %c0_i32_0 : i32, i32
  }
  func.func @transform_8(%arg0: i32) -> (i32, i32) {
    %c0_i32 = arith.constant 0 : i32
    %c0_i32_0 = arith.constant 0 : i32
    %c0_i32_1 = arith.constant 0 : i32
    return %c0_i32, %c0_i32_0 : i32, i32
  }
  func.func @transform_9(%arg0: i32) -> (i32, i32) {
    %c0_i32 = arith.constant 0 : i32
    %c0_i32_0 = arith.constant 0 : i32
    %c0_i32_1 = arith.constant 0 : i32
    return %c0_i32, %c0_i32_0 : i32, i32
  }
  func.func @transform_10(%arg0: i32) -> (i32, i32) {
    %c0_i32 = arith.constant 0 : i32
    %c0_i32_0 = arith.constant 0 : i32
    %c0_i32_1 = arith.constant 0 : i32
    return %c0_i32, %c0_i32_0 : i32, i32
  }
  func.func @transform_11(%arg0: i32) -> (i32, i32, i32) {
    %c0_i32 = arith.constant 0 : i32
    %c0_i32_0 = arith.constant 0 : i32
    %c0_i32_1 = arith.constant 0 : i32
    return %arg0, %c0_i32, %c0_i32_0 : i32, i32, i32
  }
}

module attributes {stable_mosaic.version = 11 : i64} {
  func.func @ffn_block_kernel(%arg0: i32, %arg1: memref<1x16x256xf32, #tpu.memory_space<vmem>>, %arg2: memref<1x16x1xf32, #tpu.memory_space<vmem>>, %arg3: memref<1x16x1xf32, #tpu.memory_space<vmem>>, %arg4: memref<64x16xbf16, #tpu.memory_space<vmem>>, %arg5: memref<64x1xf32, #tpu.memory_space<vmem>>, %arg6: memref<9x64x1xf32, #tpu.memory_space<vmem>>, %arg7: memref<64x1xf32, #tpu.memory_space<vmem>>, %arg8: memref<16x32xbf16, #tpu.memory_space<vmem>>, %arg9: memref<16x1xf32, #tpu.memory_space<vmem>>, %arg10: memref<1x16x256xf32, #tpu.memory_space<vmem>>) attributes {dimension_semantics = [#tpu.dimension_semantics<parallel>], iteration_bounds = array<i64: 2>, scalar_prefetch = 0 : i64, scratch_operands = 0 : i64, tpu.core_type = #tpu.core_type<tc>, window_params = [{transform_indices = @transform_0, window_bounds = array<i64: 1, 16, 256>}, {transform_indices = @transform_1, window_bounds = array<i64: 1, 16, 1>}, {transform_indices = @transform_2, window_bounds = array<i64: 1, 16, 1>}, {pipeline_mode = #tpu.pipeline_mode<synchronous>, transform_indices = @transform_3, window_bounds = array<i64: 64, 16>}, {pipeline_mode = #tpu.pipeline_mode<synchronous>, transform_indices = @transform_4, window_bounds = array<i64: 64, 1>}, {pipeline_mode = #tpu.pipeline_mode<synchronous>, transform_indices = @transform_5, window_bounds = array<i64: 9, 64, 1>}, {pipeline_mode = #tpu.pipeline_mode<synchronous>, transform_indices = @transform_6, window_bounds = array<i64: 64, 1>}, {pipeline_mode = #tpu.pipeline_mode<synchronous>, transform_indices = @transform_7, window_bounds = array<i64: 16, 32>}, {pipeline_mode = #tpu.pipeline_mode<synchronous>, transform_indices = @transform_8, window_bounds = array<i64: 16, 1>}, {transform_indices = @transform_9, window_bounds = array<i64: 1, 16, 256>}]} {
    %c0 = arith.constant 0 : index
    %c0_0 = arith.constant 0 : index
    %c0_1 = arith.constant 0 : index
    %0 = vector.load %arg1[%c0, %c0_0, %c0_1] : memref<1x16x256xf32, #tpu.memory_space<vmem>>, vector<1x16x256xf32>
    %1 = vector.shape_cast %0 : vector<1x16x256xf32> to vector<16x256xf32>
    %c0_2 = arith.constant 0 : index
    %c0_3 = arith.constant 0 : index
    %c0_4 = arith.constant 0 : index
    %2 = vector.load %arg2[%c0_2, %c0_3, %c0_4] : memref<1x16x1xf32, #tpu.memory_space<vmem>>, vector<1x16x1xf32>
    %3 = vector.shape_cast %2 : vector<1x16x1xf32> to vector<16x1xf32>
    %c0_5 = arith.constant 0 : index
    %c0_6 = arith.constant 0 : index
    %c0_7 = arith.constant 0 : index
    %4 = vector.load %arg3[%c0_5, %c0_6, %c0_7] : memref<1x16x1xf32, #tpu.memory_space<vmem>>, vector<1x16x1xf32>
    %5 = vector.shape_cast %4 : vector<1x16x1xf32> to vector<16x1xf32>
    %cst = arith.constant dense<0.000000e+00> : vector<256xf32>
    %6 = vector.multi_reduction <add>, %1, %cst [0] : vector<16x256xf32> to vector<256xf32>
    %7 = vector.shape_cast %6 : vector<256xf32> to vector<1x256xf32>
    %cst_8 = arith.constant 1.600000e+01 : f32
    %8 = vector.broadcast %cst_8 : f32 to vector<1x256xf32>
    %9 = arith.divf %7, %8 : vector<1x256xf32>
    %10 = vector.broadcast %9 : vector<1x256xf32> to vector<16x256xf32>
    %11 = arith.subf %1, %10 : vector<16x256xf32>
    %12 = arith.mulf %11, %11 : vector<16x256xf32>
    %cst_9 = arith.constant dense<0.000000e+00> : vector<256xf32>
    %13 = vector.multi_reduction <add>, %12, %cst_9 [0] : vector<16x256xf32> to vector<256xf32>
    %14 = vector.shape_cast %13 : vector<256xf32> to vector<1x256xf32>
    %cst_10 = arith.constant 1.600000e+01 : f32
    %15 = vector.broadcast %cst_10 : f32 to vector<1x256xf32>
    %16 = arith.divf %14, %15 : vector<1x256xf32>
    %cst_11 = arith.constant 9.99999974E-6 : f32
    %17 = vector.broadcast %cst_11 : f32 to vector<1x256xf32>
    %18 = arith.addf %16, %17 : vector<1x256xf32>
    %19 = math.rsqrt %18 : vector<1x256xf32>
    %20 = vector.broadcast %19 : vector<1x256xf32> to vector<16x256xf32>
    %21 = arith.mulf %11, %20 : vector<16x256xf32>
    %22 = vector.broadcast %3 : vector<16x1xf32> to vector<16x256xf32>
    %23 = arith.mulf %21, %22 : vector<16x256xf32>
    %24 = vector.broadcast %5 : vector<16x1xf32> to vector<16x256xf32>
    %25 = arith.addf %23, %24 : vector<16x256xf32>
    %c0_12 = arith.constant 0 : index
    %c0_13 = arith.constant 0 : index
    %26 = vector.load %arg4[%c0_12, %c0_13] : memref<64x16xbf16, #tpu.memory_space<vmem>>, vector<64x16xbf16>
    %27 = arith.truncf %25 : vector<16x256xf32> to vector<16x256xbf16>
    %cst_14 = arith.constant dense<0.000000e+00> : vector<64x256xf32>
    %28 = tpu.matmul %26, %27, %cst_14 {dimension_numbers = #tpu.dot_dimension_numbers<[1], [0], [0], [1], [0, 0, 1, 1], [], []>} : vector<64x16xbf16>, vector<16x256xbf16>, vector<64x256xf32> -> vector<64x256xf32>
    %c0_15 = arith.constant 0 : index
    %c0_16 = arith.constant 0 : index
    %29 = vector.load %arg5[%c0_15, %c0_16] : memref<64x1xf32, #tpu.memory_space<vmem>>, vector<64x1xf32>
    %30 = vector.broadcast %29 : vector<64x1xf32> to vector<64x256xf32>
    %31 = arith.addf %28, %30 : vector<64x256xf32>
    %32 = tpu.iota {dimensions = array<i32: 1>} : vector<1x256xi32>
    %c16_i32 = arith.constant 16 : i32
    %c0_i32 = arith.constant 0 : i32
    %33 = arith.cmpi eq, %c16_i32, %c0_i32 : i32
    %c1_i32 = arith.constant 1 : i32
    %34 = arith.select %33, %c1_i32, %c16_i32 : i32
    %35 = vector.broadcast %34 : i32 to vector<1x256xi32>
    %36 = arith.remsi %32, %35 : vector<1x256xi32>
    %c0_i32_17 = arith.constant 0 : i32
    %37 = vector.broadcast %c0_i32_17 : i32 to vector<1x256xi32>
    %38 = arith.cmpi ne, %36, %37 : vector<1x256xi32>
    %c0_i32_18 = arith.constant 0 : i32
    %39 = vector.broadcast %c0_i32_18 : i32 to vector<1x256xi32>
    %40 = arith.cmpi slt, %36, %39 : vector<1x256xi32>
    %c0_i32_19 = arith.constant 0 : i32
    %41 = arith.cmpi slt, %34, %c0_i32_19 : i32
    %42 = vector.broadcast %41 : i1 to vector<1x256xi1>
    %43 = vector.broadcast %42 : vector<1x256xi1> to vector<1x256xi1>
    %44 = arith.xori %40, %43 : vector<1x256xi1>
    %45 = arith.andi %44, %38 : vector<1x256xi1>
    %46 = vector.broadcast %34 : i32 to vector<1x256xi32>
    %47 = arith.addi %36, %46 : vector<1x256xi32>
    %48 = arith.select %45, %47, %36 : vector<1x256xi1>, vector<1x256xi32>
    %c1_i32_20 = arith.constant 1 : i32
    %49 = vector.broadcast %c1_i32_20 : i32 to vector<1x256xi32>
    %50 = arith.cmpi sge, %48, %49 : vector<1x256xi32>
    %c1_i32_21 = arith.constant 1 : i32
    %51 = tpu.dynamic_rotate %31 by %c1_i32_21 dim 1 : vector<64x256xf32>, i32 -> vector<64x256xf32>
    %cst_22 = arith.constant 0.000000e+00 : f32
    %52 = vector.shape_cast %50 : vector<1x256xi1> to vector<1x256xi1>
    %53 = vector.broadcast %52 : vector<1x256xi1> to vector<64x256xi1>
    %54 = vector.broadcast %cst_22 : f32 to vector<64x256xf32>
    %55 = arith.select %53, %51, %54 : vector<64x256xi1>, vector<64x256xf32>
    %c14_i32 = arith.constant 14 : i32
    %56 = vector.broadcast %c14_i32 : i32 to vector<1x256xi32>
    %57 = arith.cmpi sle, %48, %56 : vector<1x256xi32>
    %c255_i32 = arith.constant 255 : i32
    %58 = tpu.dynamic_rotate %31 by %c255_i32 dim 1 : vector<64x256xf32>, i32 -> vector<64x256xf32>
    %cst_23 = arith.constant 0.000000e+00 : f32
    %59 = vector.shape_cast %57 : vector<1x256xi1> to vector<1x256xi1>
    %60 = vector.broadcast %59 : vector<1x256xi1> to vector<64x256xi1>
    %61 = vector.broadcast %cst_23 : f32 to vector<64x256xf32>
    %62 = arith.select %60, %58, %61 : vector<64x256xi1>, vector<64x256xf32>
    %c0_24 = arith.constant 0 : index
    %c0_25 = arith.constant 0 : index
    %c0_26 = arith.constant 0 : index
    %63 = vector.load %arg6[%c0_24, %c0_25, %c0_26] : memref<9x64x1xf32, #tpu.memory_space<vmem>>, vector<9x64x1xf32>
    %64 = vector.extract_strided_slice %63 {offsets = [0, 0, 0], sizes = [1, 64, 1], strides = [1, 1, 1]} : vector<9x64x1xf32> to vector<1x64x1xf32>
    %65 = vector.shape_cast %64 : vector<1x64x1xf32> to vector<64x1xf32>
    %66 = vector.broadcast %65 : vector<64x1xf32> to vector<64x256xf32>
    %67 = arith.mulf %55, %66 : vector<64x256xf32>
    %68 = vector.extract_strided_slice %63 {offsets = [1, 0, 0], sizes = [1, 64, 1], strides = [1, 1, 1]} : vector<9x64x1xf32> to vector<1x64x1xf32>
    %69 = vector.shape_cast %68 : vector<1x64x1xf32> to vector<64x1xf32>
    %70 = vector.broadcast %69 : vector<64x1xf32> to vector<64x256xf32>
    %71 = arith.mulf %31, %70 : vector<64x256xf32>
    %72 = arith.addf %67, %71 : vector<64x256xf32>
    %73 = vector.extract_strided_slice %63 {offsets = [2, 0, 0], sizes = [1, 64, 1], strides = [1, 1, 1]} : vector<9x64x1xf32> to vector<1x64x1xf32>
    %74 = vector.shape_cast %73 : vector<1x64x1xf32> to vector<64x1xf32>
    %75 = vector.broadcast %74 : vector<64x1xf32> to vector<64x256xf32>
    %76 = arith.mulf %62, %75 : vector<64x256xf32>
    %77 = arith.addf %72, %76 : vector<64x256xf32>
    %78 = vector.extract_strided_slice %63 {offsets = [3, 0, 0], sizes = [1, 64, 1], strides = [1, 1, 1]} : vector<9x64x1xf32> to vector<1x64x1xf32>
    %79 = vector.shape_cast %78 : vector<1x64x1xf32> to vector<64x1xf32>
    %80 = vector.broadcast %79 : vector<64x1xf32> to vector<64x256xf32>
    %81 = arith.mulf %55, %80 : vector<64x256xf32>
    %82 = vector.extract_strided_slice %63 {offsets = [4, 0, 0], sizes = [1, 64, 1], strides = [1, 1, 1]} : vector<9x64x1xf32> to vector<1x64x1xf32>
    %83 = vector.shape_cast %82 : vector<1x64x1xf32> to vector<64x1xf32>
    %84 = vector.broadcast %83 : vector<64x1xf32> to vector<64x256xf32>
    %85 = arith.mulf %31, %84 : vector<64x256xf32>
    %86 = arith.addf %81, %85 : vector<64x256xf32>
    %87 = vector.extract_strided_slice %63 {offsets = [5, 0, 0], sizes = [1, 64, 1], strides = [1, 1, 1]} : vector<9x64x1xf32> to vector<1x64x1xf32>
    %88 = vector.shape_cast %87 : vector<1x64x1xf32> to vector<64x1xf32>
    %89 = vector.broadcast %88 : vector<64x1xf32> to vector<64x256xf32>
    %90 = arith.mulf %62, %89 : vector<64x256xf32>
    %91 = arith.addf %86, %90 : vector<64x256xf32>
    %92 = vector.extract_strided_slice %63 {offsets = [6, 0, 0], sizes = [1, 64, 1], strides = [1, 1, 1]} : vector<9x64x1xf32> to vector<1x64x1xf32>
    %93 = vector.shape_cast %92 : vector<1x64x1xf32> to vector<64x1xf32>
    %94 = vector.broadcast %93 : vector<64x1xf32> to vector<64x256xf32>
    %95 = arith.mulf %55, %94 : vector<64x256xf32>
    %96 = vector.extract_strided_slice %63 {offsets = [7, 0, 0], sizes = [1, 64, 1], strides = [1, 1, 1]} : vector<9x64x1xf32> to vector<1x64x1xf32>
    %97 = vector.shape_cast %96 : vector<1x64x1xf32> to vector<64x1xf32>
    %98 = vector.broadcast %97 : vector<64x1xf32> to vector<64x256xf32>
    %99 = arith.mulf %31, %98 : vector<64x256xf32>
    %100 = arith.addf %95, %99 : vector<64x256xf32>
    %101 = vector.extract_strided_slice %63 {offsets = [8, 0, 0], sizes = [1, 64, 1], strides = [1, 1, 1]} : vector<9x64x1xf32> to vector<1x64x1xf32>
    %102 = vector.shape_cast %101 : vector<1x64x1xf32> to vector<64x1xf32>
    %103 = vector.broadcast %102 : vector<64x1xf32> to vector<64x256xf32>
    %104 = arith.mulf %62, %103 : vector<64x256xf32>
    %105 = arith.addf %100, %104 : vector<64x256xf32>
    %c16_i32_27 = arith.constant 16 : i32
    %106 = vector.broadcast %c16_i32_27 : i32 to vector<1x256xi32>
    %107 = arith.cmpi sge, %32, %106 : vector<1x256xi32>
    %c16_i32_28 = arith.constant 16 : i32
    %108 = tpu.dynamic_rotate %77 by %c16_i32_28 dim 1 : vector<64x256xf32>, i32 -> vector<64x256xf32>
    %cst_29 = arith.constant 0.000000e+00 : f32
    %109 = vector.shape_cast %107 : vector<1x256xi1> to vector<1x256xi1>
    %110 = vector.broadcast %109 : vector<1x256xi1> to vector<64x256xi1>
    %111 = vector.broadcast %cst_29 : f32 to vector<64x256xf32>
    %112 = arith.select %110, %108, %111 : vector<64x256xi1>, vector<64x256xf32>
    %c240_i32 = arith.constant 240 : i32
    %113 = vector.broadcast %c240_i32 : i32 to vector<1x256xi32>
    %114 = arith.cmpi slt, %32, %113 : vector<1x256xi32>
    %c240_i32_30 = arith.constant 240 : i32
    %115 = tpu.dynamic_rotate %105 by %c240_i32_30 dim 1 : vector<64x256xf32>, i32 -> vector<64x256xf32>
    %cst_31 = arith.constant 0.000000e+00 : f32
    %116 = vector.shape_cast %114 : vector<1x256xi1> to vector<1x256xi1>
    %117 = vector.broadcast %116 : vector<1x256xi1> to vector<64x256xi1>
    %118 = vector.broadcast %cst_31 : f32 to vector<64x256xf32>
    %119 = arith.select %117, %115, %118 : vector<64x256xi1>, vector<64x256xf32>
    %120 = arith.addf %91, %112 : vector<64x256xf32>
    %121 = arith.addf %120, %119 : vector<64x256xf32>
    %c0_32 = arith.constant 0 : index
    %c0_33 = arith.constant 0 : index
    %122 = vector.load %arg7[%c0_32, %c0_33] : memref<64x1xf32, #tpu.memory_space<vmem>>, vector<64x1xf32>
    %123 = vector.broadcast %122 : vector<64x1xf32> to vector<64x256xf32>
    %124 = arith.addf %121, %123 : vector<64x256xf32>
    %125 = vector.extract_strided_slice %124 {offsets = [0, 0], sizes = [32, 256], strides = [1, 1]} : vector<64x256xf32> to vector<32x256xf32>
    %126 = vector.extract_strided_slice %124 {offsets = [32, 0], sizes = [32, 256], strides = [1, 1]} : vector<64x256xf32> to vector<32x256xf32>
    %cst_34 = arith.constant 5.000000e-01 : f32
    %127 = vector.broadcast %cst_34 : f32 to vector<32x256xf32>
    %128 = arith.mulf %127, %125 : vector<32x256xf32>
    %cst_35 = arith.constant 0.707106769 : f32
    %129 = vector.broadcast %cst_35 : f32 to vector<32x256xf32>
    %130 = arith.mulf %125, %129 : vector<32x256xf32>
    %131 = math.erf %130 : vector<32x256xf32>
    %cst_36 = arith.constant 1.000000e+00 : f32
    %132 = vector.broadcast %cst_36 : f32 to vector<32x256xf32>
    %133 = arith.addf %132, %131 : vector<32x256xf32>
    %134 = arith.mulf %128, %133 : vector<32x256xf32>
    %135 = arith.mulf %134, %126 : vector<32x256xf32>
    %c0_37 = arith.constant 0 : index
    %c0_38 = arith.constant 0 : index
    %136 = vector.load %arg8[%c0_37, %c0_38] : memref<16x32xbf16, #tpu.memory_space<vmem>>, vector<16x32xbf16>
    %137 = arith.truncf %135 : vector<32x256xf32> to vector<32x256xbf16>
    %cst_39 = arith.constant dense<0.000000e+00> : vector<16x256xf32>
    %138 = tpu.matmul %136, %137, %cst_39 {dimension_numbers = #tpu.dot_dimension_numbers<[1], [0], [0], [1], [0, 0, 1, 1], [], []>} : vector<16x32xbf16>, vector<32x256xbf16>, vector<16x256xf32> -> vector<16x256xf32>
    %c0_40 = arith.constant 0 : index
    %c0_41 = arith.constant 0 : index
    %139 = vector.load %arg9[%c0_40, %c0_41] : memref<16x1xf32, #tpu.memory_space<vmem>>, vector<16x1xf32>
    %140 = vector.broadcast %139 : vector<16x1xf32> to vector<16x256xf32>
    %141 = arith.addf %138, %140 : vector<16x256xf32>
    %142 = arith.addf %141, %1 : vector<16x256xf32>
    %c0_42 = arith.constant 0 : index
    %c0_43 = arith.constant 0 : index
    %c0_44 = arith.constant 0 : index
    %143 = vector.load %arg10[%c0_42, %c0_43, %c0_44] : memref<1x16x256xf32, #tpu.memory_space<vmem>>, vector<1x16x256xf32>
    %144 = vector.shape_cast %143 : vector<1x16x256xf32> to vector<16x256xf32>
    %145 = vector.shape_cast %142 : vector<16x256xf32> to vector<1x16x256xf32>
    tpu.vector_store %arg10[%c0_42, %c0_43, %c0_44], %145 {strides = array<i32>} : memref<1x16x256xf32, #tpu.memory_space<vmem>>, vector<1x16x256xf32>,
    return
  }
  func.func @transform_0(%arg0: i32) -> (i32, i32, i32) {
    %c0_i32 = arith.constant 0 : i32
    %c0_i32_0 = arith.constant 0 : i32
    %c0_i32_1 = arith.constant 0 : i32
    return %arg0, %c0_i32, %c0_i32_0 : i32, i32, i32
  }
  func.func @transform_1(%arg0: i32) -> (i32, i32, i32) {
    %c0_i32 = arith.constant 0 : i32
    %c0_i32_0 = arith.constant 0 : i32
    %c0_i32_1 = arith.constant 0 : i32
    return %arg0, %c0_i32, %c0_i32_0 : i32, i32, i32
  }
  func.func @transform_2(%arg0: i32) -> (i32, i32, i32) {
    %c0_i32 = arith.constant 0 : i32
    %c0_i32_0 = arith.constant 0 : i32
    %c0_i32_1 = arith.constant 0 : i32
    return %arg0, %c0_i32, %c0_i32_0 : i32, i32, i32
  }
  func.func @transform_3(%arg0: i32) -> (i32, i32) {
    %c0_i32 = arith.constant 0 : i32
    %c0_i32_0 = arith.constant 0 : i32
    %c0_i32_1 = arith.constant 0 : i32
    return %c0_i32, %c0_i32_0 : i32, i32
  }
  func.func @transform_4(%arg0: i32) -> (i32, i32) {
    %c0_i32 = arith.constant 0 : i32
    %c0_i32_0 = arith.constant 0 : i32
    %c0_i32_1 = arith.constant 0 : i32
    return %c0_i32, %c0_i32_0 : i32, i32
  }
  func.func @transform_5(%arg0: i32) -> (i32, i32, i32) {
    %c0_i32 = arith.constant 0 : i32
    %c0_i32_0 = arith.constant 0 : i32
    %c0_i32_1 = arith.constant 0 : i32
    %c0_i32_2 = arith.constant 0 : i32
    return %c0_i32, %c0_i32_0, %c0_i32_1 : i32, i32, i32
  }
  func.func @transform_6(%arg0: i32) -> (i32, i32) {
    %c0_i32 = arith.constant 0 : i32
    %c0_i32_0 = arith.constant 0 : i32
    %c0_i32_1 = arith.constant 0 : i32
    return %c0_i32, %c0_i32_0 : i32, i32
  }
  func.func @transform_7(%arg0: i32) -> (i32, i32) {
    %c0_i32 = arith.constant 0 : i32
    %c0_i32_0 = arith.constant 0 : i32
    %c0_i32_1 = arith.constant 0 : i32
    return %c0_i32, %c0_i32_0 : i32, i32
  }
  func.func @transform_8(%arg0: i32) -> (i32, i32) {
    %c0_i32 = arith.constant 0 : i32
    %c0_i32_0 = arith.constant 0 : i32
    %c0_i32_1 = arith.constant 0 : i32
    return %c0_i32, %c0_i32_0 : i32, i32
  }
  func.func @transform_9(%arg0: i32) -> (i32, i32, i32) {
    %c0_i32 = arith.constant 0 : i32
    %c0_i32_0 = arith.constant 0 : i32
    %c0_i32_1 = arith.constant 0 : i32
    return %arg0, %c0_i32, %c0_i32_0 : i32, i32, i32
  }
}

</mosaic_0001>

<llo_original>
// kernel: transformer_block_forward.2
$region0: #{transformer_block_forward.2}
  #allocation0 [shape = 'u32[]', space=smem, size = 0x4, offset = 0x4, fixed_abs, tag = 'smem constant byte address 0x4 - core index']
  #allocation1 [shape = 'u32[144,128]{1,0:T(1,128)}', space=vmem, size = 0x12000, scoped, tag = 'internal scratch']
  %s0 = inlined_call_operand.hbm [shape: f32[2,16,256], index: 0, kind: input, shape index: {}, may-alias: {0,11}]
  %s1 = inlined_call_operand.hbm [shape: f32[2,16,1], index: 1, kind: input, shape index: {}]
  %s2 = inlined_call_operand.hbm [shape: f32[2,16,1], index: 2, kind: input, shape index: {}]
  %s3 = inlined_call_operand.hbm [shape: bf16[48,16], index: 3, kind: input, shape index: {}]
  %s4 = inlined_call_operand.hbm [shape: f32[48,1], index: 4, kind: input, shape index: {}]
  %s5 = inlined_call_operand.hbm [shape: f32[9,48,1], index: 5, kind: input, shape index: {}]
  %s6 = inlined_call_operand.hbm [shape: f32[48,1], index: 6, kind: input, shape index: {}]
  %s7 = inlined_call_operand.hbm [shape: bf16[16,16], index: 7, kind: input, shape index: {}]
  %s8 = inlined_call_operand.hbm [shape: f32[16,1], index: 8, kind: input, shape index: {}]
  %s9 = inlined_call_operand.hbm [shape: f32[16,1], index: 9, kind: input, shape index: {}]
  %s10 = inlined_call_operand.hbm [shape: f32[16,16], index: 10, kind: input, shape index: {}]
  %s11 = inlined_call_operand.hbm [shape: f32[2,16,256], index: 11, kind: output, shape index: {}, may-alias: {0,11}]
  %s12 = sld [smem:[#allocation0]]
  $region121: #{transformer_block_forward.2} parent=0
    _
  %s14 = ssub.s32 1, %s12
  %s15 = scalar_select 0, %s14, %s12
  $region1: #{transformer_block_forward.2} parent=0
    #allocation2 [shape = 'u8[32768]{0}', space=vmem, size = 0x8000, scoped, tag = 'input window, operand 0']
    #allocation3 [shape = 's32[2]{0}', space=sflag, size = 0x8, scoped, tag = 'scoped memory for transformer_block_forward.2']
    #allocation4 [shape = 's32[2]{0}', space=sflag, size = 0x8, scoped, tag = 'scoped memory for transformer_block_forward.2']
    #allocation5 [shape = 'u8[16384]{0}', space=vmem, size = 0x4000, scoped, tag = 'input window, operand 1']
    #allocation6 [shape = 's32[2]{0}', space=sflag, size = 0x8, scoped, tag = 'scoped memory for transformer_block_forward.2']
    #allocation7 [shape = 'u8[16384]{0}', space=vmem, size = 0x4000, scoped, tag = 'input window, operand 2']
    #allocation8 [shape = 'u8[12288]{0}', space=vmem, size = 0x3000, scoped, tag = 'input window, operand 3, single buffered']
    #allocation9 [shape = 's32[1]{0}', space=sflag, size = 0x4, scoped, tag = 'scoped memory for transformer_block_forward.2']
    #allocation10 [shape = 'u8[24576]{0}', space=vmem, size = 0x6000, scoped, tag = 'input window, operand 4, single buffered']
    #allocation11 [shape = 'u8[221184]{0}', space=vmem, size = 0x36000, scoped, tag = 'input window, operand 5, single buffered']
    #allocation12 [shape = 's32[1]{0}', space=sflag, size = 0x4, scoped, tag = 'scoped memory for transformer_block_forward.2']
    #allocation13 [shape = 'u8[24576]{0}', space=vmem, size = 0x6000, scoped, tag = 'input window, operand 6, single buffered']
    #allocation14 [shape = 'u8[4096]{0}', space=vmem, size = 0x1000, scoped, tag = 'input window, operand 7, single buffered']
    #allocation15 [shape = 's32[1]{0}', space=sflag, size = 0x4, scoped, tag = 'scoped memory for transformer_block_forward.2']
    #allocation16 [shape = 'u8[8192]{0}', space=vmem, size = 0x2000, scoped, tag = 'input window, operand 8, single buffered']
    #allocation17 [shape = 'u8[8192]{0}', space=vmem, size = 0x2000, scoped, tag = 'input window, operand 9, single buffered']
    #allocation18 [shape = 's32[1]{0}', space=sflag, size = 0x4, scoped, tag = 'scoped memory for transformer_block_forward.2']
    #allocation19 [shape = 'u8[8192]{0}', space=vmem, size = 0x2000, scoped, tag = 'input window, operand 10, single buffered']
    #allocation20 [shape = 'u8[32768]{0}', space=vmem, size = 0x8000, scoped, tag = 'output window, operand 0']
    %16 = vsyncpa [#allocation3], 0
    %s17 = scalar_lea.sflag [#allocation3], 1
    %18 = vsyncpa %s17, 0
    %19 = vsyncpa [#allocation6], 0
    %s20 = scalar_lea.sflag [#allocation6], 1
    %21 = vsyncpa %s20, 0
    %22 = vsyncpa [#allocation9], 0
    %23 = vsyncpa [#allocation12], 0
    %24 = vsyncpa [#allocation15], 0
    %25 = vsyncpa [#allocation18], 0
    %26 = vsyncpa [#allocation4], 0
    %s27 = scalar_lea.sflag [#allocation4], 1
    %28 = vsyncpa %s27, 0
    loop: start=0, step=1, limit=4
    $region2: #{transformer_block_forward.2} parent=1 // loop_pre_header
      _
    $region3: #{transformer_block_forward.2} parent=1 // loop_header
      %s30 = sphi 0, %s34
      %p31 = scmp.ge.s32.totalorder %s30, 4
      %s40 = sphi 0, %s42
      %s43 = sphi 0, %s40
      %s44 = sphi 0, %s43
      %s60 = sphi 0, %s44
      %s66 = sphi 0, %s68
      %s69 = sphi 0, %s66
      %s70 = sphi 0, %s69
      %s86 = sphi 0, %s70
      %s92 = sphi 0, %s94
      %s95 = sphi 0, %s92
      %s96 = sphi 0, %s95
      %s112 = sphi 0, %s96
      %s116 = sphi 0, %s116
      %s118 = sphi 0, %s116
      %s119 = sphi 0, %s118
      %s133 = sphi 0, %s119
      %s137 = sphi 0, %s137
      %s139 = sphi 0, %s137
      %s140 = sphi 0, %s139
      %s154 = sphi 0, %s140
      %s158 = sphi 0, %s158
      %s160 = sphi 0, %s158
      %s161 = sphi 0, %s160
      %s175 = sphi 0, %s161
      %s179 = sphi 0, %s179
      %s181 = sphi 0, %s179
      %s182 = sphi 0, %s181
      %s196 = sphi 0, %s182
      %s200 = sphi 0, %s200
      %s202 = sphi 0, %s200
      %s203 = sphi 0, %s202
      %s217 = sphi 0, %s203
      %s221 = sphi 0, %s221
      %s223 = sphi 0, %s221
      %s224 = sphi 0, %s223
      %s238 = sphi 0, %s224
      %s242 = sphi 0, %s242
      %s244 = sphi 0, %s242
      %s245 = sphi 0, %s244
      %s259 = sphi 0, %s245
      %s263 = sphi 0, %s263
      %s265 = sphi 0, %s263
      %s266 = sphi 0, %s265
      %s280 = sphi 0, %s266
      %s286 = sphi 0, %s288
      %s289 = sphi 0, %s286
      %s290 = sphi 0, %s289
      %s306 = sphi 0, %s290
    $region4: #{transformer_block_forward.2} parent=1 // loop_header_branch
      %33 = sbr.rel (%p31) target = $region8
    $region5: #{transformer_block_forward.2} parent=1 // loop_body
      %s35 = ssub.s32 %s30, 1
      %s36 = ssub.s32 %s30, 2
      %s37 = sadd.s32 %s30, 1
      %s38 = ssub.s32 %s30, %s37
      %p39 = scmp.eq.s32.totalorder %s38, 0
      %s41 = sadd.s32 %s40, 1
      %s42 = scalar_select %p39, %s40, %s41
      %p45 = pneg %p39
      %p46 = scmp.eq.s32.totalorder %s30, 1
      %p47 = por %p45, %p46
      %p48 = scmp.ne.s32.totalorder %s40, %s43
      %p49 = scmp.eq.s32.totalorder %s30, 0
      %p50 = por %p48, %p49
      %p51 = scmp.ne.s32.totalorder %s40, %s43
      %p52 = scmp.eq.s32.totalorder %s35, 1
      %p53 = por %p51, %p52
      %p54 = scmp.ne.s32.totalorder %s43, %s44
      %p55 = scmp.eq.s32.totalorder %s35, 0
      %p56 = por %p54, %p55
      %p57 = scmp.ne.s32.totalorder %s43, %s44
      %p58 = scmp.eq.s32.totalorder %s36, 1
      %p59 = por %p57, %p58
      %p61 = scmp.ne.s32.totalorder %s44, %s60
      %p62 = scmp.eq.s32.totalorder %s36, 0
      %p63 = por %p61, %p62
      %s64 = ssub.s32 %s30, %s37
      %p65 = scmp.eq.s32.totalorder %s64, 0
      %s67 = sadd.s32 %s66, 1
      %s68 = scalar_select %p65, %s66, %s67
      %p71 = pneg %p65
      %p72 = scmp.eq.s32.totalorder %s30, 1
      %p73 = por %p71, %p72
      %p74 = scmp.ne.s32.totalorder %s66, %s69
      %p75 = scmp.eq.s32.totalorder %s30, 0
      %p76 = por %p74, %p75
      %p77 = scmp.ne.s32.totalorder %s66, %s69
      %p78 = scmp.eq.s32.totalorder %s35, 1
      %p79 = por %p77, %p78
      %p80 = scmp.ne.s32.totalorder %s69, %s70
      %p81 = scmp.eq.s32.totalorder %s35, 0
      %p82 = por %p80, %p81
      %p83 = scmp.ne.s32.totalorder %s69, %s70
      %p84 = scmp.eq.s32.totalorder %s36, 1
      %p85 = por %p83, %p84
      %p87 = scmp.ne.s32.totalorder %s70, %s86
      %p88 = scmp.eq.s32.totalorder %s36, 0
      %p89 = por %p87, %p88
      %s90 = ssub.s32 %s30, %s37
      %p91 = scmp.eq.s32.totalorder %s90, 0
      %s93 = sadd.s32 %s92, 1
      %s94 = scalar_select %p91, %s92, %s93
      %p97 = pneg %p91
      %p98 = scmp.eq.s32.totalorder %s30, 1
      %p99 = por %p97, %p98
      %p100 = scmp.ne.s32.totalorder %s92, %s95
      %p101 = scmp.eq.s32.totalorder %s30, 0
      %p102 = por %p100, %p101
      %p103 = scmp.ne.s32.totalorder %s92, %s95
      %p104 = scmp.eq.s32.totalorder %s35, 1
      %p105 = por %p103, %p104
      %p106 = scmp.ne.s32.totalorder %s95, %s96
      %p107 = scmp.eq.s32.totalorder %s35, 0
      %p108 = por %p106, %p107
      %p109 = scmp.ne.s32.totalorder %s95, %s96
      %p110 = scmp.eq.s32.totalorder %s36, 1
      %p111 = por %p109, %p110
      %p113 = scmp.ne.s32.totalorder %s96, %s112
      %p114 = scmp.eq.s32.totalorder %s36, 0
      %p115 = por %p113, %p114
      %s117 = sadd.s32 %s116, 1
      %p120 = scmp.eq.s32.totalorder %s30, 1
      %p121 = scmp.ne.s32.totalorder %s116, %s118
      %p122 = scmp.eq.s32.totalorder %s30, 0
      %p123 = por %p121, %p122
      %p124 = scmp.ne.s32.totalorder %s116, %s118
      %p125 = scmp.eq.s32.totalorder %s35, 1
      %p126 = por %p124, %p125
      %p127 = scmp.ne.s32.totalorder %s118, %s119
      %p128 = scmp.eq.s32.totalorder %s35, 0
      %p129 = por %p127, %p128
      %p130 = scmp.ne.s32.totalorder %s118, %s119
      %p131 = scmp.eq.s32.totalorder %s36, 1
      %p132 = por %p130, %p131
      %p134 = scmp.ne.s32.totalorder %s119, %s133
      %p135 = scmp.eq.s32.totalorder %s36, 0
      %p136 = por %p134, %p135
      %s138 = sadd.s32 %s137, 1
      %p141 = scmp.eq.s32.totalorder %s30, 1
      %p142 = scmp.ne.s32.totalorder %s137, %s139
      %p143 = scmp.eq.s32.totalorder %s30, 0
      %p144 = por %p142, %p143
      %p145 = scmp.ne.s32.totalorder %s137, %s139
      %p146 = scmp.eq.s32.totalorder %s35, 1
      %p147 = por %p145, %p146
      %p148 = scmp.ne.s32.totalorder %s139, %s140
      %p149 = scmp.eq.s32.totalorder %s35, 0
      %p150 = por %p148, %p149
      %p151 = scmp.ne.s32.totalorder %s139, %s140
      %p152 = scmp.eq.s32.totalorder %s36, 1
      %p153 = por %p151, %p152
      %p155 = scmp.ne.s32.totalorder %s140, %s154
      %p156 = scmp.eq.s32.totalorder %s36, 0
      %p157 = por %p155, %p156
      %s159 = sadd.s32 %s158, 1
      %p162 = scmp.eq.s32.totalorder %s30, 1
      %p163 = scmp.ne.s32.totalorder %s158, %s160
      %p164 = scmp.eq.s32.totalorder %s30, 0
      %p165 = por %p163, %p164
      %p166 = scmp.ne.s32.totalorder %s158, %s160
      %p167 = scmp.eq.s32.totalorder %s35, 1
      %p168 = por %p166, %p167
      %p169 = scmp.ne.s32.totalorder %s160, %s161
      %p170 = scmp.eq.s32.totalorder %s35, 0
      %p171 = por %p169, %p170
      %p172 = scmp.ne.s32.totalorder %s160, %s161
      %p173 = scmp.eq.s32.totalorder %s36, 1
      %p174 = por %p172, %p173
      %p176 = scmp.ne.s32.totalorder %s161, %s175
      %p177 = scmp.eq.s32.totalorder %s36, 0
      %p178 = por %p176, %p177
      %s180 = sadd.s32 %s179, 1
      %p183 = scmp.eq.s32.totalorder %s30, 1
      %p184 = scmp.ne.s32.totalorder %s179, %s181
      %p185 = scmp.eq.s32.totalorder %s30, 0
      %p186 = por %p184, %p185
      %p187 = scmp.ne.s32.totalorder %s179, %s181
      %p188 = scmp.eq.s32.totalorder %s35, 1
      %p189 = por %p187, %p188
      %p190 = scmp.ne.s32.totalorder %s181, %s182
      %p191 = scmp.eq.s32.totalorder %s35, 0
      %p192 = por %p190, %p191
      %p193 = scmp.ne.s32.totalorder %s181, %s182
      %p194 = scmp.eq.s32.totalorder %s36, 1
      %p195 = por %p193, %p194
      %p197 = scmp.ne.s32.totalorder %s182, %s196
      %p198 = scmp.eq.s32.totalorder %s36, 0
      %p199 = por %p197, %p198
      %s201 = sadd.s32 %s200, 1
      %p204 = scmp.eq.s32.totalorder %s30, 1
      %p205 = scmp.ne.s32.totalorder %s200, %s202
      %p206 = scmp.eq.s32.totalorder %s30, 0
      %p207 = por %p205, %p206
      %p208 = scmp.ne.s32.totalorder %s200, %s202
      %p209 = scmp.eq.s32.totalorder %s35, 1
      %p210 = por %p208, %p209
      %p211 = scmp.ne.s32.totalorder %s202, %s203
      %p212 = scmp.eq.s32.totalorder %s35, 0
      %p213 = por %p211, %p212
      %p214 = scmp.ne.s32.totalorder %s202, %s203
      %p215 = scmp.eq.s32.totalorder %s36, 1
      %p216 = por %p214, %p215
      %p218 = scmp.ne.s32.totalorder %s203, %s217
      %p219 = scmp.eq.s32.totalorder %s36, 0
      %p220 = por %p218, %p219
      %s222 = sadd.s32 %s221, 1
      %p225 = scmp.eq.s32.totalorder %s30, 1
      %p226 = scmp.ne.s32.totalorder %s221, %s223
      %p227 = scmp.eq.s32.totalorder %s30, 0
      %p228 = por %p226, %p227
      %p229 = scmp.ne.s32.totalorder %s221, %s223
      %p230 = scmp.eq.s32.totalorder %s35, 1
      %p231 = por %p229, %p230
      %p232 = scmp.ne.s32.totalorder %s223, %s224
      %p233 = scmp.eq.s32.totalorder %s35, 0
      %p234 = por %p232, %p233
      %p235 = scmp.ne.s32.totalorder %s223, %s224
      %p236 = scmp.eq.s32.totalorder %s36, 1
      %p237 = por %p235, %p236
      %p239 = scmp.ne.s32.totalorder %s224, %s238
      %p240 = scmp.eq.s32.totalorder %s36, 0
      %p241 = por %p239, %p240
      %s243 = sadd.s32 %s242, 1
      %p246 = scmp.eq.s32.totalorder %s30, 1
      %p247 = scmp.ne.s32.totalorder %s242, %s244
      %p248 = scmp.eq.s32.totalorder %s30, 0
      %p249 = por %p247, %p248
      %p250 = scmp.ne.s32.totalorder %s242, %s244
      %p251 = scmp.eq.s32.totalorder %s35, 1
      %p252 = por %p250, %p251
      %p253 = scmp.ne.s32.totalorder %s244, %s245
      %p254 = scmp.eq.s32.totalorder %s35, 0
      %p255 = por %p253, %p254
      %p256 = scmp.ne.s32.totalorder %s244, %s245
      %p257 = scmp.eq.s32.totalorder %s36, 1
      %p258 = por %p256, %p257
      %p260 = scmp.ne.s32.totalorder %s245, %s259
      %p261 = scmp.eq.s32.totalorder %s36, 0
      %p262 = por %p260, %p261
      %s264 = sadd.s32 %s263, 1
      %p267 = scmp.eq.s32.totalorder %s30, 1
      %p268 = scmp.ne.s32.totalorder %s263, %s265
      %p269 = scmp.eq.s32.totalorder %s30, 0
      %p270 = por %p268, %p269
      %p271 = scmp.ne.s32.totalorder %s263, %s265
      %p272 = scmp.eq.s32.totalorder %s35, 1
      %p273 = por %p271, %p272
      %p274 = scmp.ne.s32.totalorder %s265, %s266
      %p275 = scmp.eq.s32.totalorder %s35, 0
      %p276 = por %p274, %p275
      %p277 = scmp.ne.s32.totalorder %s265, %s266
      %p278 = scmp.eq.s32.totalorder %s36, 1
      %p279 = por %p277, %p278
      %p281 = scmp.ne.s32.totalorder %s266, %s280
      %p282 = scmp.eq.s32.totalorder %s36, 0
      %p283 = por %p281, %p282
      %s284 = ssub.s32 %s30, %s37
      %p285 = scmp.eq.s32.totalorder %s284, 0
      %s287 = sadd.s32 %s286, 1
      %s288 = scalar_select %p285, %s286, %s287
      %p291 = pneg %p285
      %p292 = scmp.eq.s32.totalorder %s30, 1
      %p293 = por %p291, %p292
      %p294 = scmp.ne.s32.totalorder %s286, %s289
      %p295 = scmp.eq.s32.totalorder %s30, 0
      %p296 = por %p294, %p295
      %p297 = scmp.ne.s32.totalorder %s286, %s289
      %p298 = scmp.eq.s32.totalorder %s35, 1
      %p299 = por %p297, %p298
      %p300 = scmp.ne.s32.totalorder %s289, %s290
      %p301 = scmp.eq.s32.totalorder %s35, 0
      %p302 = por %p300, %p301
      %p303 = scmp.ne.s32.totalorder %s289, %s290
      %p304 = scmp.eq.s32.totalorder %s36, 1
      %p305 = por %p303, %p304
      %p307 = scmp.ne.s32.totalorder %s290, %s306
      %p308 = scmp.eq.s32.totalorder %s36, 0
      %p309 = por %p307, %p308
      %p310 = scmp.le.s32.totalorder 1, %s30
      %p311 = scmp.lt.s32.totalorder %s30, 3
      %p312 = pnand %p310, %p311
      %p313 = pneg %p312
      // Predicated region
      $region9: #{transformer_block_forward.2} parent=5 // pred_check
        _
      $region10: #{transformer_block_forward.2} parent=5 // pred_check_branch
        %315 = sbr.rel (%p312) target = $region12
      $region11: #{transformer_block_forward.2} parent=5 // pred_region
        %s316 = ssub.s32 %s30, 1
        // Predicated region
        $region13: #{transformer_block_forward.2} parent=11 // pred_check
          %p317 = pneg %p129
        $region14: #{transformer_block_forward.2} parent=11 // pred_check_branch
          %319 = sbr.rel (%p317) target = $region16
        $region15: #{transformer_block_forward.2} parent=11 // pred_region
          %s321 = ssub.s32 384, 384
          %322 = vsyncadd [#allocation9], %s321
          %s323 = sshll.u32 [#allocation8], 4
          %s324 = int_to_ptr.vmem [resolvable:$true] %s323
          %329 = dma.hbm_to_vmem [thread:$0]  %s3, 384, %s324, [#allocation9], 64, 64, 4
        $region16: #{transformer_block_forward.2} parent=11 // pred_fallthru
          _
        // Predicated region
        $region17: #{transformer_block_forward.2} parent=11 // pred_check
          %p330 = pneg %p150
        $region18: #{transformer_block_forward.2} parent=11 // pred_check_branch
          %332 = sbr.rel (%p330) target = $region20
        $region19: #{transformer_block_forward.2} parent=11 // pred_region
          %s334 = ssub.s32 768, 768
          %335 = vsyncadd [#allocation9], %s334
          %s336 = sshll.u32 [#allocation10], 4
          %s337 = int_to_ptr.vmem [resolvable:$true] %s336
          %342 = dma.hbm_to_vmem [thread:$0]  %s4, 768, %s337, [#allocation9], 128, 128, 8
        $region20: #{transformer_block_forward.2} parent=11 // pred_fallthru
          _
        // Predicated region
        $region21: #{transformer_block_forward.2} parent=11 // pred_check
          %p343 = pneg %p171
        $region22: #{transformer_block_forward.2} parent=11 // pred_check_branch
          %345 = sbr.rel (%p343) target = $region24
        $region23: #{transformer_block_forward.2} parent=11 // pred_region
          %s347 = ssub.s32 6912, 6912
          %348 = vsyncadd [#allocation12], %s347
          %s349 = sshll.u32 [#allocation11], 4
          %s350 = int_to_ptr.vmem [resolvable:$true] %s349
          %355 = dma.hbm_to_vmem [thread:$0]  %s5, 6912, %s350, [#allocation12], 128, 128, 8
        $region24: #{transformer_block_forward.2} parent=11 // pred_fallthru
          _
        // Predicated region
        $region25: #{transformer_block_forward.2} parent=11 // pred_check
          %p356 = pneg %p192
        $region26: #{transformer_block_forward.2} parent=11 // pred_check_branch
          %358 = sbr.rel (%p356) target = $region28
        $region27: #{transformer_block_forward.2} parent=11 // pred_region
          %s360 = ssub.s32 768, 768
          %361 = vsyncadd [#allocation12], %s360
          %s362 = sshll.u32 [#allocation13], 4
          %s363 = int_to_ptr.vmem [resolvable:$true] %s362
          %368 = dma.hbm_to_vmem [thread:$0]  %s6, 768, %s363, [#allocation12], 128, 128, 8
        $region28: #{transformer_block_forward.2} parent=11 // pred_fallthru
          _
        // Predicated region
        $region29: #{transformer_block_forward.2} parent=11 // pred_check
          %p369 = pneg %p213
        $region30: #{transformer_block_forward.2} parent=11 // pred_check_branch
          %371 = sbr.rel (%p369) target = $region32
        $region31: #{transformer_block_forward.2} parent=11 // pred_region
          %s373 = ssub.s32 128, 128
          %374 = vsyncadd [#allocation15], %s373
          %s375 = sshll.u32 [#allocation14], 4
          %s376 = int_to_ptr.vmem [resolvable:$true] %s375
          %381 = dma.hbm_to_vmem [thread:$0]  %s7, 128, %s376, [#allocation15], 64, 64, 4
        $region32: #{transformer_block_forward.2} parent=11 // pred_fallthru
          _
        // Predicated region
        $region33: #{transformer_block_forward.2} parent=11 // pred_check
          %p382 = pneg %p234
        $region34: #{transformer_block_forward.2} parent=11 // pred_check_branch
          %384 = sbr.rel (%p382) target = $region36
        $region35: #{transformer_block_forward.2} parent=11 // pred_region
          %s386 = ssub.s32 256, 256
          %387 = vsyncadd [#allocation15], %s386
          %s388 = sshll.u32 [#allocation16], 4
          %s389 = int_to_ptr.vmem [resolvable:$true] %s388
          %394 = dma.hbm_to_vmem [thread:$0]  %s8, 256, %s389, [#allocation15], 128, 128, 8
        $region36: #{transformer_block_forward.2} parent=11 // pred_fallthru
          _
        // Predicated region
        $region37: #{transformer_block_forward.2} parent=11 // pred_check
          %p395 = pneg %p255
        $region38: #{transformer_block_forward.2} parent=11 // pred_check_branch
          %397 = sbr.rel (%p395) target = $region40
        $region39: #{transformer_block_forward.2} parent=11 // pred_region
          %s399 = ssub.s32 256, 256
          %400 = vsyncadd [#allocation18], %s399
          %s401 = sshll.u32 [#allocation17], 4
          %s402 = int_to_ptr.vmem [resolvable:$true] %s401
          %407 = dma.hbm_to_vmem [thread:$0]  %s9, 256, %s402, [#allocation18], 128, 128, 8
        $region40: #{transformer_block_forward.2} parent=11 // pred_fallthru
          _
        // Predicated region
        $region41: #{transformer_block_forward.2} parent=11 // pred_check
          %p408 = pneg %p276
        $region42: #{transformer_block_forward.2} parent=11 // pred_check_branch
          %410 = sbr.rel (%p408) target = $region44
        $region43: #{transformer_block_forward.2} parent=11 // pred_region
          %s412 = ssub.s32 256, 256
          %413 = vsyncadd [#allocation18], %s412
          %s414 = sshll.u32 [#allocation19], 4
          %s415 = int_to_ptr.vmem [resolvable:$true] %s414
          %420 = dma.hbm_to_vmem [thread:$0]  %s10, 256, %s415, [#allocation18], 128, 128, 8
        $region44: #{transformer_block_forward.2} parent=11 // pred_fallthru
          _
      $region12: #{transformer_block_forward.2} parent=5 // pred_fallthru
        _
      %p421 = scmp.lt.s32.totalorder %s30, 2
      // Predicated region
      $region45: #{transformer_block_forward.2} parent=5 // pred_check
        %p422 = pneg %p421
      $region46: #{transformer_block_forward.2} parent=5 // pred_check_branch
        %424 = sbr.rel (%p422) target = $region48
      $region47: #{transformer_block_forward.2} parent=5 // pred_region
        // Predicated region
        $region49: #{transformer_block_forward.2} parent=47 // pred_check
          %p425 = pneg %p50
        $region50: #{transformer_block_forward.2} parent=47 // pred_check_branch
          %427 = sbr.rel (%p425) target = $region52
        $region51: #{transformer_block_forward.2} parent=47 // pred_region
          %s428 = sand.u32 %s40, 1
          %s429 = scalar_lea.sflag [#allocation3], %s428
          %s430 = sand.u32 %s40, 1
          %s431 = smul.addr %s430, 32
          %s432 = scalar_lea.vmem [#allocation2], %s431
          %s434 = ssub.s32 512, 512
          %435 = vsyncadd %s429, %s434
          %s436 = smul.addr %s30, 4
          %s437 = smul.addr %s436, 128
          %s438 = scalar_lea.hbm %s0, %s437
          %s439 = sshll.u32 %s432, 4
          %s440 = int_to_ptr.vmem [resolvable:$true] %s439
          %445 = dma.hbm_to_vmem [thread:$0]  %s438, 512, %s440, %s429, 256, 256, 16
        $region52: #{transformer_block_forward.2} parent=47 // pred_fallthru
          _
        // Predicated region
        $region53: #{transformer_block_forward.2} parent=47 // pred_check
          %p446 = pneg %p76
        $region54: #{transformer_block_forward.2} parent=47 // pred_check_branch
          %448 = sbr.rel (%p446) target = $region56
        $region55: #{transformer_block_forward.2} parent=47 // pred_region
          %s449 = sand.u32 %s30, 1
          %s450 = scalar_lea.sflag [#allocation6], %s449
          %s451 = sand.u32 %s66, 1
          %s452 = smul.addr %s451, 16
          %s453 = scalar_lea.vmem [#allocation5], %s452
          %s455 = ssub.s32 256, 256
          %456 = vsyncadd %s450, %s455
          %s457 = smul.addr %s30, 2
          %s458 = smul.addr %s457, 128
          %s459 = scalar_lea.hbm %s1, %s458
          %s460 = sshll.u32 %s453, 4
          %s461 = int_to_ptr.vmem [resolvable:$true] %s460
          %466 = dma.hbm_to_vmem [thread:$0]  %s459, 256, %s461, %s450, 128, 128, 8
        $region56: #{transformer_block_forward.2} parent=47 // pred_fallthru
          _
        // Predicated region
        $region57: #{transformer_block_forward.2} parent=47 // pred_check
          %p467 = pneg %p102
        $region58: #{transformer_block_forward.2} parent=47 // pred_check_branch
          %469 = sbr.rel (%p467) target = $region60
        $region59: #{transformer_block_forward.2} parent=47 // pred_region
          %s470 = sand.u32 %s30, 1
          %s471 = scalar_lea.sflag [#allocation6], %s470
          %s472 = sand.u32 %s92, 1
          %s473 = smul.addr %s472, 16
          %s474 = scalar_lea.vmem [#allocation7], %s473
          %s476 = ssub.s32 256, 256
          %477 = vsyncadd %s471, %s476
          %s478 = smul.addr %s30, 2
          %s479 = smul.addr %s478, 128
          %s480 = scalar_lea.hbm %s2, %s479
          %s481 = sshll.u32 %s474, 4
          %s482 = int_to_ptr.vmem [resolvable:$true] %s481
          %487 = dma.hbm_to_vmem [thread:$0]  %s480, 256, %s482, %s471, 128, 128, 8
        $region60: #{transformer_block_forward.2} parent=47 // pred_fallthru
          _
      $region48: #{transformer_block_forward.2} parent=5 // pred_fallthru
        _
      %p488 = scmp.le.s32.totalorder 1, %s30
      %p489 = scmp.lt.s32.totalorder %s30, 3
      %p490 = pnand %p488, %p489
      %p491 = pneg %p490
      // Predicated region
      $region61: #{transformer_block_forward.2} parent=5 // pred_check
        _
      $region62: #{transformer_block_forward.2} parent=5 // pred_check_branch
        %493 = sbr.rel (%p490) target = $region64
      $region63: #{transformer_block_forward.2} parent=5 // pred_region
        %s494 = ssub.s32 %s30, 1
        %s495 = sand.u32 %s43, 1
        %s496 = scalar_lea.sflag [#allocation3], %s495
        %s497 = sand.u32 %s43, 1
        %s498 = smul.addr %s497, 32
        %s499 = scalar_lea.vmem [#allocation2], %s498
        // Predicated region
        $region65: #{transformer_block_forward.2} parent=63 // pred_check
          %p500 = pneg %p56
        $region66: #{transformer_block_forward.2} parent=63 // pred_check_branch
          %502 = sbr.rel (%p500) target = $region68
        $region67: #{transformer_block_forward.2} parent=63 // pred_region
          %503 = dma.done %s496, 512
        $region68: #{transformer_block_forward.2} parent=63 // pred_fallthru
          _
        %s504 = sand.u32 %s35, 1
        %s505 = scalar_lea.sflag [#allocation6], %s504
        %s506 = sand.u32 %s69, 1
        %s507 = smul.addr %s506, 16
        %s508 = scalar_lea.vmem [#allocation5], %s507
        // Predicated region
        $region69: #{transformer_block_forward.2} parent=63 // pred_check
          %p509 = pneg %p82
        $region70: #{transformer_block_forward.2} parent=63 // pred_check_branch
          %511 = sbr.rel (%p509) target = $region72
        $region71: #{transformer_block_forward.2} parent=63 // pred_region
          %512 = dma.done %s505, 256
        $region72: #{transformer_block_forward.2} parent=63 // pred_fallthru
          _
        %s513 = sand.u32 %s35, 1
        %s514 = scalar_lea.sflag [#allocation6], %s513
        %s515 = sand.u32 %s95, 1
        %s516 = smul.addr %s515, 16
        %s517 = scalar_lea.vmem [#allocation7], %s516
        // Predicated region
        $region73: #{transformer_block_forward.2} parent=63 // pred_check
          %p518 = pneg %p108
        $region74: #{transformer_block_forward.2} parent=63 // pred_check_branch
          %520 = sbr.rel (%p518) target = $region76
        $region75: #{transformer_block_forward.2} parent=63 // pred_region
          %521 = dma.done %s514, 256
        $region76: #{transformer_block_forward.2} parent=63 // pred_fallthru
          _
        // Predicated region
        $region77: #{transformer_block_forward.2} parent=63 // pred_check
          %p522 = pneg %p129
        $region78: #{transformer_block_forward.2} parent=63 // pred_check_branch
          %524 = sbr.rel (%p522) target = $region80
        $region79: #{transformer_block_forward.2} parent=63 // pred_region
          %525 = dma.done [#allocation9], 384
        $region80: #{transformer_block_forward.2} parent=63 // pred_fallthru
          _
        // Predicated region
        $region81: #{transformer_block_forward.2} parent=63 // pred_check
          %p526 = pneg %p150
        $region82: #{transformer_block_forward.2} parent=63 // pred_check_branch
          %528 = sbr.rel (%p526) target = $region84
        $region83: #{transformer_block_forward.2} parent=63 // pred_region
          %529 = dma.done [#allocation9], 768
        $region84: #{transformer_block_forward.2} parent=63 // pred_fallthru
          _
        // Predicated region
        $region85: #{transformer_block_forward.2} parent=63 // pred_check
          %p530 = pneg %p171
        $region86: #{transformer_block_forward.2} parent=63 // pred_check_branch
          %532 = sbr.rel (%p530) target = $region88
        $region87: #{transformer_block_forward.2} parent=63 // pred_region
          %533 = dma.done [#allocation12], 6912
        $region88: #{transformer_block_forward.2} parent=63 // pred_fallthru
          _
        // Predicated region
        $region89: #{transformer_block_forward.2} parent=63 // pred_check
          %p534 = pneg %p192
        $region90: #{transformer_block_forward.2} parent=63 // pred_check_branch
          %536 = sbr.rel (%p534) target = $region92
        $region91: #{transformer_block_forward.2} parent=63 // pred_region
          %537 = dma.done [#allocation12], 768
        $region92: #{transformer_block_forward.2} parent=63 // pred_fallthru
          _
        // Predicated region
        $region93: #{transformer_block_forward.2} parent=63 // pred_check
          %p538 = pneg %p213
        $region94: #{transformer_block_forward.2} parent=63 // pred_check_branch
          %540 = sbr.rel (%p538) target = $region96
        $region95: #{transformer_block_forward.2} parent=63 // pred_region
          %541 = dma.done [#allocation15], 128
        $region96: #{transformer_block_forward.2} parent=63 // pred_fallthru
          _
        // Predicated region
        $region97: #{transformer_block_forward.2} parent=63 // pred_check
          %p542 = pneg %p234
        $region98: #{transformer_block_forward.2} parent=63 // pred_check_branch
          %544 = sbr.rel (%p542) target = $region100
        $region99: #{transformer_block_forward.2} parent=63 // pred_region
          %545 = dma.done [#allocation15], 256
        $region100: #{transformer_block_forward.2} parent=63 // pred_fallthru
          _
        // Predicated region
        $region101: #{transformer_block_forward.2} parent=63 // pred_check
          %p546 = pneg %p255
        $region102: #{transformer_block_forward.2} parent=63 // pred_check_branch
          %548 = sbr.rel (%p546) target = $region104
        $region103: #{transformer_block_forward.2} parent=63 // pred_region
          %549 = dma.done [#allocation18], 256
        $region104: #{transformer_block_forward.2} parent=63 // pred_fallthru
          _
        // Predicated region
        $region105: #{transformer_block_forward.2} parent=63 // pred_check
          %p550 = pneg %p276
        $region106: #{transformer_block_forward.2} parent=63 // pred_check_branch
          %552 = sbr.rel (%p550) target = $region108
        $region107: #{transformer_block_forward.2} parent=63 // pred_region
          %553 = dma.done [#allocation18], 256
        $region108: #{transformer_block_forward.2} parent=63 // pred_fallthru
          _
        %s554 = sand.u32 %s43, 1
        %s555 = scalar_lea.sflag [#allocation3], %s554
        %s556 = sand.u32 %s43, 1
        %s557 = smul.addr %s556, 32
        %s558 = scalar_lea.vmem [#allocation2], %s557
        %p559 = pneg %p56
        %p560 = pneg %p53
        %s561 = sand.u32 %s35, 1
        %s562 = scalar_lea.sflag [#allocation6], %s561
        %s563 = sand.u32 %s69, 1
        %s564 = smul.addr %s563, 16
        %s565 = scalar_lea.vmem [#allocation5], %s564
        %p566 = pneg %p82
        %p567 = pneg %p79
        %s568 = sand.u32 %s35, 1
        %s569 = scalar_lea.sflag [#allocation6], %s568
        %s570 = sand.u32 %s95, 1
        %s571 = smul.addr %s570, 16
        %s572 = scalar_lea.vmem [#allocation7], %s571
        %p573 = pneg %p108
        %p574 = pneg %p105
        %p575 = pneg %p129
        %p576 = pneg %p126
        %p577 = pneg %p150
        %p578 = pneg %p147
        %p579 = pneg %p171
        %p580 = pneg %p168
        %p581 = pneg %p192
        %p582 = pneg %p189
        %p583 = pneg %p213
        %p584 = pneg %p210
        %p585 = pneg %p234
        %p586 = pneg %p231
        %p587 = pneg %p255
        %p588 = pneg %p252
        %p589 = pneg %p276
        %p590 = pneg %p273
        %p591 = pneg %p302
        %p592 = pneg %p299
        %s593 = sand.u32 %s289, 1
        %s594 = scalar_lea.sflag [#allocation4], %s593
        %s595 = sand.u32 %s289, 1
        %s596 = smul.addr %s595, 32
        %s597 = scalar_lea.vmem [#allocation20], %s596
        %v599 = vld [vmem:[%s499] sm:$0xff]
        %v600 = vld [vmem:[%s499 + $0x8] sm:$0xff]
        %v601 = vld [vmem:[%s499 + $0x10] sm:$0xff]
        %v602 = vld [vmem:[%s499 + $0x18] sm:$0xff]
        %v603 = vld [vmem:[%s508] sm:$0xff]
        %v604 = vld [vmem:[%s508 + $0x8] sm:$0xff]
        %v605 = vld [vmem:[%s517] sm:$0xff]
        %v606 = vld [vmem:[%s517 + $0x8] sm:$0xff]
        %v607 = vadd.f32 %v599, %v601
        %v608 = vrot.slane %v607, 4
        %v609 = vadd.f32 %v607, %v608
        %v610 = vrot.slane %v609, 2
        %v611 = vadd.f32 %v609, %v610
        %v612 = vrot.slane %v611, 1
        %v613 = vadd.f32 %v611, %v612
        %v614 = vadd.f32 %v600, %v602
        %v615 = vrot.slane %v614, 4
        %v616 = vadd.f32 %v614, %v615
        %v617 = vrot.slane %v616, 2
        %v618 = vadd.f32 %v616, %v617
        %v619 = vrot.slane %v618, 1
        %v620 = vadd.f32 %v618, %v619
        %v621 = vrcp.pop 16.0
        %v622 = vmul.f32 %v613, %v621
        %v623 = vmul.f32 %v620, %v621
        %v624 = vsub.f32 %v599, %v622
        %v625 = vsub.f32 %v600, %v623
        %v626 = vsub.f32 %v601, %v622
        %v627 = vsub.f32 %v602, %v623
        %v628 = vmul.f32 %v624, %v624
        %v629 = vmul.f32 %v625, %v625
        %v630 = vmul.f32 %v626, %v626
        %v631 = vmul.f32 %v627, %v627
        %v632 = vadd.f32 %v628, %v630
        %v633 = vrot.slane %v632, 4
        %v634 = vadd.f32 %v632, %v633
        %v635 = vrot.slane %v634, 2
        %v636 = vadd.f32 %v634, %v635
        %v637 = vrot.slane %v636, 1
        %v638 = vadd.f32 %v636, %v637
        %v639 = vadd.f32 %v629, %v631
        %v640 = vrot.slane %v639, 4
        %v641 = vadd.f32 %v639, %v640
        %v642 = vrot.slane %v641, 2
        %v643 = vadd.f32 %v641, %v642
        %v644 = vrot.slane %v643, 1
        %v645 = vadd.f32 %v643, %v644
        %v646 = vmul.f32 %v638, %v621
        %v647 = vmul.f32 %v645, %v621
        %v648 = vadd.f32 %v646, 1e-05
        %v649 = vadd.f32 %v647, 1e-05
        %v650 = vrsqrt.pop %v648
        %v651 = vrsqrt.pop %v649
        %v652 = vmul.f32 %v624, %v650
        %v653 = vmul.f32 %v625, %v651
        %v654 = vmul.f32 %v626, %v650
        %v655 = vmul.f32 %v627, %v651
        %657 = vset.pattern.permute.xlu0 0
        %658 = vperm.xlu0 %657, %v603
        %v659 = vpop.permute.xlu0 %658
        %662 = vset.pattern.permute.xlu0 0
        %663 = vperm.xlu0 %662, %v604
        %v664 = vpop.permute.xlu0 %663
        %v666 = vmul.f32 %v652, %v659
        %v667 = vmul.f32 %v653, %v659
        %v668 = vmul.f32 %v654, %v664
        %v669 = vmul.f32 %v655, %v664
        %671 = vset.pattern.permute.xlu0 0
        %672 = vperm.xlu0 %671, %v605
        %v673 = vpop.permute.xlu0 %672
        %676 = vset.pattern.permute.xlu0 0
        %677 = vperm.xlu0 %676, %v606
        %v678 = vpop.permute.xlu0 %677
        %v680 = vadd.f32 %v666, %v673
        %v681 = vadd.f32 %v667, %v673
        %v682 = vadd.f32 %v668, %v678
        %v683 = vadd.f32 %v669, %v678
        %v684 = vld [vmem:[#allocation8] sm:$0xf]
        %v685 = vld [vmem:[#allocation8 + $0x4] sm:$0xf]
        %v686 = vld [vmem:[#allocation8 + $0x8] sm:$0xf]
        %v687 = vld [vmem:[#allocation8 + $0xc] sm:$0xf]
        %v688 = vld [vmem:[#allocation8 + $0x10] sm:$0xf]
        %v689 = vld [vmem:[#allocation8 + $0x14] sm:$0xf]
        %v690 = vpack.c.bf16 %v682, %v680
        %v691 = vpack.c.bf16 %v683, %v681
        %v692 = vld [vmem:[#allocation10] sm:$0xff]
        %v693 = vld [vmem:[#allocation10 + $0x8] sm:$0xff]
        %v694 = vld [vmem:[#allocation10 + $0x10] sm:$0xff]
        %v695 = vld [vmem:[#allocation10 + $0x18] sm:$0xff]
        %v696 = vld [vmem:[#allocation10 + $0x20] sm:$0xff]
        %v697 = vld [vmem:[#allocation10 + $0x28] sm:$0xff]
        %699 = vset.pattern.permute.xlu0 0
        %700 = vperm.xlu0 %699, %v692
        %v701 = vpop.permute.xlu0 %700
        %704 = vset.pattern.permute.xlu0 0
        %705 = vperm.xlu0 %704, %v693
        %v706 = vpop.permute.xlu0 %705
        %709 = vset.pattern.permute.xlu0 0
        %710 = vperm.xlu0 %709, %v694
        %v711 = vpop.permute.xlu0 %710
        %714 = vset.pattern.permute.xlu0 0
        %715 = vperm.xlu0 %714, %v695
        %v716 = vpop.permute.xlu0 %715
        %719 = vset.pattern.permute.xlu0 0
        %720 = vperm.xlu0 %719, %v696
        %v721 = vpop.permute.xlu0 %720
        %724 = vset.pattern.permute.xlu0 0
        %725 = vperm.xlu0 %724, %v697
        %v726 = vpop.permute.xlu0 %725
        %v734 = vunpack.c.l.b16 %v684
        %v735 = vunpack.c.l.b16 %v685
        %v736 = vunpack.c.l.b16 %v686
        %v737 = vunpack.c.l.b16 %v687
        %v738 = vunpack.c.l.b16 %v688
        %v739 = vunpack.c.l.b16 %v689
        %v740 = vpack.c.b16 %v735, %v734
        %v741 = vpack.c.b16 %v737, %v736
        %v742 = vpack.c.b16 %v739, %v738
        %vm743 = vcmask 130048
        %v745 = vsel %vm743, %v740, 0
        %v748 = vsel %vm743, %v741, 0
        %v751 = vsel %vm743, %v742, 0
        %753 = vmatprep.subr.bf16.mxu0 %v691
        %754 = vmatpush1.bf16.msra.mxu0 %v690
        %755 = vmatprep.subr.bf16.mxu0 0
        %756 = vmatpush1.bf16.msra.mxu0 0
        %757 = vmatprep.subr.bf16.mxu0 0
        %758 = vmatpush1.bf16.msra.mxu0 0
        %759 = vmatprep.subr.bf16.mxu0 0
        %760 = vmatpush1.bf16.msra.mxu0 0
        %761 = vmatprep.subr.bf16.mxu0 0
        %762 = vmatpush1.bf16.msra.mxu0 0
        %763 = vmatprep.subr.bf16.mxu0 0
        %764 = vmatpush1.bf16.msra.mxu0 0
        %765 = vmatprep.subr.bf16.mxu0 0
        %766 = vmatpush1.bf16.msra.mxu0 0
        %767 = vmatprep.subr.bf16.mxu0 0
        %768 = vmatpush1.bf16.msra.mxu0 0
        %769 = vmatprep.subr.bf16.mxu0 0
        %770 = vmatpush1.bf16.msra.mxu0 0
        %771 = vmatprep.subr.bf16.mxu0 0
        %772 = vmatpush1.bf16.msra.mxu0 0
        %773 = vmatprep.subr.bf16.mxu0 0
        %774 = vmatpush1.bf16.msra.mxu0 0
        %775 = vmatprep.subr.bf16.mxu0 0
        %776 = vmatpush1.bf16.msra.mxu0 0
        %777 = vmatprep.subr.bf16.mxu0 0
        %778 = vmatpush1.bf16.msra.mxu0 0
        %779 = vmatprep.subr.bf16.mxu0 0
        %780 = vmatpush1.bf16.msra.mxu0 0
        %781 = vmatprep.subr.bf16.mxu0 0
        %782 = vmatpush1.bf16.msra.mxu0 0
        %783 = vmatprep.subr.bf16.mxu0 0
        %784 = vmatpush1.bf16.msra.mxu0 0
        %785 = vmatprep.mubr.bf16.mxu0 0
        %786 = vmatmul.mubr.bf16.gmra.mrb[0].mxu0 %v745
        %v787 = vpop.f32.mrb[0].mxu0
        %v788 = vadd.f32 %v701, %v787
        %v789 = vpop.f32.mrb[0].mxu0
        %v790 = vadd.f32 %v701, %v789
        %v791 = vpop.f32.mrb[0].mxu0
        %v792 = vadd.f32 %v706, %v791
        %v793 = vpop.f32.mrb[0].mxu0
        %v794 = vadd.f32 %v706, %v793
        %795 = vmatprep.mubr.bf16.mxu0 0
        %796 = vmatmul.mubr.bf16.gmra.mrb[0].mxu0 %v748
        %v797 = vpop.f32.mrb[0].mxu0
        %v798 = vadd.f32 %v711, %v797
        %v799 = vpop.f32.mrb[0].mxu0
        %v800 = vadd.f32 %v711, %v799
        %v801 = vpop.f32.mrb[0].mxu0
        %v802 = vadd.f32 %v716, %v801
        %v803 = vpop.f32.mrb[0].mxu0
        %v804 = vadd.f32 %v716, %v803
        %805 = vmatprep.mubr.bf16.mxu0 0
        %806 = vmatmul.mubr.bf16.gmra.mrb[0].mxu0 %v751
        %v807 = vpop.f32.mrb[0].mxu0
        %v808 = vadd.f32 %v721, %v807
        %v809 = vpop.f32.mrb[0].mxu0
        %v810 = vadd.f32 %v721, %v809
        %v811 = vpop.f32.mrb[0].mxu0
        %v812 = vadd.f32 %v726, %v811
        %v813 = vpop.f32.mrb[0].mxu0
        %v814 = vadd.f32 %v726, %v813
        %815 = vdwg.mxu0
        %v816 = vlaneseq
        %v817 = vand.u32 %v816, 127
        %v818 = vadd.s32 %v817, 128
        %vm819 = vcmp.lt.s32.totalorder %v817, 0
        %v820 = vsub.s32 0, %v817
        %v821 = vsel %vm819, %v820, %v817
        %v822 = vshrl.u32 %v821, 4
        %v823 = vand.u32 %v821, 15
        %v824 = vsub.s32 0, %v823
        %v825 = vsel %vm819, %v824, %v823
        %vm826 = vcmp.lt.s32.totalorder %v818, 0
        %v827 = vsub.s32 0, %v818
        %v828 = vsel %vm826, %v827, %v818
        %v829 = vshrl.u32 %v828, 4
        %v830 = vand.u32 %v828, 15
        %v831 = vsub.s32 0, %v830
        %v832 = vsel %vm826, %v831, %v830
        %vm833 = vcmp.ne.s32.totalorder %v825, 0
        %vm834 = vcmp.ne.s32.totalorder %v832, 0
        %vm835 = vcmp.lt.s32.totalorder %v825, 0
        %vm836 = vcmp.lt.s32.totalorder %v832, 0
        %vm837 = vmand %vm835, %vm833
        %vm838 = vmand %vm836, %vm834
        %v839 = vadd.s32 %v825, 16
        %v840 = vadd.s32 %v832, 16
        %v841 = vsel %vm837, %v839, %v825
        %v842 = vsel %vm838, %v840, %v832
        %vm843 = vcmp.ge.s32.totalorder %v841, 1
        %vm844 = vcmp.ge.s32.totalorder %v842, 1
        %845 = vrot.lane.b32.xlu0 %v788, 1
        %v846 = vpop.permute.xlu0 %845
        %847 = vrot.lane.b32.xlu0 %v792, 1
        %v848 = vpop.permute.xlu0 %847
        %849 = vrot.lane.b32.xlu0 %v798, 1
        %v850 = vpop.permute.xlu0 %849
        %851 = vrot.lane.b32.xlu0 %v802, 1
        %v852 = vpop.permute.xlu0 %851
        %853 = vrot.lane.b32.xlu0 %v808, 1
        %v854 = vpop.permute.xlu0 %853
        %855 = vrot.lane.b32.xlu0 %v812, 1
        %v856 = vpop.permute.xlu0 %855
        %857 = vrot.lane.b32.xlu0 %v790, 1
        %v858 = vpop.permute.xlu0 %857
        %859 = vrot.lane.b32.xlu0 %v794, 1
        %v860 = vpop.permute.xlu0 %859
        %861 = vrot.lane.b32.xlu0 %v800, 1
        %v862 = vpop.permute.xlu0 %861
        %863 = vrot.lane.b32.xlu0 %v804, 1
        %v864 = vpop.permute.xlu0 %863
        %865 = vrot.lane.b32.xlu0 %v810, 1
        %v866 = vpop.permute.xlu0 %865
        %867 = vrot.lane.b32.xlu0 %v814, 1
        %v868 = vpop.permute.xlu0 %867
        %vm869 = vcmp.lt.s32.totalorder %v817, 1
        %v870 = vsel %vm869, %v846, %v858
        %v871 = vsel %vm869, %v848, %v860
        %v872 = vsel %vm869, %v850, %v862
        %v873 = vsel %vm869, %v852, %v864
        %v874 = vsel %vm869, %v854, %v866
        %v875 = vsel %vm869, %v856, %v868
        %v876 = vsel %vm869, %v858, %v846
        %v877 = vsel %vm869, %v860, %v848
        %v878 = vsel %vm869, %v862, %v850
        %v879 = vsel %vm869, %v864, %v852
        %v880 = vsel %vm869, %v866, %v854
        %v881 = vsel %vm869, %v868, %v856
        %v882 = vsel %vm843, 1, 0
        %v883 = vsel %vm844, 1, 0
        %vm884 = vcmp.eq.s32.totalorder %v882, 1
        %vm885 = vcmp.eq.s32.totalorder %v883, 1
        %v886 = vsel %vm884, %v876, 0.0
        %v887 = vsel %vm885, %v870, 0.0
        %v888 = vsel %vm884, %v877, 0.0
        %v889 = vsel %vm885, %v871, 0.0
        %v890 = vsel %vm884, %v878, 0.0
        %v891 = vsel %vm885, %v872, 0.0
        %v892 = vsel %vm884, %v879, 0.0
        %v893 = vsel %vm885, %v873, 0.0
        %v894 = vsel %vm884, %v880, 0.0
        %v895 = vsel %vm885, %v874, 0.0
        %v896 = vsel %vm884, %v881, 0.0
        %v897 = vsel %vm885, %v875, 0.0
        %vm898 = vcmp.le.s32.totalorder %v841, 14
        %vm899 = vcmp.le.s32.totalorder %v842, 14
        %900 = vrot.lane.b32.xlu0 %v788, 127
        %v901 = vpop.permute.xlu0 %900
        %902 = vrot.lane.b32.xlu0 %v792, 127
        %v903 = vpop.permute.xlu0 %902
        %904 = vrot.lane.b32.xlu0 %v798, 127
        %v905 = vpop.permute.xlu0 %904
        %906 = vrot.lane.b32.xlu0 %v802, 127
        %v907 = vpop.permute.xlu0 %906
        %908 = vrot.lane.b32.xlu0 %v808, 127
        %v909 = vpop.permute.xlu0 %908
        %910 = vrot.lane.b32.xlu0 %v812, 127
        %v911 = vpop.permute.xlu0 %910
        %912 = vrot.lane.b32.xlu0 %v790, 127
        %v913 = vpop.permute.xlu0 %912
        %914 = vrot.lane.b32.xlu0 %v794, 127
        %v915 = vpop.permute.xlu0 %914
        %916 = vrot.lane.b32.xlu0 %v800, 127
        %v917 = vpop.permute.xlu0 %916
        %918 = vrot.lane.b32.xlu0 %v804, 127
        %v919 = vpop.permute.xlu0 %918
        %920 = vrot.lane.b32.xlu0 %v810, 127
        %v921 = vpop.permute.xlu0 %920
        %922 = vrot.lane.b32.xlu0 %v814, 127
        %v923 = vpop.permute.xlu0 %922
        %vm924 = vcmp.lt.s32.totalorder %v817, 127
        %v925 = vsel %vm924, %v901, %v913
        %v926 = vsel %vm924, %v903, %v915
        %v927 = vsel %vm924, %v905, %v917
        %v928 = vsel %vm924, %v907, %v919
        %v929 = vsel %vm924, %v909, %v921
        %v930 = vsel %vm924, %v911, %v923
        %v931 = vsel %vm924, %v913, %v901
        %v932 = vsel %vm924, %v915, %v903
        %v933 = vsel %vm924, %v917, %v905
        %v934 = vsel %vm924, %v919, %v907
        %v935 = vsel %vm924, %v921, %v909
        %v936 = vsel %vm924, %v923, %v911
        %v937 = vsel %vm898, 1, 0
        %v938 = vsel %vm899, 1, 0
        %vm939 = vcmp.eq.s32.totalorder %v937, 1
        %vm940 = vcmp.eq.s32.totalorder %v938, 1
        %v941 = vsel %vm939, %v925, 0.0
        %v942 = vsel %vm940, %v931, 0.0
        %v943 = vsel %vm939, %v926, 0.0
        %v944 = vsel %vm940, %v932, 0.0
        %v945 = vsel %vm939, %v927, 0.0
        %v946 = vsel %vm940, %v933, 0.0
        %v947 = vsel %vm939, %v928, 0.0
        %v948 = vsel %vm940, %v934, 0.0
        %v949 = vsel %vm939, %v929, 0.0
        %v950 = vsel %vm940, %v935, 0.0
        %v951 = vsel %vm939, %v930, 0.0
        %v952 = vsel %vm940, %v936, 0.0
        %v953 = vld [vmem:[#allocation11] sm:$0xff]
        %v954 = vld [vmem:[#allocation11 + $0x8] sm:$0xff]
        %v955 = vld [vmem:[#allocation11 + $0x10] sm:$0xff]
        %v956 = vld [vmem:[#allocation11 + $0x18] sm:$0xff]
        %v957 = vld [vmem:[#allocation11 + $0x20] sm:$0xff]
        %v958 = vld [vmem:[#allocation11 + $0x28] sm:$0xff]
        %v959 = vld [vmem:[#allocation11 + $0x30] sm:$0xff]
        %v960 = vld [vmem:[#allocation11 + $0x38] sm:$0xff]
        %v961 = vld [vmem:[#allocation11 + $0x40] sm:$0xff]
        %v962 = vld [vmem:[#allocation11 + $0x48] sm:$0xff]
        %v963 = vld [vmem:[#allocation11 + $0x50] sm:$0xff]
        %v964 = vld [vmem:[#allocation11 + $0x58] sm:$0xff]
        %v965 = vld [vmem:[#allocation11 + $0x60] sm:$0xff]
        %v966 = vld [vmem:[#allocation11 + $0x68] sm:$0xff]
        %v967 = vld [vmem:[#allocation11 + $0x70] sm:$0xff]
        %v968 = vld [vmem:[#allocation11 + $0x78] sm:$0xff]
        %v969 = vld [vmem:[#allocation11 + $0x80] sm:$0xff]
        %v970 = vld [vmem:[#allocation11 + $0x88] sm:$0xff]
        %v971 = vld [vmem:[#allocation11 + $0x90] sm:$0xff]
        %v972 = vld [vmem:[#allocation11 + $0x98] sm:$0xff]
        %v973 = vld [vmem:[#allocation11 + $0xa0] sm:$0xff]
        %v974 = vld [vmem:[#allocation11 + $0xa8] sm:$0xff]
        %v975 = vld [vmem:[#allocation11 + $0xb0] sm:$0xff]
        %v976 = vld [vmem:[#allocation11 + $0xb8] sm:$0xff]
        %v977 = vld [vmem:[#allocation11 + $0xc0] sm:$0xff]
        %v978 = vld [vmem:[#allocation11 + $0xc8] sm:$0xff]
        %v979 = vld [vmem:[#allocation11 + $0xd0] sm:$0xff]
        %v980 = vld [vmem:[#allocation11 + $0xd8] sm:$0xff]
        %v981 = vld [vmem:[#allocation11 + $0xe0] sm:$0xff]
        %v982 = vld [vmem:[#allocation11 + $0xe8] sm:$0xff]
        %v983 = vld [vmem:[#allocation11 + $0xf0] sm:$0xff]
        %v984 = vld [vmem:[#allocation11 + $0xf8] sm:$0xff]
        %v985 = vld [vmem:[#allocation11 + $0x100] sm:$0xff]
        %v986 = vld [vmem:[#allocation11 + $0x108] sm:$0xff]
        %v987 = vld [vmem:[#allocation11 + $0x110] sm:$0xff]
        %v988 = vld [vmem:[#allocation11 + $0x118] sm:$0xff]
        %v989 = vld [vmem:[#allocation11 + $0x120] sm:$0xff]
        %v990 = vld [vmem:[#allocation11 + $0x128] sm:$0xff]
        %v991 = vld [vmem:[#allocation11 + $0x130] sm:$0xff]
        %v992 = vld [vmem:[#allocation11 + $0x138] sm:$0xff]
        %v993 = vld [vmem:[#allocation11 + $0x140] sm:$0xff]
        %v994 = vld [vmem:[#allocation11 + $0x148] sm:$0xff]
        %v995 = vld [vmem:[#allocation11 + $0x150] sm:$0xff]
        %v996 = vld [vmem:[#allocation11 + $0x158] sm:$0xff]
        %v997 = vld [vmem:[#allocation11 + $0x160] sm:$0xff]
        %v998 = vld [vmem:[#allocation11 + $0x168] sm:$0xff]
        %v999 = vld [vmem:[#allocation11 + $0x170] sm:$0xff]
        %v1000 = vld [vmem:[#allocation11 + $0x178] sm:$0xff]
        %v1001 = vld [vmem:[#allocation11 + $0x180] sm:$0xff]
        %v1002 = vld [vmem:[#allocation11 + $0x188] sm:$0xff]
        %v1003 = vld [vmem:[#allocation11 + $0x190] sm:$0xff]
        %v1004 = vld [vmem:[#allocation11 + $0x198] sm:$0xff]
        %v1005 = vld [vmem:[#allocation11 + $0x1a0] sm:$0xff]
        %v1006 = vld [vmem:[#allocation11 + $0x1a8] sm:$0xff]
        %1008 = vset.pattern.permute.xlu0 0
        %1009 = vperm.xlu0 %1008, %v953
        %v1010 = vpop.permute.xlu0 %1009
        %1013 = vset.pattern.permute.xlu0 0
        %1014 = vperm.xlu0 %1013, %v954
        %v1015 = vpop.permute.xlu0 %1014
        %1018 = vset.pattern.permute.xlu0 0
        %1019 = vperm.xlu0 %1018, %v955
        %v1020 = vpop.permute.xlu0 %1019
        %1023 = vset.pattern.permute.xlu0 0
        %1024 = vperm.xlu0 %1023, %v956
        %v1025 = vpop.permute.xlu0 %1024
        %1028 = vset.pattern.permute.xlu0 0
        %1029 = vperm.xlu0 %1028, %v957
        %v1030 = vpop.permute.xlu0 %1029
        %1033 = vset.pattern.permute.xlu0 0
        %1034 = vperm.xlu0 %1033, %v958
        %v1035 = vpop.permute.xlu0 %1034
        %v1037 = vmul.f32 %v886, %v1010
        %v1038 = vmul.f32 %v887, %v1010
        %v1039 = vmul.f32 %v888, %v1015
        %v1040 = vmul.f32 %v889, %v1015
        %v1041 = vmul.f32 %v890, %v1020
        %v1042 = vmul.f32 %v891, %v1020
        %v1043 = vmul.f32 %v892, %v1025
        %v1044 = vmul.f32 %v893, %v1025
        %v1045 = vmul.f32 %v894, %v1030
        %v1046 = vmul.f32 %v895, %v1030
        %v1047 = vmul.f32 %v896, %v1035
        %v1048 = vmul.f32 %v897, %v1035
        %1050 = vset.pattern.permute.xlu0 0
        %1051 = vperm.xlu0 %1050, %v959
        %v1052 = vpop.permute.xlu0 %1051
        %1055 = vset.pattern.permute.xlu0 0
        %1056 = vperm.xlu0 %1055, %v960
        %v1057 = vpop.permute.xlu0 %1056
        %1060 = vset.pattern.permute.xlu0 0
        %1061 = vperm.xlu0 %1060, %v961
        %v1062 = vpop.permute.xlu0 %1061
        %1065 = vset.pattern.permute.xlu0 0
        %1066 = vperm.xlu0 %1065, %v962
        %v1067 = vpop.permute.xlu0 %1066
        %1070 = vset.pattern.permute.xlu0 0
        %1071 = vperm.xlu0 %1070, %v963
        %v1072 = vpop.permute.xlu0 %1071
        %1075 = vset.pattern.permute.xlu0 0
        %1076 = vperm.xlu0 %1075, %v964
        %v1077 = vpop.permute.xlu0 %1076
        %v1079 = vmul.f32 %v788, %v1052
        %v1080 = vmul.f32 %v790, %v1052
        %v1081 = vmul.f32 %v792, %v1057
        %v1082 = vmul.f32 %v794, %v1057
        %v1083 = vmul.f32 %v798, %v1062
        %v1084 = vmul.f32 %v800, %v1062
        %v1085 = vmul.f32 %v802, %v1067
        %v1086 = vmul.f32 %v804, %v1067
        %v1087 = vmul.f32 %v808, %v1072
        %v1088 = vmul.f32 %v810, %v1072
        %v1089 = vmul.f32 %v812, %v1077
        %v1090 = vmul.f32 %v814, %v1077
        %v1091 = vadd.f32 %v1037, %v1079
        %v1092 = vadd.f32 %v1038, %v1080
        %v1093 = vadd.f32 %v1039, %v1081
        %v1094 = vadd.f32 %v1040, %v1082
        %v1095 = vadd.f32 %v1041, %v1083
        %v1096 = vadd.f32 %v1042, %v1084
        %v1097 = vadd.f32 %v1043, %v1085
        %v1098 = vadd.f32 %v1044, %v1086
        %v1099 = vadd.f32 %v1045, %v1087
        %v1100 = vadd.f32 %v1046, %v1088
        %v1101 = vadd.f32 %v1047, %v1089
        %v1102 = vadd.f32 %v1048, %v1090
        %1104 = vset.pattern.permute.xlu0 0
        %1105 = vperm.xlu0 %1104, %v965
        %v1106 = vpop.permute.xlu0 %1105
        %1109 = vset.pattern.permute.xlu0 0
        %1110 = vperm.xlu0 %1109, %v966
        %v1111 = vpop.permute.xlu0 %1110
        %1114 = vset.pattern.permute.xlu0 0
        %1115 = vperm.xlu0 %1114, %v967
        %v1116 = vpop.permute.xlu0 %1115
        %1119 = vset.pattern.permute.xlu0 0
        %1120 = vperm.xlu0 %1119, %v968
        %v1121 = vpop.permute.xlu0 %1120
        %1124 = vset.pattern.permute.xlu0 0
        %1125 = vperm.xlu0 %1124, %v969
        %v1126 = vpop.permute.xlu0 %1125
        %1129 = vset.pattern.permute.xlu0 0
        %1130 = vperm.xlu0 %1129, %v970
        %v1131 = vpop.permute.xlu0 %1130
        %v1133 = vmul.f32 %v941, %v1106
        %v1134 = vmul.f32 %v942, %v1106
        %v1135 = vmul.f32 %v943, %v1111
        %v1136 = vmul.f32 %v944, %v1111
        %v1137 = vmul.f32 %v945, %v1116
        %v1138 = vmul.f32 %v946, %v1116
        %v1139 = vmul.f32 %v947, %v1121
        %v1140 = vmul.f32 %v948, %v1121
        %v1141 = vmul.f32 %v949, %v1126
        %v1142 = vmul.f32 %v950, %v1126
        %v1143 = vmul.f32 %v951, %v1131
        %v1144 = vmul.f32 %v952, %v1131
        %v1145 = vadd.f32 %v1091, %v1133
        %v1146 = vadd.f32 %v1092, %v1134
        %v1147 = vadd.f32 %v1093, %v1135
        %v1148 = vadd.f32 %v1094, %v1136
        %v1149 = vadd.f32 %v1095, %v1137
        %v1150 = vadd.f32 %v1096, %v1138
        %v1151 = vadd.f32 %v1097, %v1139
        %v1152 = vadd.f32 %v1098, %v1140
        %v1153 = vadd.f32 %v1099, %v1141
        %v1154 = vadd.f32 %v1100, %v1142
        %v1155 = vadd.f32 %v1101, %v1143
        %v1156 = vadd.f32 %v1102, %v1144
        %1158 = vset.pattern.permute.xlu0 0
        %1159 = vperm.xlu0 %1158, %v971
        %v1160 = vpop.permute.xlu0 %1159
        %1163 = vset.pattern.permute.xlu0 0
        %1164 = vperm.xlu0 %1163, %v972
        %v1165 = vpop.permute.xlu0 %1164
        %1168 = vset.pattern.permute.xlu0 0
        %1169 = vperm.xlu0 %1168, %v973
        %v1170 = vpop.permute.xlu0 %1169
        %1173 = vset.pattern.permute.xlu0 0
        %1174 = vperm.xlu0 %1173, %v974
        %v1175 = vpop.permute.xlu0 %1174
        %1178 = vset.pattern.permute.xlu0 0
        %1179 = vperm.xlu0 %1178, %v975
        %v1180 = vpop.permute.xlu0 %1179
        %1183 = vset.pattern.permute.xlu0 0
        %1184 = vperm.xlu0 %1183, %v976
        %v1185 = vpop.permute.xlu0 %1184
        %v1187 = vmul.f32 %v886, %v1160
        %v1188 = vmul.f32 %v887, %v1160
        %v1189 = vmul.f32 %v888, %v1165
        %v1190 = vmul.f32 %v889, %v1165
        %v1191 = vmul.f32 %v890, %v1170
        %v1192 = vmul.f32 %v891, %v1170
        %v1193 = vmul.f32 %v892, %v1175
        %v1194 = vmul.f32 %v893, %v1175
        %v1195 = vmul.f32 %v894, %v1180
        %v1196 = vmul.f32 %v895, %v1180
        %v1197 = vmul.f32 %v896, %v1185
        %v1198 = vmul.f32 %v897, %v1185
        %1200 = vset.pattern.permute.xlu0 0
        %1201 = vperm.xlu0 %1200, %v977
        %v1202 = vpop.permute.xlu0 %1201
        %1205 = vset.pattern.permute.xlu0 0
        %1206 = vperm.xlu0 %1205, %v978
        %v1207 = vpop.permute.xlu0 %1206
        %1210 = vset.pattern.permute.xlu0 0
        %1211 = vperm.xlu0 %1210, %v979
        %v1212 = vpop.permute.xlu0 %1211
        %1215 = vset.pattern.permute.xlu0 0
        %1216 = vperm.xlu0 %1215, %v980
        %v1217 = vpop.permute.xlu0 %1216
        %1220 = vset.pattern.permute.xlu0 0
        %1221 = vperm.xlu0 %1220, %v981
        %v1222 = vpop.permute.xlu0 %1221
        %1225 = vset.pattern.permute.xlu0 0
        %1226 = vperm.xlu0 %1225, %v982
        %v1227 = vpop.permute.xlu0 %1226
        %v1229 = vmul.f32 %v788, %v1202
        %v1230 = vmul.f32 %v790, %v1202
        %v1231 = vmul.f32 %v792, %v1207
        %v1232 = vmul.f32 %v794, %v1207
        %v1233 = vmul.f32 %v798, %v1212
        %v1234 = vmul.f32 %v800, %v1212
        %v1235 = vmul.f32 %v802, %v1217
        %v1236 = vmul.f32 %v804, %v1217
        %v1237 = vmul.f32 %v808, %v1222
        %v1238 = vmul.f32 %v810, %v1222
        %v1239 = vmul.f32 %v812, %v1227
        %v1240 = vmul.f32 %v814, %v1227
        %v1241 = vadd.f32 %v1187, %v1229
        %v1242 = vadd.f32 %v1188, %v1230
        %v1243 = vadd.f32 %v1189, %v1231
        %v1244 = vadd.f32 %v1190, %v1232
        %v1245 = vadd.f32 %v1191, %v1233
        %v1246 = vadd.f32 %v1192, %v1234
        %v1247 = vadd.f32 %v1193, %v1235
        %v1248 = vadd.f32 %v1194, %v1236
        %v1249 = vadd.f32 %v1195, %v1237
        %v1250 = vadd.f32 %v1196, %v1238
        %v1251 = vadd.f32 %v1197, %v1239
        %v1252 = vadd.f32 %v1198, %v1240
        %1254 = vset.pattern.permute.xlu0 0
        %1255 = vperm.xlu0 %1254, %v983
        %v1256 = vpop.permute.xlu0 %1255
        %1259 = vset.pattern.permute.xlu0 0
        %1260 = vperm.xlu0 %1259, %v984
        %v1261 = vpop.permute.xlu0 %1260
        %1264 = vset.pattern.permute.xlu0 0
        %1265 = vperm.xlu0 %1264, %v985
        %v1266 = vpop.permute.xlu0 %1265
        %1269 = vset.pattern.permute.xlu0 0
        %1270 = vperm.xlu0 %1269, %v986
        %v1271 = vpop.permute.xlu0 %1270
        %1274 = vset.pattern.permute.xlu0 0
        %1275 = vperm.xlu0 %1274, %v987
        %v1276 = vpop.permute.xlu0 %1275
        %1279 = vset.pattern.permute.xlu0 0
        %1280 = vperm.xlu0 %1279, %v988
        %v1281 = vpop.permute.xlu0 %1280
        %v1283 = vmul.f32 %v941, %v1256
        %v1284 = vmul.f32 %v942, %v1256
        %v1285 = vmul.f32 %v943, %v1261
        %v1286 = vmul.f32 %v944, %v1261
        %v1287 = vmul.f32 %v945, %v1266
        %v1288 = vmul.f32 %v946, %v1266
        %v1289 = vmul.f32 %v947, %v1271
        %v1290 = vmul.f32 %v948, %v1271
        %v1291 = vmul.f32 %v949, %v1276
        %v1292 = vmul.f32 %v950, %v1276
        %v1293 = vmul.f32 %v951, %v1281
        %v1294 = vmul.f32 %v952, %v1281
        %v1295 = vadd.f32 %v1241, %v1283
        %v1296 = vadd.f32 %v1242, %v1284
        %v1297 = vadd.f32 %v1243, %v1285
        %v1298 = vadd.f32 %v1244, %v1286
        %v1299 = vadd.f32 %v1245, %v1287
        %v1300 = vadd.f32 %v1246, %v1288
        %v1301 = vadd.f32 %v1247, %v1289
        %v1302 = vadd.f32 %v1248, %v1290
        %v1303 = vadd.f32 %v1249, %v1291
        %v1304 = vadd.f32 %v1250, %v1292
        %v1305 = vadd.f32 %v1251, %v1293
        %v1306 = vadd.f32 %v1252, %v1294
        %1308 = vset.pattern.permute.xlu0 0
        %1309 = vperm.xlu0 %1308, %v989
        %v1310 = vpop.permute.xlu0 %1309
        %1313 = vset.pattern.permute.xlu0 0
        %1314 = vperm.xlu0 %1313, %v990
        %v1315 = vpop.permute.xlu0 %1314
        %1318 = vset.pattern.permute.xlu0 0
        %1319 = vperm.xlu0 %1318, %v991
        %v1320 = vpop.permute.xlu0 %1319
        %1323 = vset.pattern.permute.xlu0 0
        %1324 = vperm.xlu0 %1323, %v992
        %v1325 = vpop.permute.xlu0 %1324
        %1328 = vset.pattern.permute.xlu0 0
        %1329 = vperm.xlu0 %1328, %v993
        %v1330 = vpop.permute.xlu0 %1329
        %1333 = vset.pattern.permute.xlu0 0
        %1334 = vperm.xlu0 %1333, %v994
        %v1335 = vpop.permute.xlu0 %1334
        %v1337 = vmul.f32 %v886, %v1310
        %v1338 = vmul.f32 %v887, %v1310
        %v1339 = vmul.f32 %v888, %v1315
        %v1340 = vmul.f32 %v889, %v1315
        %v1341 = vmul.f32 %v890, %v1320
        %v1342 = vmul.f32 %v891, %v1320
        %v1343 = vmul.f32 %v892, %v1325
        %v1344 = vmul.f32 %v893, %v1325
        %v1345 = vmul.f32 %v894, %v1330
        %v1346 = vmul.f32 %v895, %v1330
        %v1347 = vmul.f32 %v896, %v1335
        %v1348 = vmul.f32 %v897, %v1335
        %1350 = vset.pattern.permute.xlu0 0
        %1351 = vperm.xlu0 %1350, %v995
        %v1352 = vpop.permute.xlu0 %1351
        %1355 = vset.pattern.permute.xlu0 0
        %1356 = vperm.xlu0 %1355, %v996
        %v1357 = vpop.permute.xlu0 %1356
        %1360 = vset.pattern.permute.xlu0 0
        %1361 = vperm.xlu0 %1360, %v997
        %v1362 = vpop.permute.xlu0 %1361
        %1365 = vset.pattern.permute.xlu0 0
        %1366 = vperm.xlu0 %1365, %v998
        %v1367 = vpop.permute.xlu0 %1366
        %1370 = vset.pattern.permute.xlu0 0
        %1371 = vperm.xlu0 %1370, %v999
        %v1372 = vpop.permute.xlu0 %1371
        %1375 = vset.pattern.permute.xlu0 0
        %1376 = vperm.xlu0 %1375, %v1000
        %v1377 = vpop.permute.xlu0 %1376
        %v1379 = vmul.f32 %v788, %v1352
        %v1380 = vmul.f32 %v790, %v1352
        %v1381 = vmul.f32 %v792, %v1357
        %v1382 = vmul.f32 %v794, %v1357
        %v1383 = vmul.f32 %v798, %v1362
        %v1384 = vmul.f32 %v800, %v1362
        %v1385 = vmul.f32 %v802, %v1367
        %v1386 = vmul.f32 %v804, %v1367
        %v1387 = vmul.f32 %v808, %v1372
        %v1388 = vmul.f32 %v810, %v1372
        %v1389 = vmul.f32 %v812, %v1377
        %v1390 = vmul.f32 %v814, %v1377
        %v1391 = vadd.f32 %v1337, %v1379
        %v1392 = vadd.f32 %v1338, %v1380
        %v1393 = vadd.f32 %v1339, %v1381
        %v1394 = vadd.f32 %v1340, %v1382
        %v1395 = vadd.f32 %v1341, %v1383
        %v1396 = vadd.f32 %v1342, %v1384
        %v1397 = vadd.f32 %v1343, %v1385
        %v1398 = vadd.f32 %v1344, %v1386
        %v1399 = vadd.f32 %v1345, %v1387
        %v1400 = vadd.f32 %v1346, %v1388
        %v1401 = vadd.f32 %v1347, %v1389
        %v1402 = vadd.f32 %v1348, %v1390
        %1404 = vset.pattern.permute.xlu0 0
        %1405 = vperm.xlu0 %1404, %v1001
        %v1406 = vpop.permute.xlu0 %1405
        %1409 = vset.pattern.permute.xlu0 0
        %1410 = vperm.xlu0 %1409, %v1002
        %v1411 = vpop.permute.xlu0 %1410
        %1414 = vset.pattern.permute.xlu0 0
        %1415 = vperm.xlu0 %1414, %v1003
        %v1416 = vpop.permute.xlu0 %1415
        %1419 = vset.pattern.permute.xlu0 0
        %1420 = vperm.xlu0 %1419, %v1004
        %v1421 = vpop.permute.xlu0 %1420
        %1424 = vset.pattern.permute.xlu0 0
        %1425 = vperm.xlu0 %1424, %v1005
        %v1426 = vpop.permute.xlu0 %1425
        %1429 = vset.pattern.permute.xlu0 0
        %1430 = vperm.xlu0 %1429, %v1006
        %v1431 = vpop.permute.xlu0 %1430
        %v1433 = vmul.f32 %v941, %v1406
        %v1434 = vmul.f32 %v942, %v1406
        %v1435 = vmul.f32 %v943, %v1411
        %v1436 = vmul.f32 %v944, %v1411
        %v1437 = vmul.f32 %v945, %v1416
        %v1438 = vmul.f32 %v946, %v1416
        %v1439 = vmul.f32 %v947, %v1421
        %v1440 = vmul.f32 %v948, %v1421
        %v1441 = vmul.f32 %v949, %v1426
        %v1442 = vmul.f32 %v950, %v1426
        %v1443 = vmul.f32 %v951, %v1431
        %v1444 = vmul.f32 %v952, %v1431
        %v1445 = vadd.f32 %v1391, %v1433
        %v1446 = vadd.f32 %v1392, %v1434
        %v1447 = vadd.f32 %v1393, %v1435
        %v1448 = vadd.f32 %v1394, %v1436
        %v1449 = vadd.f32 %v1395, %v1437
        %v1450 = vadd.f32 %v1396, %v1438
        %v1451 = vadd.f32 %v1397, %v1439
        %v1452 = vadd.f32 %v1398, %v1440
        %v1453 = vadd.f32 %v1399, %v1441
        %v1454 = vadd.f32 %v1400, %v1442
        %v1455 = vadd.f32 %v1401, %v1443
        %v1456 = vadd.f32 %v1402, %v1444
        %vm1457 = vcmp.ge.s32.totalorder %v817, 16
        %vm1458 = vcmp.ge.s32.totalorder %v818, 16
        %1459 = vrot.lane.b32.xlu0 %v1145, 16
        %v1460 = vpop.permute.xlu0 %1459
        %1461 = vrot.lane.b32.xlu0 %v1147, 16
        %v1462 = vpop.permute.xlu0 %1461
        %1463 = vrot.lane.b32.xlu0 %v1149, 16
        %v1464 = vpop.permute.xlu0 %1463
        %1465 = vrot.lane.b32.xlu0 %v1151, 16
        %v1466 = vpop.permute.xlu0 %1465
        %1467 = vrot.lane.b32.xlu0 %v1153, 16
        %v1468 = vpop.permute.xlu0 %1467
        %1469 = vrot.lane.b32.xlu0 %v1155, 16
        %v1470 = vpop.permute.xlu0 %1469
        %1471 = vrot.lane.b32.xlu0 %v1146, 16
        %v1472 = vpop.permute.xlu0 %1471
        %1473 = vrot.lane.b32.xlu0 %v1148, 16
        %v1474 = vpop.permute.xlu0 %1473
        %1475 = vrot.lane.b32.xlu0 %v1150, 16
        %v1476 = vpop.permute.xlu0 %1475
        %1477 = vrot.lane.b32.xlu0 %v1152, 16
        %v1478 = vpop.permute.xlu0 %1477
        %1479 = vrot.lane.b32.xlu0 %v1154, 16
        %v1480 = vpop.permute.xlu0 %1479
        %1481 = vrot.lane.b32.xlu0 %v1156, 16
        %v1482 = vpop.permute.xlu0 %1481
        %vm1483 = vcmp.lt.s32.totalorder %v817, 16
        %v1484 = vsel %vm1483, %v1460, %v1472
        %v1485 = vsel %vm1483, %v1462, %v1474
        %v1486 = vsel %vm1483, %v1464, %v1476
        %v1487 = vsel %vm1483, %v1466, %v1478
        %v1488 = vsel %vm1483, %v1468, %v1480
        %v1489 = vsel %vm1483, %v1470, %v1482
        %v1490 = vsel %vm1483, %v1472, %v1460
        %v1491 = vsel %vm1483, %v1474, %v1462
        %v1492 = vsel %vm1483, %v1476, %v1464
        %v1493 = vsel %vm1483, %v1478, %v1466
        %v1494 = vsel %vm1483, %v1480, %v1468
        %v1495 = vsel %vm1483, %v1482, %v1470
        %v1496 = vsel %vm1457, 1, 0
        %v1497 = vsel %vm1458, 1, 0
        %vm1498 = vcmp.eq.s32.totalorder %v1496, 1
        %vm1499 = vcmp.eq.s32.totalorder %v1497, 1
        %v1500 = vsel %vm1498, %v1490, 0.0
        %v1501 = vsel %vm1499, %v1484, 0.0
        %v1502 = vsel %vm1498, %v1491, 0.0
        %v1503 = vsel %vm1499, %v1485, 0.0
        %v1504 = vsel %vm1498, %v1492, 0.0
        %v1505 = vsel %vm1499, %v1486, 0.0
        %v1506 = vsel %vm1498, %v1493, 0.0
        %v1507 = vsel %vm1499, %v1487, 0.0
        %v1508 = vsel %vm1498, %v1494, 0.0
        %v1509 = vsel %vm1499, %v1488, 0.0
        %v1510 = vsel %vm1498, %v1495, 0.0
        %v1511 = vsel %vm1499, %v1489, 0.0
        %vm1512 = vcmp.lt.s32.totalorder %v817, 240
        %vm1513 = vcmp.lt.s32.totalorder %v818, 240
        %1514 = vrot.lane.b32.xlu0 %v1445, 112
        %v1515 = vpop.permute.xlu0 %1514
        %1516 = vrot.lane.b32.xlu0 %v1447, 112
        %v1517 = vpop.permute.xlu0 %1516
        %1518 = vrot.lane.b32.xlu0 %v1449, 112
        %v1519 = vpop.permute.xlu0 %1518
        %1520 = vrot.lane.b32.xlu0 %v1451, 112
        %v1521 = vpop.permute.xlu0 %1520
        %1522 = vrot.lane.b32.xlu0 %v1453, 112
        %v1523 = vpop.permute.xlu0 %1522
        %1524 = vrot.lane.b32.xlu0 %v1455, 112
        %v1525 = vpop.permute.xlu0 %1524
        %1526 = vrot.lane.b32.xlu0 %v1446, 112
        %v1527 = vpop.permute.xlu0 %1526
        %1528 = vrot.lane.b32.xlu0 %v1448, 112
        %v1529 = vpop.permute.xlu0 %1528
        %1530 = vrot.lane.b32.xlu0 %v1450, 112
        %v1531 = vpop.permute.xlu0 %1530
        %1532 = vrot.lane.b32.xlu0 %v1452, 112
        %v1533 = vpop.permute.xlu0 %1532
        %1534 = vrot.lane.b32.xlu0 %v1454, 112
        %v1535 = vpop.permute.xlu0 %1534
        %1536 = vrot.lane.b32.xlu0 %v1456, 112
        %v1537 = vpop.permute.xlu0 %1536
        %vm1538 = vcmp.lt.s32.totalorder %v817, 112
        %v1539 = vsel %vm1538, %v1515, %v1527
        %v1540 = vsel %vm1538, %v1517, %v1529
        %v1541 = vsel %vm1538, %v1519, %v1531
        %v1542 = vsel %vm1538, %v1521, %v1533
        %v1543 = vsel %vm1538, %v1523, %v1535
        %v1544 = vsel %vm1538, %v1525, %v1537
        %v1545 = vsel %vm1538, %v1527, %v1515
        %v1546 = vsel %vm1538, %v1529, %v1517
        %v1547 = vsel %vm1538, %v1531, %v1519
        %v1548 = vsel %vm1538, %v1533, %v1521
        %v1549 = vsel %vm1538, %v1535, %v1523
        %v1550 = vsel %vm1538, %v1537, %v1525
        %v1551 = vsel %vm1512, 1, 0
        %v1552 = vsel %vm1513, 1, 0
        %vm1553 = vcmp.eq.s32.totalorder %v1551, 1
        %vm1554 = vcmp.eq.s32.totalorder %v1552, 1
        %v1555 = vsel %vm1553, %v1539, 0.0
        %v1556 = vsel %vm1554, %v1545, 0.0
        %v1557 = vsel %vm1553, %v1540, 0.0
        %v1558 = vsel %vm1554, %v1546, 0.0
        %v1559 = vsel %vm1553, %v1541, 0.0
        %v1560 = vsel %vm1554, %v1547, 0.0
        %v1561 = vsel %vm1553, %v1542, 0.0
        %v1562 = vsel %vm1554, %v1548, 0.0
        %v1563 = vsel %vm1553, %v1543, 0.0
        %v1564 = vsel %vm1554, %v1549, 0.0
        %v1565 = vsel %vm1553, %v1544, 0.0
        %v1566 = vsel %vm1554, %v1550, 0.0
        %v1567 = vadd.f32 %v1295, %v1500
        %v1568 = vadd.f32 %v1296, %v1501
        %v1569 = vadd.f32 %v1297, %v1502
        %v1570 = vadd.f32 %v1298, %v1503
        %v1571 = vadd.f32 %v1299, %v1504
        %v1572 = vadd.f32 %v1300, %v1505
        %v1573 = vadd.f32 %v1301, %v1506
        %v1574 = vadd.f32 %v1302, %v1507
        %v1575 = vadd.f32 %v1303, %v1508
        %v1576 = vadd.f32 %v1304, %v1509
        %v1577 = vadd.f32 %v1305, %v1510
        %v1578 = vadd.f32 %v1306, %v1511
        %v1579 = vadd.f32 %v1567, %v1555
        %v1580 = vadd.f32 %v1568, %v1556
        %v1581 = vadd.f32 %v1569, %v1557
        %v1582 = vadd.f32 %v1570, %v1558
        %v1583 = vadd.f32 %v1571, %v1559
        %v1584 = vadd.f32 %v1572, %v1560
        %v1585 = vadd.f32 %v1573, %v1561
        %v1586 = vadd.f32 %v1574, %v1562
        %v1587 = vadd.f32 %v1575, %v1563
        %v1588 = vadd.f32 %v1576, %v1564
        %v1589 = vadd.f32 %v1577, %v1565
        %v1590 = vadd.f32 %v1578, %v1566
        %v1591 = vld [vmem:[#allocation13] sm:$0xff]
        %v1592 = vld [vmem:[#allocation13 + $0x8] sm:$0xff]
        %v1593 = vld [vmem:[#allocation13 + $0x10] sm:$0xff]
        %v1594 = vld [vmem:[#allocation13 + $0x18] sm:$0xff]
        %v1595 = vld [vmem:[#allocation13 + $0x20] sm:$0xff]
        %v1596 = vld [vmem:[#allocation13 + $0x28] sm:$0xff]
        %1598 = vset.pattern.permute.xlu0 0
        %1599 = vperm.xlu0 %1598, %v1591
        %v1600 = vpop.permute.xlu0 %1599
        %1603 = vset.pattern.permute.xlu0 0
        %1604 = vperm.xlu0 %1603, %v1592
        %v1605 = vpop.permute.xlu0 %1604
        %1608 = vset.pattern.permute.xlu0 0
        %1609 = vperm.xlu0 %1608, %v1593
        %v1610 = vpop.permute.xlu0 %1609
        %1613 = vset.pattern.permute.xlu0 0
        %1614 = vperm.xlu0 %1613, %v1594
        %v1615 = vpop.permute.xlu0 %1614
        %1618 = vset.pattern.permute.xlu0 0
        %1619 = vperm.xlu0 %1618, %v1595
        %v1620 = vpop.permute.xlu0 %1619
        %1623 = vset.pattern.permute.xlu0 0
        %1624 = vperm.xlu0 %1623, %v1596
        %v1625 = vpop.permute.xlu0 %1624
        %v1627 = vadd.f32 %v1579, %v1600
        %v1628 = vadd.f32 %v1580, %v1600
        %v1629 = vadd.f32 %v1581, %v1605
        %v1630 = vadd.f32 %v1582, %v1605
        %v1631 = vadd.f32 %v1583, %v1610
        %v1632 = vadd.f32 %v1584, %v1610
        %v1633 = vadd.f32 %v1585, %v1615
        %v1634 = vadd.f32 %v1586, %v1615
        %v1635 = vadd.f32 %v1587, %v1620
        %v1636 = vadd.f32 %v1588, %v1620
        %v1637 = vadd.f32 %v1589, %v1625
        %v1638 = vadd.f32 %v1590, %v1625
        %v1639 = vmul.f32 %v1627, %v1627
        %v1640 = vmul.f32 %v1628, %v1628
        %v1641 = vmul.f32 %v1629, %v1629
        %v1642 = vmul.f32 %v1630, %v1630
        %v1643 = vadd.f32 %v1639, %v1640
        %1644 = vadd.xlane.f32.xlu0 %v1643
        %v1645 = vpop.xlane.xlu0 %1644
        %v1646 = vadd.f32 %v1641, %v1642
        %1647 = vadd.xlane.f32.xlu0 %v1646
        %v1648 = vpop.xlane.xlu0 %1647
        %v1649 = vmax.f32 %v1645, 1e-24
        %v1650 = vmax.f32 %v1648, 1e-24
        %v1651 = vrsqrt.pop %v1649
        %v1652 = vrsqrt.pop %v1650
        %v1653 = vmul.f32 %v1627, %v1651
        %v1654 = vmul.f32 %v1628, %v1651
        %v1655 = vmul.f32 %v1629, %v1652
        %v1656 = vmul.f32 %v1630, %v1652
        %v1657 = vmul.f32 %v1631, %v1631
        %v1658 = vmul.f32 %v1632, %v1632
        %v1659 = vmul.f32 %v1633, %v1633
        %v1660 = vmul.f32 %v1634, %v1634
        %v1661 = vadd.f32 %v1657, %v1658
        %1662 = vadd.xlane.f32.xlu0 %v1661
        %v1663 = vpop.xlane.xlu0 %1662
        %v1664 = vadd.f32 %v1659, %v1660
        %1665 = vadd.xlane.f32.xlu0 %v1664
        %v1666 = vpop.xlane.xlu0 %1665
        %v1667 = vmax.f32 %v1663, 1e-24
        %v1668 = vmax.f32 %v1666, 1e-24
        %v1669 = vrsqrt.pop %v1667
        %v1670 = vrsqrt.pop %v1668
        %v1671 = vmul.f32 %v1631, %v1669
        %v1672 = vmul.f32 %v1632, %v1669
        %v1673 = vmul.f32 %v1633, %v1670
        %v1674 = vmul.f32 %v1634, %v1670
        %v1675 = vpack.c.bf16 %v1655, %v1653
        %v1676 = vpack.c.bf16 %v1656, %v1654
        %v1677 = vpack.c.bf16 %v1673, %v1671
        %v1678 = vpack.c.bf16 %v1674, %v1672
        %1679 = vmatprep.subr.bf16.mxu0 %v1678
        %1680 = vmatpush1.bf16.xpose.msra.mxu0 %v1677
        %1681 = vmatprep.subr.bf16.mxu0 0
        %1682 = vmatpush1.bf16.xpose.msra.mxu0 0
        %1683 = vmatprep.subr.bf16.mxu0 0
        %1684 = vmatpush1.bf16.xpose.msra.mxu0 0
        %1685 = vmatprep.subr.bf16.mxu0 0
        %1686 = vmatpush1.bf16.xpose.msra.mxu0 0
        %1687 = vmatprep.subr.bf16.mxu0 0
        %1688 = vmatpush1.bf16.xpose.msra.mxu0 0
        %1689 = vmatprep.subr.bf16.mxu0 0
        %1690 = vmatpush1.bf16.xpose.msra.mxu0 0
        %1691 = vmatprep.subr.bf16.mxu0 0
        %1692 = vmatpush1.bf16.xpose.msra.mxu0 0
        %1693 = vmatprep.subr.bf16.mxu0 0
        %1694 = vmatpush1.bf16.xpose.msra.mxu0 0
        %1695 = vmatprep.subr.bf16.mxu0 0
        %1696 = vmatpush1.bf16.xpose.msra.mxu0 0
        %1697 = vmatprep.subr.bf16.mxu0 0
        %1698 = vmatpush1.bf16.xpose.msra.mxu0 0
        %1699 = vmatprep.subr.bf16.mxu0 0
        %1700 = vmatpush1.bf16.xpose.msra.mxu0 0
        %1701 = vmatprep.subr.bf16.mxu0 0
        %1702 = vmatpush1.bf16.xpose.msra.mxu0 0
        %1703 = vmatprep.subr.bf16.mxu0 0
        %1704 = vmatpush1.bf16.xpose.msra.mxu0 0
        %1705 = vmatprep.subr.bf16.mxu0 0
        %1706 = vmatpush1.bf16.xpose.msra.mxu0 0
        %1707 = vmatprep.subr.bf16.mxu0 0
        %1708 = vmatpush1.bf16.xpose.msra.mxu0 0
        %1709 = vmatprep.subr.bf16.mxu0 0
        %1710 = vmatpush1.bf16.xpose.msra.mxu0 0
        %1711 = vmatprep.mubr.bf16.mxu0 %v1676
        %1712 = vmatmul.mubr.bf16.gmra.mrb[0].mxu0 %v1675
        %v1713 = vpop.f32.mrb[0].mxu0
        %v1714 = vadd.f32 0.0, %v1713
        %v1715 = vpop.f32.mrb[0].mxu0
        %v1716 = vpop.f32.mrb[0].mxu0
        %v1717 = vadd.f32 0.0, %v1716
        %v1718 = vpop.f32.mrb[0].mxu0
        %1719 = vdwg.mxu0
        %v1720 = vld [vmem:[#allocation17] sm:$0xff]
        %v1721 = vld [vmem:[#allocation17 + $0x8] sm:$0xff]
        %1723 = vset.pattern.permute.xlu0 0
        %1724 = vperm.xlu0 %1723, %v1720
        %v1725 = vpop.permute.xlu0 %1724
        %1728 = vset.pattern.permute.xlu0 0
        %1729 = vperm.xlu0 %1728, %v1721
        %v1730 = vpop.permute.xlu0 %1729
        %v1732 = vmul.f32 %v1714, %v1725
        %v1733 = vmul.f32 %v1717, %v1730
        %v1734 = vld [vmem:[#allocation19] sm:$0xff]
        %v1735 = vld [vmem:[#allocation19 + $0x8] sm:$0xff]
        %v1736 = vadd.f32 %v1732, %v1734
        %v1737 = vadd.f32 %v1733, %v1735
        %v1738 = vsel %vm743, %v1736, -inf
        %1739 = vmax.xlane.f32.xlu0 %v1738
        %v1740 = vpop.xlane.xlu0 %1739
        %v1741 = vsel %vm743, %v1737, -inf
        %1742 = vmax.xlane.f32.xlu0 %v1741
        %v1743 = vpop.xlane.xlu0 %1742
        %v1744 = vsub.f32 %v1736, %v1740
        %v1745 = vsub.f32 %v1737, %v1743
        %v1746 = vmul.f32 %v1744, 1.442695
        %v1747 = vpow.pop %v1746
        %v1748 = vmul.f32 %v1745, 1.442695
        %v1749 = vpow.pop %v1748
        %v1750 = vsel %vm743, %v1747, 0.0
        %1751 = vadd.xlane.f32.xlu0 %v1750
        %v1752 = vpop.xlane.xlu0 %1751
        %v1753 = vsel %vm743, %v1749, 0.0
        %1754 = vadd.xlane.f32.xlu0 %v1753
        %v1755 = vpop.xlane.xlu0 %1754
        %v1756 = vrcp.pop %v1752
        %v1757 = vrcp.pop %v1755
        %v1758 = vmul.f32 %v1747, %v1756
        %v1759 = vmul.f32 %v1749, %v1757
        %v1760 = vpack.c.bf16 %v1759, %v1758
        %v1761 = vpack.c.bf16 %v1637, %v1635
        %v1762 = vpack.c.bf16 %v1638, %v1636
        %v1764 = vsel %vm743, %v1760, 0
        %1766 = vmatprep.subr.bf16.mxu0 %v1762
        %1767 = vmatpush1.bf16.msra.mxu0 %v1761
        %1768 = vmatprep.subr.bf16.mxu0 0
        %1769 = vmatpush1.bf16.msra.mxu0 0
        %1770 = vmatprep.subr.bf16.mxu0 0
        %1771 = vmatpush1.bf16.msra.mxu0 0
        %1772 = vmatprep.subr.bf16.mxu0 0
        %1773 = vmatpush1.bf16.msra.mxu0 0
        %1774 = vmatprep.subr.bf16.mxu0 0
        %1775 = vmatpush1.bf16.msra.mxu0 0
        %1776 = vmatprep.subr.bf16.mxu0 0
        %1777 = vmatpush1.bf16.msra.mxu0 0
        %1778 = vmatprep.subr.bf16.mxu0 0
        %1779 = vmatpush1.bf16.msra.mxu0 0
        %1780 = vmatprep.subr.bf16.mxu0 0
        %1781 = vmatpush1.bf16.msra.mxu0 0
        %1782 = vmatprep.subr.bf16.mxu0 0
        %1783 = vmatpush1.bf16.msra.mxu0 0
        %1784 = vmatprep.subr.bf16.mxu0 0
        %1785 = vmatpush1.bf16.msra.mxu0 0
        %1786 = vmatprep.subr.bf16.mxu0 0
        %1787 = vmatpush1.bf16.msra.mxu0 0
        %1788 = vmatprep.subr.bf16.mxu0 0
        %1789 = vmatpush1.bf16.msra.mxu0 0
        %1790 = vmatprep.subr.bf16.mxu0 0
        %1791 = vmatpush1.bf16.msra.mxu0 0
        %1792 = vmatprep.subr.bf16.mxu0 0
        %1793 = vmatpush1.bf16.msra.mxu0 0
        %1794 = vmatprep.subr.bf16.mxu0 0
        %1795 = vmatpush1.bf16.msra.mxu0 0
        %1796 = vmatprep.subr.bf16.mxu0 0
        %1797 = vmatpush1.bf16.msra.mxu0 0
        %1798 = vmatprep.mubr.bf16.mxu0 0
        %1799 = vmatmul.mubr.bf16.gmra.mrb[0].mxu0 %v1764
        %v1800 = vpop.f32.mrb[0].mxu0
        %v1801 = vadd.f32 0.0, %v1800
        %v1802 = vpop.f32.mrb[0].mxu0
        %v1803 = vadd.f32 0.0, %v1802
        %v1804 = vpop.f32.mrb[0].mxu0
        %v1805 = vadd.f32 0.0, %v1804
        %v1806 = vpop.f32.mrb[0].mxu0
        %v1807 = vadd.f32 0.0, %v1806
        %1808 = vdwg.mxu0
        %v1809 = vld [vmem:[#allocation14] sm:$0xf]
        %v1810 = vld [vmem:[#allocation14 + $0x4] sm:$0xf]
        %v1811 = vpack.c.bf16 %v1805, %v1801
        %v1812 = vpack.c.bf16 %v1807, %v1803
        %v1813 = vld [vmem:[#allocation16] sm:$0xff]
        %v1814 = vld [vmem:[#allocation16 + $0x8] sm:$0xff]
        %1816 = vset.pattern.permute.xlu0 0
        %1817 = vperm.xlu0 %1816, %v1813
        %v1818 = vpop.permute.xlu0 %1817
        %1821 = vset.pattern.permute.xlu0 0
        %1822 = vperm.xlu0 %1821, %v1814
        %v1823 = vpop.permute.xlu0 %1822
        %v1827 = vunpack.c.l.b16 %v1809
        %v1828 = vunpack.c.l.b16 %v1810
        %v1829 = vpack.c.b16 %v1828, %v1827
        %v1831 = vsel %vm743, %v1829, 0
        %1833 = vmatprep.subr.bf16.mxu0 %v1812
        %1834 = vmatpush1.bf16.msra.mxu0 %v1811
        %1835 = vmatprep.subr.bf16.mxu0 0
        %1836 = vmatpush1.bf16.msra.mxu0 0
        %1837 = vmatprep.subr.bf16.mxu0 0
        %1838 = vmatpush1.bf16.msra.mxu0 0
        %1839 = vmatprep.subr.bf16.mxu0 0
        %1840 = vmatpush1.bf16.msra.mxu0 0
        %1841 = vmatprep.subr.bf16.mxu0 0
        %1842 = vmatpush1.bf16.msra.mxu0 0
        %1843 = vmatprep.subr.bf16.mxu0 0
        %1844 = vmatpush1.bf16.msra.mxu0 0
        %1845 = vmatprep.subr.bf16.mxu0 0
        %1846 = vmatpush1.bf16.msra.mxu0 0
        %1847 = vmatprep.subr.bf16.mxu0 0
        %1848 = vmatpush1.bf16.msra.mxu0 0
        %1849 = vmatprep.subr.bf16.mxu0 0
        %1850 = vmatpush1.bf16.msra.mxu0 0
        %1851 = vmatprep.subr.bf16.mxu0 0
        %1852 = vmatpush1.bf16.msra.mxu0 0
        %1853 = vmatprep.subr.bf16.mxu0 0
        %1854 = vmatpush1.bf16.msra.mxu0 0
        %1855 = vmatprep.subr.bf16.mxu0 0
        %1856 = vmatpush1.bf16.msra.mxu0 0
        %1857 = vmatprep.subr.bf16.mxu0 0
        %1858 = vmatpush1.bf16.msra.mxu0 0
        %1859 = vmatprep.subr.bf16.mxu0 0
        %1860 = vmatpush1.bf16.msra.mxu0 0
        %1861 = vmatprep.subr.bf16.mxu0 0
        %1862 = vmatpush1.bf16.msra.mxu0 0
        %1863 = vmatprep.subr.bf16.mxu0 0
        %1864 = vmatpush1.bf16.msra.mxu0 0
        %1865 = vmatprep.mubr.bf16.mxu0 0
        %1866 = vmatmul.mubr.bf16.gmra.mrb[0].mxu0 %v1831
        %v1867 = vpop.f32.mrb[0].mxu0
        %v1868 = vadd.f32 %v1818, %v1867
        %v1869 = vpop.f32.mrb[0].mxu0
        %v1870 = vadd.f32 %v1818, %v1869
        %v1871 = vpop.f32.mrb[0].mxu0
        %v1872 = vadd.f32 %v1823, %v1871
        %v1873 = vpop.f32.mrb[0].mxu0
        %v1874 = vadd.f32 %v1823, %v1873
        %1875 = vdwg.mxu0
        %v1876 = vadd.f32 %v1868, %v599
        %v1877 = vadd.f32 %v1870, %v600
        %v1878 = vadd.f32 %v1872, %v601
        %v1879 = vadd.f32 %v1874, %v602
        %1880 = vst [vmem:[%s597] sm:$0xff] %v1876
        %1881 = vst [vmem:[%s597 + $0x8] sm:$0xff] %v1877
        %1882 = vst [vmem:[%s597 + $0x10] sm:$0xff] %v1878
        %1883 = vst [vmem:[%s597 + $0x18] sm:$0xff] %v1879
        %s1884 = sand.u32 %s289, 1
        %s1885 = scalar_lea.sflag [#allocation4], %s1884
        %s1886 = sand.u32 %s289, 1
        %s1887 = smul.addr %s1886, 32
        %s1888 = scalar_lea.vmem [#allocation20], %s1887
        // Predicated region
        $region109: #{transformer_block_forward.2} parent=63 // pred_check
          %p1889 = pneg %p299
        $region110: #{transformer_block_forward.2} parent=63 // pred_check_branch
          %1891 = sbr.rel (%p1889) target = $region112
        $region111: #{transformer_block_forward.2} parent=63 // pred_region
          %s1893 = ssub.s32 512, 512
          %1894 = vsyncadd %s1885, %s1893
          %s1895 = smul.addr %s35, 4
          %s1896 = smul.addr %s1895, 128
          %s1897 = scalar_lea.hbm %s11, %s1896
          %s1898 = sshll.u32 %s1888, 4
          %s1899 = int_to_ptr.vmem [resolvable:$true] %s1898
          %1904 = dma.vmem_to_hbm [thread:$0]  %s1899, 512, %s1897, %s1885, 256, 256, 16
        $region112: #{transformer_block_forward.2} parent=63 // pred_fallthru
          _
      $region64: #{transformer_block_forward.2} parent=5 // pred_fallthru
        _
      %p1905 = scmp.le.s32.totalorder 2, %s30
      // Predicated region
      $region113: #{transformer_block_forward.2} parent=5 // pred_check
        %p1906 = pneg %p1905
      $region114: #{transformer_block_forward.2} parent=5 // pred_check_branch
        %1908 = sbr.rel (%p1906) target = $region116
      $region115: #{transformer_block_forward.2} parent=5 // pred_region
        %s1909 = ssub.s32 %s30, 2
        // Predicated region
        $region117: #{transformer_block_forward.2} parent=115 // pred_check
          %p1910 = pneg %p305
        $region118: #{transformer_block_forward.2} parent=115 // pred_check_branch
          %1912 = sbr.rel (%p1910) target = $region120
        $region119: #{transformer_block_forward.2} parent=115 // pred_region
          %s1913 = sand.u32 %s290, 1
          %s1914 = scalar_lea.sflag [#allocation4], %s1913
          %s1915 = sand.u32 %s290, 1
          %s1916 = smul.addr %s1915, 32
          %s1917 = scalar_lea.vmem [#allocation20], %s1916
          %1918 = dma.done %s1914, 512
        $region120: #{transformer_block_forward.2} parent=115 // pred_fallthru
          _
      $region116: #{transformer_block_forward.2} parent=5 // pred_fallthru
        _
    $region6: #{transformer_block_forward.2} parent=1 // loop_footer
      %s34 = sadd.s32 1, %s30
    $region7: #{transformer_block_forward.2} parent=1 // loop_footer_branch
      %29 = sbr.rel target = $region3
    $region8: #{transformer_block_forward.2} parent=1 // loop_exit
      _
    %1919 = vsyncpa [#allocation3], 1
    %s1920 = scalar_lea.sflag [#allocation3], 1
    %1921 = vsyncpa %s1920, 1
    %1922 = vsyncpa [#allocation6], 1
    %s1923 = scalar_lea.sflag [#allocation6], 1
    %1924 = vsyncpa %s1923, 1
    %1925 = vsyncpa [#allocation9], 1
    %1926 = vsyncpa [#allocation12], 1
    %1927 = vsyncpa [#allocation15], 1
    %1928 = vsyncpa [#allocation18], 1
    %1929 = vsyncpa [#allocation4], 1
    %s1930 = scalar_lea.sflag [#allocation4], 1
    %1931 = vsyncpa %s1930, 1

// kernel: transformer_block_forward.3
$region0: #{transformer_block_forward.3}
  #allocation0 [shape = 'u32[]', space=smem, size = 0x4, offset = 0x4, fixed_abs, tag = 'smem constant byte address 0x4 - core index']
  #allocation1 [shape = 'u32[144,128]{1,0:T(1,128)}', space=vmem, size = 0x12000, scoped, tag = 'internal scratch']
  %s0 = inlined_call_operand.hbm [shape: f32[2,16,256], index: 0, kind: input, shape index: {}, may-alias: {0,9}]
  %s1 = inlined_call_operand.hbm [shape: f32[2,16,1], index: 1, kind: input, shape index: {}]
  %s2 = inlined_call_operand.hbm [shape: f32[2,16,1], index: 2, kind: input, shape index: {}]
  %s3 = inlined_call_operand.hbm [shape: bf16[64,16], index: 3, kind: input, shape index: {}]
  %s4 = inlined_call_operand.hbm [shape: f32[64,1], index: 4, kind: input, shape index: {}]
  %s5 = inlined_call_operand.hbm [shape: f32[9,64,1], index: 5, kind: input, shape index: {}]
  %s6 = inlined_call_operand.hbm [shape: f32[64,1], index: 6, kind: input, shape index: {}]
  %s7 = inlined_call_operand.hbm [shape: bf16[16,32], index: 7, kind: input, shape index: {}]
  %s8 = inlined_call_operand.hbm [shape: f32[16,1], index: 8, kind: input, shape index: {}]
  %s9 = inlined_call_operand.hbm [shape: f32[2,16,256], index: 9, kind: output, shape index: {}, may-alias: {0,9}]
  %s10 = sld [smem:[#allocation0]]
  $region105: #{transformer_block_forward.3} parent=0
    _
  %s12 = ssub.s32 1, %s10
  %s13 = scalar_select 0, %s12, %s10
  $region1: #{transformer_block_forward.3} parent=0
    #allocation2 [shape = 'u8[32768]{0}', space=vmem, size = 0x8000, scoped, tag = 'input window, operand 0']
    #allocation3 [shape = 's32[2]{0}', space=sflag, size = 0x8, scoped, tag = 'scoped memory for transformer_block_forward.3']
    #allocation4 [shape = 's32[2]{0}', space=sflag, size = 0x8, scoped, tag = 'scoped memory for transformer_block_forward.3']
    #allocation5 [shape = 'u8[16384]{0}', space=vmem, size = 0x4000, scoped, tag = 'input window, operand 1']
    #allocation6 [shape = 's32[2]{0}', space=sflag, size = 0x8, scoped, tag = 'scoped memory for transformer_block_forward.3']
    #allocation7 [shape = 'u8[16384]{0}', space=vmem, size = 0x4000, scoped, tag = 'input window, operand 2']
    #allocation8 [shape = 'u8[16384]{0}', space=vmem, size = 0x4000, scoped, tag = 'input window, operand 3, single buffered']
    #allocation9 [shape = 's32[1]{0}', space=sflag, size = 0x4, scoped, tag = 'scoped memory for transformer_block_forward.3']
    #allocation10 [shape = 'u8[32768]{0}', space=vmem, size = 0x8000, scoped, tag = 'input window, operand 4, single buffered']
    #allocation11 [shape = 'u8[294912]{0}', space=vmem, size = 0x48000, scoped, tag = 'input window, operand 5, single buffered']
    #allocation12 [shape = 's32[1]{0}', space=sflag, size = 0x4, scoped, tag = 'scoped memory for transformer_block_forward.3']
    #allocation13 [shape = 'u8[32768]{0}', space=vmem, size = 0x8000, scoped, tag = 'input window, operand 6, single buffered']
    #allocation14 [shape = 'u8[4096]{0}', space=vmem, size = 0x1000, scoped, tag = 'input window, operand 7, single buffered']
    #allocation15 [shape = 's32[1]{0}', space=sflag, size = 0x4, scoped, tag = 'scoped memory for transformer_block_forward.3']
    #allocation16 [shape = 'u8[8192]{0}', space=vmem, size = 0x2000, scoped, tag = 'input window, operand 8, single buffered']
    #allocation17 [shape = 'u8[32768]{0}', space=vmem, size = 0x8000, scoped, tag = 'output window, operand 0']
    %14 = vsyncpa [#allocation3], 0
    %s15 = scalar_lea.sflag [#allocation3], 1
    %16 = vsyncpa %s15, 0
    %17 = vsyncpa [#allocation6], 0
    %s18 = scalar_lea.sflag [#allocation6], 1
    %19 = vsyncpa %s18, 0
    %20 = vsyncpa [#allocation9], 0
    %21 = vsyncpa [#allocation12], 0
    %22 = vsyncpa [#allocation15], 0
    %23 = vsyncpa [#allocation4], 0
    %s24 = scalar_lea.sflag [#allocation4], 1
    %25 = vsyncpa %s24, 0
    loop: start=0, step=1, limit=4
    $region2: #{transformer_block_forward.3} parent=1 // loop_pre_header
      _
    $region3: #{transformer_block_forward.3} parent=1 // loop_header
      %s27 = sphi 0, %s31
      %p28 = scmp.ge.s32.totalorder %s27, 4
      %s37 = sphi 0, %s39
      %s40 = sphi 0, %s37
      %s41 = sphi 0, %s40
      %s57 = sphi 0, %s41
      %s63 = sphi 0, %s65
      %s66 = sphi 0, %s63
      %s67 = sphi 0, %s66
      %s83 = sphi 0, %s67
      %s89 = sphi 0, %s91
      %s92 = sphi 0, %s89
      %s93 = sphi 0, %s92
      %s109 = sphi 0, %s93
      %s113 = sphi 0, %s113
      %s115 = sphi 0, %s113
      %s116 = sphi 0, %s115
      %s130 = sphi 0, %s116
      %s134 = sphi 0, %s134
      %s136 = sphi 0, %s134
      %s137 = sphi 0, %s136
      %s151 = sphi 0, %s137
      %s155 = sphi 0, %s155
      %s157 = sphi 0, %s155
      %s158 = sphi 0, %s157
      %s172 = sphi 0, %s158
      %s176 = sphi 0, %s176
      %s178 = sphi 0, %s176
      %s179 = sphi 0, %s178
      %s193 = sphi 0, %s179
      %s197 = sphi 0, %s197
      %s199 = sphi 0, %s197
      %s200 = sphi 0, %s199
      %s214 = sphi 0, %s200
      %s218 = sphi 0, %s218
      %s220 = sphi 0, %s218
      %s221 = sphi 0, %s220
      %s235 = sphi 0, %s221
      %s241 = sphi 0, %s243
      %s244 = sphi 0, %s241
      %s245 = sphi 0, %s244
      %s261 = sphi 0, %s245
    $region4: #{transformer_block_forward.3} parent=1 // loop_header_branch
      %30 = sbr.rel (%p28) target = $region8
    $region5: #{transformer_block_forward.3} parent=1 // loop_body
      %s32 = ssub.s32 %s27, 1
      %s33 = ssub.s32 %s27, 2
      %s34 = sadd.s32 %s27, 1
      %s35 = ssub.s32 %s27, %s34
      %p36 = scmp.eq.s32.totalorder %s35, 0
      %s38 = sadd.s32 %s37, 1
      %s39 = scalar_select %p36, %s37, %s38
      %p42 = pneg %p36
      %p43 = scmp.eq.s32.totalorder %s27, 1
      %p44 = por %p42, %p43
      %p45 = scmp.ne.s32.totalorder %s37, %s40
      %p46 = scmp.eq.s32.totalorder %s27, 0
      %p47 = por %p45, %p46
      %p48 = scmp.ne.s32.totalorder %s37, %s40
      %p49 = scmp.eq.s32.totalorder %s32, 1
      %p50 = por %p48, %p49
      %p51 = scmp.ne.s32.totalorder %s40, %s41
      %p52 = scmp.eq.s32.totalorder %s32, 0
      %p53 = por %p51, %p52
      %p54 = scmp.ne.s32.totalorder %s40, %s41
      %p55 = scmp.eq.s32.totalorder %s33, 1
      %p56 = por %p54, %p55
      %p58 = scmp.ne.s32.totalorder %s41, %s57
      %p59 = scmp.eq.s32.totalorder %s33, 0
      %p60 = por %p58, %p59
      %s61 = ssub.s32 %s27, %s34
      %p62 = scmp.eq.s32.totalorder %s61, 0
      %s64 = sadd.s32 %s63, 1
      %s65 = scalar_select %p62, %s63, %s64
      %p68 = pneg %p62
      %p69 = scmp.eq.s32.totalorder %s27, 1
      %p70 = por %p68, %p69
      %p71 = scmp.ne.s32.totalorder %s63, %s66
      %p72 = scmp.eq.s32.totalorder %s27, 0
      %p73 = por %p71, %p72
      %p74 = scmp.ne.s32.totalorder %s63, %s66
      %p75 = scmp.eq.s32.totalorder %s32, 1
      %p76 = por %p74, %p75
      %p77 = scmp.ne.s32.totalorder %s66, %s67
      %p78 = scmp.eq.s32.totalorder %s32, 0
      %p79 = por %p77, %p78
      %p80 = scmp.ne.s32.totalorder %s66, %s67
      %p81 = scmp.eq.s32.totalorder %s33, 1
      %p82 = por %p80, %p81
      %p84 = scmp.ne.s32.totalorder %s67, %s83
      %p85 = scmp.eq.s32.totalorder %s33, 0
      %p86 = por %p84, %p85
      %s87 = ssub.s32 %s27, %s34
      %p88 = scmp.eq.s32.totalorder %s87, 0
      %s90 = sadd.s32 %s89, 1
      %s91 = scalar_select %p88, %s89, %s90
      %p94 = pneg %p88
      %p95 = scmp.eq.s32.totalorder %s27, 1
      %p96 = por %p94, %p95
      %p97 = scmp.ne.s32.totalorder %s89, %s92
      %p98 = scmp.eq.s32.totalorder %s27, 0
      %p99 = por %p97, %p98
      %p100 = scmp.ne.s32.totalorder %s89, %s92
      %p101 = scmp.eq.s32.totalorder %s32, 1
      %p102 = por %p100, %p101
      %p103 = scmp.ne.s32.totalorder %s92, %s93
      %p104 = scmp.eq.s32.totalorder %s32, 0
      %p105 = por %p103, %p104
      %p106 = scmp.ne.s32.totalorder %s92, %s93
      %p107 = scmp.eq.s32.totalorder %s33, 1
      %p108 = por %p106, %p107
      %p110 = scmp.ne.s32.totalorder %s93, %s109
      %p111 = scmp.eq.s32.totalorder %s33, 0
      %p112 = por %p110, %p111
      %s114 = sadd.s32 %s113, 1
      %p117 = scmp.eq.s32.totalorder %s27, 1
      %p118 = scmp.ne.s32.totalorder %s113, %s115
      %p119 = scmp.eq.s32.totalorder %s27, 0
      %p120 = por %p118, %p119
      %p121 = scmp.ne.s32.totalorder %s113, %s115
      %p122 = scmp.eq.s32.totalorder %s32, 1
      %p123 = por %p121, %p122
      %p124 = scmp.ne.s32.totalorder %s115, %s116
      %p125 = scmp.eq.s32.totalorder %s32, 0
      %p126 = por %p124, %p125
      %p127 = scmp.ne.s32.totalorder %s115, %s116
      %p128 = scmp.eq.s32.totalorder %s33, 1
      %p129 = por %p127, %p128
      %p131 = scmp.ne.s32.totalorder %s116, %s130
      %p132 = scmp.eq.s32.totalorder %s33, 0
      %p133 = por %p131, %p132
      %s135 = sadd.s32 %s134, 1
      %p138 = scmp.eq.s32.totalorder %s27, 1
      %p139 = scmp.ne.s32.totalorder %s134, %s136
      %p140 = scmp.eq.s32.totalorder %s27, 0
      %p141 = por %p139, %p140
      %p142 = scmp.ne.s32.totalorder %s134, %s136
      %p143 = scmp.eq.s32.totalorder %s32, 1
      %p144 = por %p142, %p143
      %p145 = scmp.ne.s32.totalorder %s136, %s137
      %p146 = scmp.eq.s32.totalorder %s32, 0
      %p147 = por %p145, %p146
      %p148 = scmp.ne.s32.totalorder %s136, %s137
      %p149 = scmp.eq.s32.totalorder %s33, 1
      %p150 = por %p148, %p149
      %p152 = scmp.ne.s32.totalorder %s137, %s151
      %p153 = scmp.eq.s32.totalorder %s33, 0
      %p154 = por %p152, %p153
      %s156 = sadd.s32 %s155, 1
      %p159 = scmp.eq.s32.totalorder %s27, 1
      %p160 = scmp.ne.s32.totalorder %s155, %s157
      %p161 = scmp.eq.s32.totalorder %s27, 0
      %p162 = por %p160, %p161
      %p163 = scmp.ne.s32.totalorder %s155, %s157
      %p164 = scmp.eq.s32.totalorder %s32, 1
      %p165 = por %p163, %p164
      %p166 = scmp.ne.s32.totalorder %s157, %s158
      %p167 = scmp.eq.s32.totalorder %s32, 0
      %p168 = por %p166, %p167
      %p169 = scmp.ne.s32.totalorder %s157, %s158
      %p170 = scmp.eq.s32.totalorder %s33, 1
      %p171 = por %p169, %p170
      %p173 = scmp.ne.s32.totalorder %s158, %s172
      %p174 = scmp.eq.s32.totalorder %s33, 0
      %p175 = por %p173, %p174
      %s177 = sadd.s32 %s176, 1
      %p180 = scmp.eq.s32.totalorder %s27, 1
      %p181 = scmp.ne.s32.totalorder %s176, %s178
      %p182 = scmp.eq.s32.totalorder %s27, 0
      %p183 = por %p181, %p182
      %p184 = scmp.ne.s32.totalorder %s176, %s178
      %p185 = scmp.eq.s32.totalorder %s32, 1
      %p186 = por %p184, %p185
      %p187 = scmp.ne.s32.totalorder %s178, %s179
      %p188 = scmp.eq.s32.totalorder %s32, 0
      %p189 = por %p187, %p188
      %p190 = scmp.ne.s32.totalorder %s178, %s179
      %p191 = scmp.eq.s32.totalorder %s33, 1
      %p192 = por %p190, %p191
      %p194 = scmp.ne.s32.totalorder %s179, %s193
      %p195 = scmp.eq.s32.totalorder %s33, 0
      %p196 = por %p194, %p195
      %s198 = sadd.s32 %s197, 1
      %p201 = scmp.eq.s32.totalorder %s27, 1
      %p202 = scmp.ne.s32.totalorder %s197, %s199
      %p203 = scmp.eq.s32.totalorder %s27, 0
      %p204 = por %p202, %p203
      %p205 = scmp.ne.s32.totalorder %s197, %s199
      %p206 = scmp.eq.s32.totalorder %s32, 1
      %p207 = por %p205, %p206
      %p208 = scmp.ne.s32.totalorder %s199, %s200
      %p209 = scmp.eq.s32.totalorder %s32, 0
      %p210 = por %p208, %p209
      %p211 = scmp.ne.s32.totalorder %s199, %s200
      %p212 = scmp.eq.s32.totalorder %s33, 1
      %p213 = por %p211, %p212
      %p215 = scmp.ne.s32.totalorder %s200, %s214
      %p216 = scmp.eq.s32.totalorder %s33, 0
      %p217 = por %p215, %p216
      %s219 = sadd.s32 %s218, 1
      %p222 = scmp.eq.s32.totalorder %s27, 1
      %p223 = scmp.ne.s32.totalorder %s218, %s220
      %p224 = scmp.eq.s32.totalorder %s27, 0
      %p225 = por %p223, %p224
      %p226 = scmp.ne.s32.totalorder %s218, %s220
      %p227 = scmp.eq.s32.totalorder %s32, 1
      %p228 = por %p226, %p227
      %p229 = scmp.ne.s32.totalorder %s220, %s221
      %p230 = scmp.eq.s32.totalorder %s32, 0
      %p231 = por %p229, %p230
      %p232 = scmp.ne.s32.totalorder %s220, %s221
      %p233 = scmp.eq.s32.totalorder %s33, 1
      %p234 = por %p232, %p233
      %p236 = scmp.ne.s32.totalorder %s221, %s235
      %p237 = scmp.eq.s32.totalorder %s33, 0
      %p238 = por %p236, %p237
      %s239 = ssub.s32 %s27, %s34
      %p240 = scmp.eq.s32.totalorder %s239, 0
      %s242 = sadd.s32 %s241, 1
      %s243 = scalar_select %p240, %s241, %s242
      %p246 = pneg %p240
      %p247 = scmp.eq.s32.totalorder %s27, 1
      %p248 = por %p246, %p247
      %p249 = scmp.ne.s32.totalorder %s241, %s244
      %p250 = scmp.eq.s32.totalorder %s27, 0
      %p251 = por %p249, %p250
      %p252 = scmp.ne.s32.totalorder %s241, %s244
      %p253 = scmp.eq.s32.totalorder %s32, 1
      %p254 = por %p252, %p253
      %p255 = scmp.ne.s32.totalorder %s244, %s245
      %p256 = scmp.eq.s32.totalorder %s32, 0
      %p257 = por %p255, %p256
      %p258 = scmp.ne.s32.totalorder %s244, %s245
      %p259 = scmp.eq.s32.totalorder %s33, 1
      %p260 = por %p258, %p259
      %p262 = scmp.ne.s32.totalorder %s245, %s261
      %p263 = scmp.eq.s32.totalorder %s33, 0
      %p264 = por %p262, %p263
      %p265 = scmp.le.s32.totalorder 1, %s27
      %p266 = scmp.lt.s32.totalorder %s27, 3
      %p267 = pnand %p265, %p266
      %p268 = pneg %p267
      // Predicated region
      $region9: #{transformer_block_forward.3} parent=5 // pred_check
        _
      $region10: #{transformer_block_forward.3} parent=5 // pred_check_branch
        %270 = sbr.rel (%p267) target = $region12
      $region11: #{transformer_block_forward.3} parent=5 // pred_region
        %s271 = ssub.s32 %s27, 1
        // Predicated region
        $region13: #{transformer_block_forward.3} parent=11 // pred_check
          %p272 = pneg %p126
        $region14: #{transformer_block_forward.3} parent=11 // pred_check_branch
          %274 = sbr.rel (%p272) target = $region16
        $region15: #{transformer_block_forward.3} parent=11 // pred_region
          %s276 = ssub.s32 512, 512
          %277 = vsyncadd [#allocation9], %s276
          %s278 = sshll.u32 [#allocation8], 4
          %s279 = int_to_ptr.vmem [resolvable:$true] %s278
          %284 = dma.hbm_to_vmem [thread:$0]  %s3, 512, %s279, [#allocation9], 64, 64, 4
        $region16: #{transformer_block_forward.3} parent=11 // pred_fallthru
          _
        // Predicated region
        $region17: #{transformer_block_forward.3} parent=11 // pred_check
          %p285 = pneg %p147
        $region18: #{transformer_block_forward.3} parent=11 // pred_check_branch
          %287 = sbr.rel (%p285) target = $region20
        $region19: #{transformer_block_forward.3} parent=11 // pred_region
          %s289 = ssub.s32 1024, 1024
          %290 = vsyncadd [#allocation9], %s289
          %s291 = sshll.u32 [#allocation10], 4
          %s292 = int_to_ptr.vmem [resolvable:$true] %s291
          %297 = dma.hbm_to_vmem [thread:$0]  %s4, 1024, %s292, [#allocation9], 128, 128, 8
        $region20: #{transformer_block_forward.3} parent=11 // pred_fallthru
          _
        // Predicated region
        $region21: #{transformer_block_forward.3} parent=11 // pred_check
          %p298 = pneg %p168
        $region22: #{transformer_block_forward.3} parent=11 // pred_check_branch
          %300 = sbr.rel (%p298) target = $region24
        $region23: #{transformer_block_forward.3} parent=11 // pred_region
          %s302 = ssub.s32 9216, 9216
          %303 = vsyncadd [#allocation12], %s302
          %s304 = sshll.u32 [#allocation11], 4
          %s305 = int_to_ptr.vmem [resolvable:$true] %s304
          %310 = dma.hbm_to_vmem [thread:$0]  %s5, 9216, %s305, [#allocation12], 128, 128, 8
        $region24: #{transformer_block_forward.3} parent=11 // pred_fallthru
          _
        // Predicated region
        $region25: #{transformer_block_forward.3} parent=11 // pred_check
          %p311 = pneg %p189
        $region26: #{transformer_block_forward.3} parent=11 // pred_check_branch
          %313 = sbr.rel (%p311) target = $region28
        $region27: #{transformer_block_forward.3} parent=11 // pred_region
          %s315 = ssub.s32 1024, 1024
          %316 = vsyncadd [#allocation12], %s315
          %s317 = sshll.u32 [#allocation13], 4
          %s318 = int_to_ptr.vmem [resolvable:$true] %s317
          %323 = dma.hbm_to_vmem [thread:$0]  %s6, 1024, %s318, [#allocation12], 128, 128, 8
        $region28: #{transformer_block_forward.3} parent=11 // pred_fallthru
          _
        // Predicated region
        $region29: #{transformer_block_forward.3} parent=11 // pred_check
          %p324 = pneg %p210
        $region30: #{transformer_block_forward.3} parent=11 // pred_check_branch
          %326 = sbr.rel (%p324) target = $region32
        $region31: #{transformer_block_forward.3} parent=11 // pred_region
          %s328 = ssub.s32 128, 128
          %329 = vsyncadd [#allocation15], %s328
          %s330 = sshll.u32 [#allocation14], 4
          %s331 = int_to_ptr.vmem [resolvable:$true] %s330
          %336 = dma.hbm_to_vmem [thread:$0]  %s7, 128, %s331, [#allocation15], 64, 64, 4
        $region32: #{transformer_block_forward.3} parent=11 // pred_fallthru
          _
        // Predicated region
        $region33: #{transformer_block_forward.3} parent=11 // pred_check
          %p337 = pneg %p231
        $region34: #{transformer_block_forward.3} parent=11 // pred_check_branch
          %339 = sbr.rel (%p337) target = $region36
        $region35: #{transformer_block_forward.3} parent=11 // pred_region
          %s341 = ssub.s32 256, 256
          %342 = vsyncadd [#allocation15], %s341
          %s343 = sshll.u32 [#allocation16], 4
          %s344 = int_to_ptr.vmem [resolvable:$true] %s343
          %349 = dma.hbm_to_vmem [thread:$0]  %s8, 256, %s344, [#allocation15], 128, 128, 8
        $region36: #{transformer_block_forward.3} parent=11 // pred_fallthru
          _
      $region12: #{transformer_block_forward.3} parent=5 // pred_fallthru
        _
      %p350 = scmp.lt.s32.totalorder %s27, 2
      // Predicated region
      $region37: #{transformer_block_forward.3} parent=5 // pred_check
        %p351 = pneg %p350
      $region38: #{transformer_block_forward.3} parent=5 // pred_check_branch
        %353 = sbr.rel (%p351) target = $region40
      $region39: #{transformer_block_forward.3} parent=5 // pred_region
        // Predicated region
        $region41: #{transformer_block_forward.3} parent=39 // pred_check
          %p354 = pneg %p47
        $region42: #{transformer_block_forward.3} parent=39 // pred_check_branch
          %356 = sbr.rel (%p354) target = $region44
        $region43: #{transformer_block_forward.3} parent=39 // pred_region
          %s357 = sand.u32 %s37, 1
          %s358 = scalar_lea.sflag [#allocation3], %s357
          %s359 = sand.u32 %s37, 1
          %s360 = smul.addr %s359, 32
          %s361 = scalar_lea.vmem [#allocation2], %s360
          %s363 = ssub.s32 512, 512
          %364 = vsyncadd %s358, %s363
          %s365 = smul.addr %s27, 4
          %s366 = smul.addr %s365, 128
          %s367 = scalar_lea.hbm %s0, %s366
          %s368 = sshll.u32 %s361, 4
          %s369 = int_to_ptr.vmem [resolvable:$true] %s368
          %374 = dma.hbm_to_vmem [thread:$0]  %s367, 512, %s369, %s358, 256, 256, 16
        $region44: #{transformer_block_forward.3} parent=39 // pred_fallthru
          _
        // Predicated region
        $region45: #{transformer_block_forward.3} parent=39 // pred_check
          %p375 = pneg %p73
        $region46: #{transformer_block_forward.3} parent=39 // pred_check_branch
          %377 = sbr.rel (%p375) target = $region48
        $region47: #{transformer_block_forward.3} parent=39 // pred_region
          %s378 = sand.u32 %s27, 1
          %s379 = scalar_lea.sflag [#allocation6], %s378
          %s380 = sand.u32 %s63, 1
          %s381 = smul.addr %s380, 16
          %s382 = scalar_lea.vmem [#allocation5], %s381
          %s384 = ssub.s32 256, 256
          %385 = vsyncadd %s379, %s384
          %s386 = smul.addr %s27, 2
          %s387 = smul.addr %s386, 128
          %s388 = scalar_lea.hbm %s1, %s387
          %s389 = sshll.u32 %s382, 4
          %s390 = int_to_ptr.vmem [resolvable:$true] %s389
          %395 = dma.hbm_to_vmem [thread:$0]  %s388, 256, %s390, %s379, 128, 128, 8
        $region48: #{transformer_block_forward.3} parent=39 // pred_fallthru
          _
        // Predicated region
        $region49: #{transformer_block_forward.3} parent=39 // pred_check
          %p396 = pneg %p99
        $region50: #{transformer_block_forward.3} parent=39 // pred_check_branch
          %398 = sbr.rel (%p396) target = $region52
        $region51: #{transformer_block_forward.3} parent=39 // pred_region
          %s399 = sand.u32 %s27, 1
          %s400 = scalar_lea.sflag [#allocation6], %s399
          %s401 = sand.u32 %s89, 1
          %s402 = smul.addr %s401, 16
          %s403 = scalar_lea.vmem [#allocation7], %s402
          %s405 = ssub.s32 256, 256
          %406 = vsyncadd %s400, %s405
          %s407 = smul.addr %s27, 2
          %s408 = smul.addr %s407, 128
          %s409 = scalar_lea.hbm %s2, %s408
          %s410 = sshll.u32 %s403, 4
          %s411 = int_to_ptr.vmem [resolvable:$true] %s410
          %416 = dma.hbm_to_vmem [thread:$0]  %s409, 256, %s411, %s400, 128, 128, 8
        $region52: #{transformer_block_forward.3} parent=39 // pred_fallthru
          _
      $region40: #{transformer_block_forward.3} parent=5 // pred_fallthru
        _
      %p417 = scmp.le.s32.totalorder 1, %s27
      %p418 = scmp.lt.s32.totalorder %s27, 3
      %p419 = pnand %p417, %p418
      %p420 = pneg %p419
      // Predicated region
      $region53: #{transformer_block_forward.3} parent=5 // pred_check
        _
      $region54: #{transformer_block_forward.3} parent=5 // pred_check_branch
        %422 = sbr.rel (%p419) target = $region56
      $region55: #{transformer_block_forward.3} parent=5 // pred_region
        %s423 = ssub.s32 %s27, 1
        %s424 = sand.u32 %s40, 1
        %s425 = scalar_lea.sflag [#allocation3], %s424
        %s426 = sand.u32 %s40, 1
        %s427 = smul.addr %s426, 32
        %s428 = scalar_lea.vmem [#allocation2], %s427
        // Predicated region
        $region57: #{transformer_block_forward.3} parent=55 // pred_check
          %p429 = pneg %p53
        $region58: #{transformer_block_forward.3} parent=55 // pred_check_branch
          %431 = sbr.rel (%p429) target = $region60
        $region59: #{transformer_block_forward.3} parent=55 // pred_region
          %432 = dma.done %s425, 512
        $region60: #{transformer_block_forward.3} parent=55 // pred_fallthru
          _
        %s433 = sand.u32 %s32, 1
        %s434 = scalar_lea.sflag [#allocation6], %s433
        %s435 = sand.u32 %s66, 1
        %s436 = smul.addr %s435, 16
        %s437 = scalar_lea.vmem [#allocation5], %s436
        // Predicated region
        $region61: #{transformer_block_forward.3} parent=55 // pred_check
          %p438 = pneg %p79
        $region62: #{transformer_block_forward.3} parent=55 // pred_check_branch
          %440 = sbr.rel (%p438) target = $region64
        $region63: #{transformer_block_forward.3} parent=55 // pred_region
          %441 = dma.done %s434, 256
        $region64: #{transformer_block_forward.3} parent=55 // pred_fallthru
          _
        %s442 = sand.u32 %s32, 1
        %s443 = scalar_lea.sflag [#allocation6], %s442
        %s444 = sand.u32 %s92, 1
        %s445 = smul.addr %s444, 16
        %s446 = scalar_lea.vmem [#allocation7], %s445
        // Predicated region
        $region65: #{transformer_block_forward.3} parent=55 // pred_check
          %p447 = pneg %p105
        $region66: #{transformer_block_forward.3} parent=55 // pred_check_branch
          %449 = sbr.rel (%p447) target = $region68
        $region67: #{transformer_block_forward.3} parent=55 // pred_region
          %450 = dma.done %s443, 256
        $region68: #{transformer_block_forward.3} parent=55 // pred_fallthru
          _
        // Predicated region
        $region69: #{transformer_block_forward.3} parent=55 // pred_check
          %p451 = pneg %p126
        $region70: #{transformer_block_forward.3} parent=55 // pred_check_branch
          %453 = sbr.rel (%p451) target = $region72
        $region71: #{transformer_block_forward.3} parent=55 // pred_region
          %454 = dma.done [#allocation9], 512
        $region72: #{transformer_block_forward.3} parent=55 // pred_fallthru
          _
        // Predicated region
        $region73: #{transformer_block_forward.3} parent=55 // pred_check
          %p455 = pneg %p147
        $region74: #{transformer_block_forward.3} parent=55 // pred_check_branch
          %457 = sbr.rel (%p455) target = $region76
        $region75: #{transformer_block_forward.3} parent=55 // pred_region
          %458 = dma.done [#allocation9], 1024
        $region76: #{transformer_block_forward.3} parent=55 // pred_fallthru
          _
        // Predicated region
        $region77: #{transformer_block_forward.3} parent=55 // pred_check
          %p459 = pneg %p168
        $region78: #{transformer_block_forward.3} parent=55 // pred_check_branch
          %461 = sbr.rel (%p459) target = $region80
        $region79: #{transformer_block_forward.3} parent=55 // pred_region
          %462 = dma.done [#allocation12], 9216
        $region80: #{transformer_block_forward.3} parent=55 // pred_fallthru
          _
        // Predicated region
        $region81: #{transformer_block_forward.3} parent=55 // pred_check
          %p463 = pneg %p189
        $region82: #{transformer_block_forward.3} parent=55 // pred_check_branch
          %465 = sbr.rel (%p463) target = $region84
        $region83: #{transformer_block_forward.3} parent=55 // pred_region
          %466 = dma.done [#allocation12], 1024
        $region84: #{transformer_block_forward.3} parent=55 // pred_fallthru
          _
        // Predicated region
        $region85: #{transformer_block_forward.3} parent=55 // pred_check
          %p467 = pneg %p210
        $region86: #{transformer_block_forward.3} parent=55 // pred_check_branch
          %469 = sbr.rel (%p467) target = $region88
        $region87: #{transformer_block_forward.3} parent=55 // pred_region
          %470 = dma.done [#allocation15], 128
        $region88: #{transformer_block_forward.3} parent=55 // pred_fallthru
          _
        // Predicated region
        $region89: #{transformer_block_forward.3} parent=55 // pred_check
          %p471 = pneg %p231
        $region90: #{transformer_block_forward.3} parent=55 // pred_check_branch
          %473 = sbr.rel (%p471) target = $region92
        $region91: #{transformer_block_forward.3} parent=55 // pred_region
          %474 = dma.done [#allocation15], 256
        $region92: #{transformer_block_forward.3} parent=55 // pred_fallthru
          _
        %s475 = sand.u32 %s40, 1
        %s476 = scalar_lea.sflag [#allocation3], %s475
        %s477 = sand.u32 %s40, 1
        %s478 = smul.addr %s477, 32
        %s479 = scalar_lea.vmem [#allocation2], %s478
        %p480 = pneg %p53
        %p481 = pneg %p50
        %s482 = sand.u32 %s32, 1
        %s483 = scalar_lea.sflag [#allocation6], %s482
        %s484 = sand.u32 %s66, 1
        %s485 = smul.addr %s484, 16
        %s486 = scalar_lea.vmem [#allocation5], %s485
        %p487 = pneg %p79
        %p488 = pneg %p76
        %s489 = sand.u32 %s32, 1
        %s490 = scalar_lea.sflag [#allocation6], %s489
        %s491 = sand.u32 %s92, 1
        %s492 = smul.addr %s491, 16
        %s493 = scalar_lea.vmem [#allocation7], %s492
        %p494 = pneg %p105
        %p495 = pneg %p102
        %p496 = pneg %p126
        %p497 = pneg %p123
        %p498 = pneg %p147
        %p499 = pneg %p144
        %p500 = pneg %p168
        %p501 = pneg %p165
        %p502 = pneg %p189
        %p503 = pneg %p186
        %p504 = pneg %p210
        %p505 = pneg %p207
        %p506 = pneg %p231
        %p507 = pneg %p228
        %p508 = pneg %p257
        %p509 = pneg %p254
        %s510 = sand.u32 %s244, 1
        %s511 = scalar_lea.sflag [#allocation4], %s510
        %s512 = sand.u32 %s244, 1
        %s513 = smul.addr %s512, 32
        %s514 = scalar_lea.vmem [#allocation17], %s513
        %v516 = vld [vmem:[%s428] sm:$0xff]
        %v517 = vld [vmem:[%s428 + $0x8] sm:$0xff]
        %v518 = vld [vmem:[%s428 + $0x10] sm:$0xff]
        %v519 = vld [vmem:[%s428 + $0x18] sm:$0xff]
        %v520 = vld [vmem:[%s437] sm:$0xff]
        %v521 = vld [vmem:[%s437 + $0x8] sm:$0xff]
        %v522 = vld [vmem:[%s446] sm:$0xff]
        %v523 = vld [vmem:[%s446 + $0x8] sm:$0xff]
        %v524 = vadd.f32 %v516, %v518
        %v525 = vrot.slane %v524, 4
        %v526 = vadd.f32 %v524, %v525
        %v527 = vrot.slane %v526, 2
        %v528 = vadd.f32 %v526, %v527
        %v529 = vrot.slane %v528, 1
        %v530 = vadd.f32 %v528, %v529
        %v531 = vadd.f32 %v517, %v519
        %v532 = vrot.slane %v531, 4
        %v533 = vadd.f32 %v531, %v532
        %v534 = vrot.slane %v533, 2
        %v535 = vadd.f32 %v533, %v534
        %v536 = vrot.slane %v535, 1
        %v537 = vadd.f32 %v535, %v536
        %v538 = vrcp.pop 16.0
        %v539 = vmul.f32 %v530, %v538
        %v540 = vmul.f32 %v537, %v538
        %v541 = vsub.f32 %v516, %v539
        %v542 = vsub.f32 %v517, %v540
        %v543 = vsub.f32 %v518, %v539
        %v544 = vsub.f32 %v519, %v540
        %v545 = vmul.f32 %v541, %v541
        %v546 = vmul.f32 %v542, %v542
        %v547 = vmul.f32 %v543, %v543
        %v548 = vmul.f32 %v544, %v544
        %v549 = vadd.f32 %v545, %v547
        %v550 = vrot.slane %v549, 4
        %v551 = vadd.f32 %v549, %v550
        %v552 = vrot.slane %v551, 2
        %v553 = vadd.f32 %v551, %v552
        %v554 = vrot.slane %v553, 1
        %v555 = vadd.f32 %v553, %v554
        %v556 = vadd.f32 %v546, %v548
        %v557 = vrot.slane %v556, 4
        %v558 = vadd.f32 %v556, %v557
        %v559 = vrot.slane %v558, 2
        %v560 = vadd.f32 %v558, %v559
        %v561 = vrot.slane %v560, 1
        %v562 = vadd.f32 %v560, %v561
        %v563 = vmul.f32 %v555, %v538
        %v564 = vmul.f32 %v562, %v538
        %v565 = vadd.f32 %v563, 1e-05
        %v566 = vadd.f32 %v564, 1e-05
        %v567 = vrsqrt.pop %v565
        %v568 = vrsqrt.pop %v566
        %v569 = vmul.f32 %v541, %v567
        %v570 = vmul.f32 %v542, %v568
        %v571 = vmul.f32 %v543, %v567
        %v572 = vmul.f32 %v544, %v568
        %574 = vset.pattern.permute.xlu0 0
        %575 = vperm.xlu0 %574, %v520
        %v576 = vpop.permute.xlu0 %575
        %579 = vset.pattern.permute.xlu0 0
        %580 = vperm.xlu0 %579, %v521
        %v581 = vpop.permute.xlu0 %580
        %v583 = vmul.f32 %v569, %v576
        %v584 = vmul.f32 %v570, %v576
        %v585 = vmul.f32 %v571, %v581
        %v586 = vmul.f32 %v572, %v581
        %588 = vset.pattern.permute.xlu0 0
        %589 = vperm.xlu0 %588, %v522
        %v590 = vpop.permute.xlu0 %589
        %593 = vset.pattern.permute.xlu0 0
        %594 = vperm.xlu0 %593, %v523
        %v595 = vpop.permute.xlu0 %594
        %v597 = vadd.f32 %v583, %v590
        %v598 = vadd.f32 %v584, %v590
        %v599 = vadd.f32 %v585, %v595
        %v600 = vadd.f32 %v586, %v595
        %v601 = vld [vmem:[#allocation8] sm:$0xf]
        %v602 = vld [vmem:[#allocation8 + $0x4] sm:$0xf]
        %v603 = vld [vmem:[#allocation8 + $0x8] sm:$0xf]
        %v604 = vld [vmem:[#allocation8 + $0xc] sm:$0xf]
        %v605 = vld [vmem:[#allocation8 + $0x10] sm:$0xf]
        %v606 = vld [vmem:[#allocation8 + $0x14] sm:$0xf]
        %v607 = vld [vmem:[#allocation8 + $0x18] sm:$0xf]
        %v608 = vld [vmem:[#allocation8 + $0x1c] sm:$0xf]
        %v609 = vpack.c.bf16 %v599, %v597
        %v610 = vpack.c.bf16 %v600, %v598
        %v611 = vld [vmem:[#allocation10] sm:$0xff]
        %v612 = vld [vmem:[#allocation10 + $0x8] sm:$0xff]
        %v613 = vld [vmem:[#allocation10 + $0x10] sm:$0xff]
        %v614 = vld [vmem:[#allocation10 + $0x18] sm:$0xff]
        %v615 = vld [vmem:[#allocation10 + $0x20] sm:$0xff]
        %v616 = vld [vmem:[#allocation10 + $0x28] sm:$0xff]
        %v617 = vld [vmem:[#allocation10 + $0x30] sm:$0xff]
        %v618 = vld [vmem:[#allocation10 + $0x38] sm:$0xff]
        %620 = vset.pattern.permute.xlu0 0
        %621 = vperm.xlu0 %620, %v611
        %v622 = vpop.permute.xlu0 %621
        %625 = vset.pattern.permute.xlu0 0
        %626 = vperm.xlu0 %625, %v612
        %v627 = vpop.permute.xlu0 %626
        %630 = vset.pattern.permute.xlu0 0
        %631 = vperm.xlu0 %630, %v613
        %v632 = vpop.permute.xlu0 %631
        %635 = vset.pattern.permute.xlu0 0
        %636 = vperm.xlu0 %635, %v614
        %v637 = vpop.permute.xlu0 %636
        %640 = vset.pattern.permute.xlu0 0
        %641 = vperm.xlu0 %640, %v615
        %v642 = vpop.permute.xlu0 %641
        %645 = vset.pattern.permute.xlu0 0
        %646 = vperm.xlu0 %645, %v616
        %v647 = vpop.permute.xlu0 %646
        %650 = vset.pattern.permute.xlu0 0
        %651 = vperm.xlu0 %650, %v617
        %v652 = vpop.permute.xlu0 %651
        %655 = vset.pattern.permute.xlu0 0
        %656 = vperm.xlu0 %655, %v618
        %v657 = vpop.permute.xlu0 %656
        %v667 = vunpack.c.l.b16 %v601
        %v668 = vunpack.c.l.b16 %v602
        %v669 = vunpack.c.l.b16 %v603
        %v670 = vunpack.c.l.b16 %v604
        %v671 = vunpack.c.l.b16 %v605
        %v672 = vunpack.c.l.b16 %v606
        %v673 = vunpack.c.l.b16 %v607
        %v674 = vunpack.c.l.b16 %v608
        %v675 = vpack.c.b16 %v668, %v667
        %v676 = vpack.c.b16 %v670, %v669
        %v677 = vpack.c.b16 %v672, %v671
        %v678 = vpack.c.b16 %v674, %v673
        %vm679 = vcmask 130048
        %v681 = vsel %vm679, %v675, 0
        %v684 = vsel %vm679, %v676, 0
        %v687 = vsel %vm679, %v677, 0
        %v690 = vsel %vm679, %v678, 0
        %692 = vmatprep.subr.bf16.mxu0 %v610
        %693 = vmatpush1.bf16.msra.mxu0 %v609
        %694 = vmatprep.subr.bf16.mxu0 0
        %695 = vmatpush1.bf16.msra.mxu0 0
        %696 = vmatprep.subr.bf16.mxu0 0
        %697 = vmatpush1.bf16.msra.mxu0 0
        %698 = vmatprep.subr.bf16.mxu0 0
        %699 = vmatpush1.bf16.msra.mxu0 0
        %700 = vmatprep.subr.bf16.mxu0 0
        %701 = vmatpush1.bf16.msra.mxu0 0
        %702 = vmatprep.subr.bf16.mxu0 0
        %703 = vmatpush1.bf16.msra.mxu0 0
        %704 = vmatprep.subr.bf16.mxu0 0
        %705 = vmatpush1.bf16.msra.mxu0 0
        %706 = vmatprep.subr.bf16.mxu0 0
        %707 = vmatpush1.bf16.msra.mxu0 0
        %708 = vmatprep.subr.bf16.mxu0 0
        %709 = vmatpush1.bf16.msra.mxu0 0
        %710 = vmatprep.subr.bf16.mxu0 0
        %711 = vmatpush1.bf16.msra.mxu0 0
        %712 = vmatprep.subr.bf16.mxu0 0
        %713 = vmatpush1.bf16.msra.mxu0 0
        %714 = vmatprep.subr.bf16.mxu0 0
        %715 = vmatpush1.bf16.msra.mxu0 0
        %716 = vmatprep.subr.bf16.mxu0 0
        %717 = vmatpush1.bf16.msra.mxu0 0
        %718 = vmatprep.subr.bf16.mxu0 0
        %719 = vmatpush1.bf16.msra.mxu0 0
        %720 = vmatprep.subr.bf16.mxu0 0
        %721 = vmatpush1.bf16.msra.mxu0 0
        %722 = vmatprep.subr.bf16.mxu0 0
        %723 = vmatpush1.bf16.msra.mxu0 0
        %724 = vmatprep.mubr.bf16.mxu0 0
        %725 = vmatmul.mubr.bf16.gmra.mrb[0].mxu0 %v681
        %v726 = vpop.f32.mrb[0].mxu0
        %v727 = vadd.f32 %v622, %v726
        %v728 = vpop.f32.mrb[0].mxu0
        %v729 = vadd.f32 %v622, %v728
        %v730 = vpop.f32.mrb[0].mxu0
        %v731 = vadd.f32 %v627, %v730
        %v732 = vpop.f32.mrb[0].mxu0
        %v733 = vadd.f32 %v627, %v732
        %734 = vmatprep.mubr.bf16.mxu0 0
        %735 = vmatmul.mubr.bf16.gmra.mrb[0].mxu0 %v684
        %v736 = vpop.f32.mrb[0].mxu0
        %v737 = vadd.f32 %v632, %v736
        %v738 = vpop.f32.mrb[0].mxu0
        %v739 = vadd.f32 %v632, %v738
        %v740 = vpop.f32.mrb[0].mxu0
        %v741 = vadd.f32 %v637, %v740
        %v742 = vpop.f32.mrb[0].mxu0
        %v743 = vadd.f32 %v637, %v742
        %744 = vmatprep.mubr.bf16.mxu0 0
        %745 = vmatmul.mubr.bf16.gmra.mrb[0].mxu0 %v687
        %v746 = vpop.f32.mrb[0].mxu0
        %v747 = vadd.f32 %v642, %v746
        %v748 = vpop.f32.mrb[0].mxu0
        %v749 = vadd.f32 %v642, %v748
        %v750 = vpop.f32.mrb[0].mxu0
        %v751 = vadd.f32 %v647, %v750
        %v752 = vpop.f32.mrb[0].mxu0
        %v753 = vadd.f32 %v647, %v752
        %754 = vmatprep.mubr.bf16.mxu0 0
        %755 = vmatmul.mubr.bf16.gmra.mrb[0].mxu0 %v690
        %v756 = vpop.f32.mrb[0].mxu0
        %v757 = vadd.f32 %v652, %v756
        %v758 = vpop.f32.mrb[0].mxu0
        %v759 = vadd.f32 %v652, %v758
        %v760 = vpop.f32.mrb[0].mxu0
        %v761 = vadd.f32 %v657, %v760
        %v762 = vpop.f32.mrb[0].mxu0
        %v763 = vadd.f32 %v657, %v762
        %764 = vdwg.mxu0
        %v765 = vlaneseq
        %v766 = vand.u32 %v765, 127
        %v767 = vadd.s32 %v766, 128
        %vm768 = vcmp.lt.s32.totalorder %v766, 0
        %v769 = vsub.s32 0, %v766
        %v770 = vsel %vm768, %v769, %v766
        %v771 = vshrl.u32 %v770, 4
        %v772 = vand.u32 %v770, 15
        %v773 = vsub.s32 0, %v772
        %v774 = vsel %vm768, %v773, %v772
        %vm775 = vcmp.lt.s32.totalorder %v767, 0
        %v776 = vsub.s32 0, %v767
        %v777 = vsel %vm775, %v776, %v767
        %v778 = vshrl.u32 %v777, 4
        %v779 = vand.u32 %v777, 15
        %v780 = vsub.s32 0, %v779
        %v781 = vsel %vm775, %v780, %v779
        %vm782 = vcmp.ne.s32.totalorder %v774, 0
        %vm783 = vcmp.ne.s32.totalorder %v781, 0
        %vm784 = vcmp.lt.s32.totalorder %v774, 0
        %vm785 = vcmp.lt.s32.totalorder %v781, 0
        %vm786 = vmand %vm784, %vm782
        %vm787 = vmand %vm785, %vm783
        %v788 = vadd.s32 %v774, 16
        %v789 = vadd.s32 %v781, 16
        %v790 = vsel %vm786, %v788, %v774
        %v791 = vsel %vm787, %v789, %v781
        %vm792 = vcmp.ge.s32.totalorder %v790, 1
        %vm793 = vcmp.ge.s32.totalorder %v791, 1
        %794 = vrot.lane.b32.xlu0 %v727, 1
        %v795 = vpop.permute.xlu0 %794
        %796 = vrot.lane.b32.xlu0 %v731, 1
        %v797 = vpop.permute.xlu0 %796
        %798 = vrot.lane.b32.xlu0 %v737, 1
        %v799 = vpop.permute.xlu0 %798
        %800 = vrot.lane.b32.xlu0 %v741, 1
        %v801 = vpop.permute.xlu0 %800
        %802 = vrot.lane.b32.xlu0 %v747, 1
        %v803 = vpop.permute.xlu0 %802
        %804 = vrot.lane.b32.xlu0 %v751, 1
        %v805 = vpop.permute.xlu0 %804
        %806 = vrot.lane.b32.xlu0 %v757, 1
        %v807 = vpop.permute.xlu0 %806
        %808 = vrot.lane.b32.xlu0 %v761, 1
        %v809 = vpop.permute.xlu0 %808
        %810 = vrot.lane.b32.xlu0 %v729, 1
        %v811 = vpop.permute.xlu0 %810
        %812 = vrot.lane.b32.xlu0 %v733, 1
        %v813 = vpop.permute.xlu0 %812
        %814 = vrot.lane.b32.xlu0 %v739, 1
        %v815 = vpop.permute.xlu0 %814
        %816 = vrot.lane.b32.xlu0 %v743, 1
        %v817 = vpop.permute.xlu0 %816
        %818 = vrot.lane.b32.xlu0 %v749, 1
        %v819 = vpop.permute.xlu0 %818
        %820 = vrot.lane.b32.xlu0 %v753, 1
        %v821 = vpop.permute.xlu0 %820
        %822 = vrot.lane.b32.xlu0 %v759, 1
        %v823 = vpop.permute.xlu0 %822
        %824 = vrot.lane.b32.xlu0 %v763, 1
        %v825 = vpop.permute.xlu0 %824
        %vm826 = vcmp.lt.s32.totalorder %v766, 1
        %v827 = vsel %vm826, %v795, %v811
        %v828 = vsel %vm826, %v797, %v813
        %v829 = vsel %vm826, %v799, %v815
        %v830 = vsel %vm826, %v801, %v817
        %v831 = vsel %vm826, %v803, %v819
        %v832 = vsel %vm826, %v805, %v821
        %v833 = vsel %vm826, %v807, %v823
        %v834 = vsel %vm826, %v809, %v825
        %v835 = vsel %vm826, %v811, %v795
        %v836 = vsel %vm826, %v813, %v797
        %v837 = vsel %vm826, %v815, %v799
        %v838 = vsel %vm826, %v817, %v801
        %v839 = vsel %vm826, %v819, %v803
        %v840 = vsel %vm826, %v821, %v805
        %v841 = vsel %vm826, %v823, %v807
        %v842 = vsel %vm826, %v825, %v809
        %v843 = vsel %vm792, 1, 0
        %v844 = vsel %vm793, 1, 0
        %vm845 = vcmp.eq.s32.totalorder %v843, 1
        %vm846 = vcmp.eq.s32.totalorder %v844, 1
        %v847 = vsel %vm845, %v835, 0.0
        %v848 = vsel %vm846, %v827, 0.0
        %v849 = vsel %vm845, %v836, 0.0
        %v850 = vsel %vm846, %v828, 0.0
        %v851 = vsel %vm845, %v837, 0.0
        %v852 = vsel %vm846, %v829, 0.0
        %v853 = vsel %vm845, %v838, 0.0
        %v854 = vsel %vm846, %v830, 0.0
        %v855 = vsel %vm845, %v839, 0.0
        %v856 = vsel %vm846, %v831, 0.0
        %v857 = vsel %vm845, %v840, 0.0
        %v858 = vsel %vm846, %v832, 0.0
        %v859 = vsel %vm845, %v841, 0.0
        %v860 = vsel %vm846, %v833, 0.0
        %v861 = vsel %vm845, %v842, 0.0
        %v862 = vsel %vm846, %v834, 0.0
        %vm863 = vcmp.le.s32.totalorder %v790, 14
        %vm864 = vcmp.le.s32.totalorder %v791, 14
        %865 = vrot.lane.b32.xlu0 %v727, 127
        %v866 = vpop.permute.xlu0 %865
        %867 = vrot.lane.b32.xlu0 %v731, 127
        %v868 = vpop.permute.xlu0 %867
        %869 = vrot.lane.b32.xlu0 %v737, 127
        %v870 = vpop.permute.xlu0 %869
        %871 = vrot.lane.b32.xlu0 %v741, 127
        %v872 = vpop.permute.xlu0 %871
        %873 = vrot.lane.b32.xlu0 %v747, 127
        %v874 = vpop.permute.xlu0 %873
        %875 = vrot.lane.b32.xlu0 %v751, 127
        %v876 = vpop.permute.xlu0 %875
        %877 = vrot.lane.b32.xlu0 %v757, 127
        %v878 = vpop.permute.xlu0 %877
        %879 = vrot.lane.b32.xlu0 %v761, 127
        %v880 = vpop.permute.xlu0 %879
        %881 = vrot.lane.b32.xlu0 %v729, 127
        %v882 = vpop.permute.xlu0 %881
        %883 = vrot.lane.b32.xlu0 %v733, 127
        %v884 = vpop.permute.xlu0 %883
        %885 = vrot.lane.b32.xlu0 %v739, 127
        %v886 = vpop.permute.xlu0 %885
        %887 = vrot.lane.b32.xlu0 %v743, 127
        %v888 = vpop.permute.xlu0 %887
        %889 = vrot.lane.b32.xlu0 %v749, 127
        %v890 = vpop.permute.xlu0 %889
        %891 = vrot.lane.b32.xlu0 %v753, 127
        %v892 = vpop.permute.xlu0 %891
        %893 = vrot.lane.b32.xlu0 %v759, 127
        %v894 = vpop.permute.xlu0 %893
        %895 = vrot.lane.b32.xlu0 %v763, 127
        %v896 = vpop.permute.xlu0 %895
        %vm897 = vcmp.lt.s32.totalorder %v766, 127
        %v898 = vsel %vm897, %v866, %v882
        %v899 = vsel %vm897, %v868, %v884
        %v900 = vsel %vm897, %v870, %v886
        %v901 = vsel %vm897, %v872, %v888
        %v902 = vsel %vm897, %v874, %v890
        %v903 = vsel %vm897, %v876, %v892
        %v904 = vsel %vm897, %v878, %v894
        %v905 = vsel %vm897, %v880, %v896
        %v906 = vsel %vm897, %v882, %v866
        %v907 = vsel %vm897, %v884, %v868
        %v908 = vsel %vm897, %v886, %v870
        %v909 = vsel %vm897, %v888, %v872
        %v910 = vsel %vm897, %v890, %v874
        %v911 = vsel %vm897, %v892, %v876
        %v912 = vsel %vm897, %v894, %v878
        %v913 = vsel %vm897, %v896, %v880
        %v914 = vsel %vm863, 1, 0
        %v915 = vsel %vm864, 1, 0
        %vm916 = vcmp.eq.s32.totalorder %v914, 1
        %vm917 = vcmp.eq.s32.totalorder %v915, 1
        %v918 = vsel %vm916, %v898, 0.0
        %v919 = vsel %vm917, %v906, 0.0
        %v920 = vsel %vm916, %v899, 0.0
        %v921 = vsel %vm917, %v907, 0.0
        %v922 = vsel %vm916, %v900, 0.0
        %v923 = vsel %vm917, %v908, 0.0
        %v924 = vsel %vm916, %v901, 0.0
        %v925 = vsel %vm917, %v909, 0.0
        %v926 = vsel %vm916, %v902, 0.0
        %v927 = vsel %vm917, %v910, 0.0
        %v928 = vsel %vm916, %v903, 0.0
        %v929 = vsel %vm917, %v911, 0.0
        %v930 = vsel %vm916, %v904, 0.0
        %v931 = vsel %vm917, %v912, 0.0
        %v932 = vsel %vm916, %v905, 0.0
        %v933 = vsel %vm917, %v913, 0.0
        %v934 = vld [vmem:[#allocation11] sm:$0xff]
        %v935 = vld [vmem:[#allocation11 + $0x8] sm:$0xff]
        %v936 = vld [vmem:[#allocation11 + $0x10] sm:$0xff]
        %v937 = vld [vmem:[#allocation11 + $0x18] sm:$0xff]
        %v938 = vld [vmem:[#allocation11 + $0x20] sm:$0xff]
        %v939 = vld [vmem:[#allocation11 + $0x28] sm:$0xff]
        %v940 = vld [vmem:[#allocation11 + $0x30] sm:$0xff]
        %v941 = vld [vmem:[#allocation11 + $0x38] sm:$0xff]
        %v942 = vld [vmem:[#allocation11 + $0x40] sm:$0xff]
        %v943 = vld [vmem:[#allocation11 + $0x48] sm:$0xff]
        %v944 = vld [vmem:[#allocation11 + $0x50] sm:$0xff]
        %v945 = vld [vmem:[#allocation11 + $0x58] sm:$0xff]
        %v946 = vld [vmem:[#allocation11 + $0x60] sm:$0xff]
        %v947 = vld [vmem:[#allocation11 + $0x68] sm:$0xff]
        %v948 = vld [vmem:[#allocation11 + $0x70] sm:$0xff]
        %v949 = vld [vmem:[#allocation11 + $0x78] sm:$0xff]
        %v950 = vld [vmem:[#allocation11 + $0x80] sm:$0xff]
        %v951 = vld [vmem:[#allocation11 + $0x88] sm:$0xff]
        %v952 = vld [vmem:[#allocation11 + $0x90] sm:$0xff]
        %v953 = vld [vmem:[#allocation11 + $0x98] sm:$0xff]
        %v954 = vld [vmem:[#allocation11 + $0xa0] sm:$0xff]
        %v955 = vld [vmem:[#allocation11 + $0xa8] sm:$0xff]
        %v956 = vld [vmem:[#allocation11 + $0xb0] sm:$0xff]
        %v957 = vld [vmem:[#allocation11 + $0xb8] sm:$0xff]
        %v958 = vld [vmem:[#allocation11 + $0xc0] sm:$0xff]
        %v959 = vld [vmem:[#allocation11 + $0xc8] sm:$0xff]
        %v960 = vld [vmem:[#allocation11 + $0xd0] sm:$0xff]
        %v961 = vld [vmem:[#allocation11 + $0xd8] sm:$0xff]
        %v962 = vld [vmem:[#allocation11 + $0xe0] sm:$0xff]
        %v963 = vld [vmem:[#allocation11 + $0xe8] sm:$0xff]
        %v964 = vld [vmem:[#allocation11 + $0xf0] sm:$0xff]
        %v965 = vld [vmem:[#allocation11 + $0xf8] sm:$0xff]
        %v966 = vld [vmem:[#allocation11 + $0x100] sm:$0xff]
        %v967 = vld [vmem:[#allocation11 + $0x108] sm:$0xff]
        %v968 = vld [vmem:[#allocation11 + $0x110] sm:$0xff]
        %v969 = vld [vmem:[#allocation11 + $0x118] sm:$0xff]
        %v970 = vld [vmem:[#allocation11 + $0x120] sm:$0xff]
        %v971 = vld [vmem:[#allocation11 + $0x128] sm:$0xff]
        %v972 = vld [vmem:[#allocation11 + $0x130] sm:$0xff]
        %v973 = vld [vmem:[#allocation11 + $0x138] sm:$0xff]
        %v974 = vld [vmem:[#allocation11 + $0x140] sm:$0xff]
        %v975 = vld [vmem:[#allocation11 + $0x148] sm:$0xff]
        %v976 = vld [vmem:[#allocation11 + $0x150] sm:$0xff]
        %v977 = vld [vmem:[#allocation11 + $0x158] sm:$0xff]
        %v978 = vld [vmem:[#allocation11 + $0x160] sm:$0xff]
        %v979 = vld [vmem:[#allocation11 + $0x168] sm:$0xff]
        %v980 = vld [vmem:[#allocation11 + $0x170] sm:$0xff]
        %v981 = vld [vmem:[#allocation11 + $0x178] sm:$0xff]
        %v982 = vld [vmem:[#allocation11 + $0x180] sm:$0xff]
        %v983 = vld [vmem:[#allocation11 + $0x188] sm:$0xff]
        %v984 = vld [vmem:[#allocation11 + $0x190] sm:$0xff]
        %v985 = vld [vmem:[#allocation11 + $0x198] sm:$0xff]
        %v986 = vld [vmem:[#allocation11 + $0x1a0] sm:$0xff]
        %v987 = vld [vmem:[#allocation11 + $0x1a8] sm:$0xff]
        %v988 = vld [vmem:[#allocation11 + $0x1b0] sm:$0xff]
        %v989 = vld [vmem:[#allocation11 + $0x1b8] sm:$0xff]
        %v990 = vld [vmem:[#allocation11 + $0x1c0] sm:$0xff]
        %v991 = vld [vmem:[#allocation11 + $0x1c8] sm:$0xff]
        %v992 = vld [vmem:[#allocation11 + $0x1d0] sm:$0xff]
        %v993 = vld [vmem:[#allocation11 + $0x1d8] sm:$0xff]
        %v994 = vld [vmem:[#allocation11 + $0x1e0] sm:$0xff]
        %v995 = vld [vmem:[#allocation11 + $0x1e8] sm:$0xff]
        %v996 = vld [vmem:[#allocation11 + $0x1f0] sm:$0xff]
        %v997 = vld [vmem:[#allocation11 + $0x1f8] sm:$0xff]
        %v998 = vld [vmem:[#allocation11 + $0x200] sm:$0xff]
        %v999 = vld [vmem:[#allocation11 + $0x208] sm:$0xff]
        %v1000 = vld [vmem:[#allocation11 + $0x210] sm:$0xff]
        %v1001 = vld [vmem:[#allocation11 + $0x218] sm:$0xff]
        %v1002 = vld [vmem:[#allocation11 + $0x220] sm:$0xff]
        %v1003 = vld [vmem:[#allocation11 + $0x228] sm:$0xff]
        %v1004 = vld [vmem:[#allocation11 + $0x230] sm:$0xff]
        %v1005 = vld [vmem:[#allocation11 + $0x238] sm:$0xff]
        %1007 = vset.pattern.permute.xlu0 0
        %1008 = vperm.xlu0 %1007, %v934
        %v1009 = vpop.permute.xlu0 %1008
        %1012 = vset.pattern.permute.xlu0 0
        %1013 = vperm.xlu0 %1012, %v935
        %v1014 = vpop.permute.xlu0 %1013
        %1017 = vset.pattern.permute.xlu0 0
        %1018 = vperm.xlu0 %1017, %v936
        %v1019 = vpop.permute.xlu0 %1018
        %1022 = vset.pattern.permute.xlu0 0
        %1023 = vperm.xlu0 %1022, %v937
        %v1024 = vpop.permute.xlu0 %1023
        %1027 = vset.pattern.permute.xlu0 0
        %1028 = vperm.xlu0 %1027, %v938
        %v1029 = vpop.permute.xlu0 %1028
        %1032 = vset.pattern.permute.xlu0 0
        %1033 = vperm.xlu0 %1032, %v939
        %v1034 = vpop.permute.xlu0 %1033
        %1037 = vset.pattern.permute.xlu0 0
        %1038 = vperm.xlu0 %1037, %v940
        %v1039 = vpop.permute.xlu0 %1038
        %1042 = vset.pattern.permute.xlu0 0
        %1043 = vperm.xlu0 %1042, %v941
        %v1044 = vpop.permute.xlu0 %1043
        %v1046 = vmul.f32 %v847, %v1009
        %v1047 = vmul.f32 %v848, %v1009
        %v1048 = vmul.f32 %v849, %v1014
        %v1049 = vmul.f32 %v850, %v1014
        %v1050 = vmul.f32 %v851, %v1019
        %v1051 = vmul.f32 %v852, %v1019
        %v1052 = vmul.f32 %v853, %v1024
        %v1053 = vmul.f32 %v854, %v1024
        %v1054 = vmul.f32 %v855, %v1029
        %v1055 = vmul.f32 %v856, %v1029
        %v1056 = vmul.f32 %v857, %v1034
        %v1057 = vmul.f32 %v858, %v1034
        %v1058 = vmul.f32 %v859, %v1039
        %v1059 = vmul.f32 %v860, %v1039
        %v1060 = vmul.f32 %v861, %v1044
        %v1061 = vmul.f32 %v862, %v1044
        %1063 = vset.pattern.permute.xlu0 0
        %1064 = vperm.xlu0 %1063, %v942
        %v1065 = vpop.permute.xlu0 %1064
        %1068 = vset.pattern.permute.xlu0 0
        %1069 = vperm.xlu0 %1068, %v943
        %v1070 = vpop.permute.xlu0 %1069
        %1073 = vset.pattern.permute.xlu0 0
        %1074 = vperm.xlu0 %1073, %v944
        %v1075 = vpop.permute.xlu0 %1074
        %1078 = vset.pattern.permute.xlu0 0
        %1079 = vperm.xlu0 %1078, %v945
        %v1080 = vpop.permute.xlu0 %1079
        %1083 = vset.pattern.permute.xlu0 0
        %1084 = vperm.xlu0 %1083, %v946
        %v1085 = vpop.permute.xlu0 %1084
        %1088 = vset.pattern.permute.xlu0 0
        %1089 = vperm.xlu0 %1088, %v947
        %v1090 = vpop.permute.xlu0 %1089
        %1093 = vset.pattern.permute.xlu0 0
        %1094 = vperm.xlu0 %1093, %v948
        %v1095 = vpop.permute.xlu0 %1094
        %1098 = vset.pattern.permute.xlu0 0
        %1099 = vperm.xlu0 %1098, %v949
        %v1100 = vpop.permute.xlu0 %1099
        %v1102 = vmul.f32 %v727, %v1065
        %v1103 = vmul.f32 %v729, %v1065
        %v1104 = vmul.f32 %v731, %v1070
        %v1105 = vmul.f32 %v733, %v1070
        %v1106 = vmul.f32 %v737, %v1075
        %v1107 = vmul.f32 %v739, %v1075
        %v1108 = vmul.f32 %v741, %v1080
        %v1109 = vmul.f32 %v743, %v1080
        %v1110 = vmul.f32 %v747, %v1085
        %v1111 = vmul.f32 %v749, %v1085
        %v1112 = vmul.f32 %v751, %v1090
        %v1113 = vmul.f32 %v753, %v1090
        %v1114 = vmul.f32 %v757, %v1095
        %v1115 = vmul.f32 %v759, %v1095
        %v1116 = vmul.f32 %v761, %v1100
        %v1117 = vmul.f32 %v763, %v1100
        %v1118 = vadd.f32 %v1046, %v1102
        %v1119 = vadd.f32 %v1047, %v1103
        %v1120 = vadd.f32 %v1048, %v1104
        %v1121 = vadd.f32 %v1049, %v1105
        %v1122 = vadd.f32 %v1050, %v1106
        %v1123 = vadd.f32 %v1051, %v1107
        %v1124 = vadd.f32 %v1052, %v1108
        %v1125 = vadd.f32 %v1053, %v1109
        %v1126 = vadd.f32 %v1054, %v1110
        %v1127 = vadd.f32 %v1055, %v1111
        %v1128 = vadd.f32 %v1056, %v1112
        %v1129 = vadd.f32 %v1057, %v1113
        %v1130 = vadd.f32 %v1058, %v1114
        %v1131 = vadd.f32 %v1059, %v1115
        %v1132 = vadd.f32 %v1060, %v1116
        %v1133 = vadd.f32 %v1061, %v1117
        %1135 = vset.pattern.permute.xlu0 0
        %1136 = vperm.xlu0 %1135, %v950
        %v1137 = vpop.permute.xlu0 %1136
        %1140 = vset.pattern.permute.xlu0 0
        %1141 = vperm.xlu0 %1140, %v951
        %v1142 = vpop.permute.xlu0 %1141
        %1145 = vset.pattern.permute.xlu0 0
        %1146 = vperm.xlu0 %1145, %v952
        %v1147 = vpop.permute.xlu0 %1146
        %1150 = vset.pattern.permute.xlu0 0
        %1151 = vperm.xlu0 %1150, %v953
        %v1152 = vpop.permute.xlu0 %1151
        %1155 = vset.pattern.permute.xlu0 0
        %1156 = vperm.xlu0 %1155, %v954
        %v1157 = vpop.permute.xlu0 %1156
        %1160 = vset.pattern.permute.xlu0 0
        %1161 = vperm.xlu0 %1160, %v955
        %v1162 = vpop.permute.xlu0 %1161
        %1165 = vset.pattern.permute.xlu0 0
        %1166 = vperm.xlu0 %1165, %v956
        %v1167 = vpop.permute.xlu0 %1166
        %1170 = vset.pattern.permute.xlu0 0
        %1171 = vperm.xlu0 %1170, %v957
        %v1172 = vpop.permute.xlu0 %1171
        %v1174 = vmul.f32 %v918, %v1137
        %v1175 = vmul.f32 %v919, %v1137
        %v1176 = vmul.f32 %v920, %v1142
        %v1177 = vmul.f32 %v921, %v1142
        %v1178 = vmul.f32 %v922, %v1147
        %v1179 = vmul.f32 %v923, %v1147
        %v1180 = vmul.f32 %v924, %v1152
        %v1181 = vmul.f32 %v925, %v1152
        %v1182 = vmul.f32 %v926, %v1157
        %v1183 = vmul.f32 %v927, %v1157
        %v1184 = vmul.f32 %v928, %v1162
        %v1185 = vmul.f32 %v929, %v1162
        %v1186 = vmul.f32 %v930, %v1167
        %v1187 = vmul.f32 %v931, %v1167
        %v1188 = vmul.f32 %v932, %v1172
        %v1189 = vmul.f32 %v933, %v1172
        %v1190 = vadd.f32 %v1118, %v1174
        %v1191 = vadd.f32 %v1119, %v1175
        %v1192 = vadd.f32 %v1120, %v1176
        %v1193 = vadd.f32 %v1121, %v1177
        %v1194 = vadd.f32 %v1122, %v1178
        %v1195 = vadd.f32 %v1123, %v1179
        %v1196 = vadd.f32 %v1124, %v1180
        %v1197 = vadd.f32 %v1125, %v1181
        %v1198 = vadd.f32 %v1126, %v1182
        %v1199 = vadd.f32 %v1127, %v1183
        %v1200 = vadd.f32 %v1128, %v1184
        %v1201 = vadd.f32 %v1129, %v1185
        %v1202 = vadd.f32 %v1130, %v1186
        %v1203 = vadd.f32 %v1131, %v1187
        %v1204 = vadd.f32 %v1132, %v1188
        %v1205 = vadd.f32 %v1133, %v1189
        %1207 = vset.pattern.permute.xlu0 0
        %1208 = vperm.xlu0 %1207, %v958
        %v1209 = vpop.permute.xlu0 %1208
        %1212 = vset.pattern.permute.xlu0 0
        %1213 = vperm.xlu0 %1212, %v959
        %v1214 = vpop.permute.xlu0 %1213
        %1217 = vset.pattern.permute.xlu0 0
        %1218 = vperm.xlu0 %1217, %v960
        %v1219 = vpop.permute.xlu0 %1218
        %1222 = vset.pattern.permute.xlu0 0
        %1223 = vperm.xlu0 %1222, %v961
        %v1224 = vpop.permute.xlu0 %1223
        %1227 = vset.pattern.permute.xlu0 0
        %1228 = vperm.xlu0 %1227, %v962
        %v1229 = vpop.permute.xlu0 %1228
        %1232 = vset.pattern.permute.xlu0 0
        %1233 = vperm.xlu0 %1232, %v963
        %v1234 = vpop.permute.xlu0 %1233
        %1237 = vset.pattern.permute.xlu0 0
        %1238 = vperm.xlu0 %1237, %v964
        %v1239 = vpop.permute.xlu0 %1238
        %1242 = vset.pattern.permute.xlu0 0
        %1243 = vperm.xlu0 %1242, %v965
        %v1244 = vpop.permute.xlu0 %1243
        %v1246 = vmul.f32 %v847, %v1209
        %v1247 = vmul.f32 %v848, %v1209
        %v1248 = vmul.f32 %v849, %v1214
        %v1249 = vmul.f32 %v850, %v1214
        %v1250 = vmul.f32 %v851, %v1219
        %v1251 = vmul.f32 %v852, %v1219
        %v1252 = vmul.f32 %v853, %v1224
        %v1253 = vmul.f32 %v854, %v1224
        %v1254 = vmul.f32 %v855, %v1229
        %v1255 = vmul.f32 %v856, %v1229
        %v1256 = vmul.f32 %v857, %v1234
        %v1257 = vmul.f32 %v858, %v1234
        %v1258 = vmul.f32 %v859, %v1239
        %v1259 = vmul.f32 %v860, %v1239
        %v1260 = vmul.f32 %v861, %v1244
        %v1261 = vmul.f32 %v862, %v1244
        %1263 = vset.pattern.permute.xlu0 0
        %1264 = vperm.xlu0 %1263, %v966
        %v1265 = vpop.permute.xlu0 %1264
        %1268 = vset.pattern.permute.xlu0 0
        %1269 = vperm.xlu0 %1268, %v967
        %v1270 = vpop.permute.xlu0 %1269
        %1273 = vset.pattern.permute.xlu0 0
        %1274 = vperm.xlu0 %1273, %v968
        %v1275 = vpop.permute.xlu0 %1274
        %1278 = vset.pattern.permute.xlu0 0
        %1279 = vperm.xlu0 %1278, %v969
        %v1280 = vpop.permute.xlu0 %1279
        %1283 = vset.pattern.permute.xlu0 0
        %1284 = vperm.xlu0 %1283, %v970
        %v1285 = vpop.permute.xlu0 %1284
        %1288 = vset.pattern.permute.xlu0 0
        %1289 = vperm.xlu0 %1288, %v971
        %v1290 = vpop.permute.xlu0 %1289
        %1293 = vset.pattern.permute.xlu0 0
        %1294 = vperm.xlu0 %1293, %v972
        %v1295 = vpop.permute.xlu0 %1294
        %1298 = vset.pattern.permute.xlu0 0
        %1299 = vperm.xlu0 %1298, %v973
        %v1300 = vpop.permute.xlu0 %1299
        %v1302 = vmul.f32 %v727, %v1265
        %v1303 = vmul.f32 %v729, %v1265
        %v1304 = vmul.f32 %v731, %v1270
        %v1305 = vmul.f32 %v733, %v1270
        %v1306 = vmul.f32 %v737, %v1275
        %v1307 = vmul.f32 %v739, %v1275
        %v1308 = vmul.f32 %v741, %v1280
        %v1309 = vmul.f32 %v743, %v1280
        %v1310 = vmul.f32 %v747, %v1285
        %v1311 = vmul.f32 %v749, %v1285
        %v1312 = vmul.f32 %v751, %v1290
        %v1313 = vmul.f32 %v753, %v1290
        %v1314 = vmul.f32 %v757, %v1295
        %v1315 = vmul.f32 %v759, %v1295
        %v1316 = vmul.f32 %v761, %v1300
        %v1317 = vmul.f32 %v763, %v1300
        %v1318 = vadd.f32 %v1246, %v1302
        %v1319 = vadd.f32 %v1247, %v1303
        %v1320 = vadd.f32 %v1248, %v1304
        %v1321 = vadd.f32 %v1249, %v1305
        %v1322 = vadd.f32 %v1250, %v1306
        %v1323 = vadd.f32 %v1251, %v1307
        %v1324 = vadd.f32 %v1252, %v1308
        %v1325 = vadd.f32 %v1253, %v1309
        %v1326 = vadd.f32 %v1254, %v1310
        %v1327 = vadd.f32 %v1255, %v1311
        %v1328 = vadd.f32 %v1256, %v1312
        %v1329 = vadd.f32 %v1257, %v1313
        %v1330 = vadd.f32 %v1258, %v1314
        %v1331 = vadd.f32 %v1259, %v1315
        %v1332 = vadd.f32 %v1260, %v1316
        %v1333 = vadd.f32 %v1261, %v1317
        %1335 = vset.pattern.permute.xlu0 0
        %1336 = vperm.xlu0 %1335, %v974
        %v1337 = vpop.permute.xlu0 %1336
        %1340 = vset.pattern.permute.xlu0 0
        %1341 = vperm.xlu0 %1340, %v975
        %v1342 = vpop.permute.xlu0 %1341
        %1345 = vset.pattern.permute.xlu0 0
        %1346 = vperm.xlu0 %1345, %v976
        %v1347 = vpop.permute.xlu0 %1346
        %1350 = vset.pattern.permute.xlu0 0
        %1351 = vperm.xlu0 %1350, %v977
        %v1352 = vpop.permute.xlu0 %1351
        %1355 = vset.pattern.permute.xlu0 0
        %1356 = vperm.xlu0 %1355, %v978
        %v1357 = vpop.permute.xlu0 %1356
        %1360 = vset.pattern.permute.xlu0 0
        %1361 = vperm.xlu0 %1360, %v979
        %v1362 = vpop.permute.xlu0 %1361
        %1365 = vset.pattern.permute.xlu0 0
        %1366 = vperm.xlu0 %1365, %v980
        %v1367 = vpop.permute.xlu0 %1366
        %1370 = vset.pattern.permute.xlu0 0
        %1371 = vperm.xlu0 %1370, %v981
        %v1372 = vpop.permute.xlu0 %1371
        %v1374 = vmul.f32 %v918, %v1337
        %v1375 = vmul.f32 %v919, %v1337
        %v1376 = vmul.f32 %v920, %v1342
        %v1377 = vmul.f32 %v921, %v1342
        %v1378 = vmul.f32 %v922, %v1347
        %v1379 = vmul.f32 %v923, %v1347
        %v1380 = vmul.f32 %v924, %v1352
        %v1381 = vmul.f32 %v925, %v1352
        %v1382 = vmul.f32 %v926, %v1357
        %v1383 = vmul.f32 %v927, %v1357
        %v1384 = vmul.f32 %v928, %v1362
        %v1385 = vmul.f32 %v929, %v1362
        %v1386 = vmul.f32 %v930, %v1367
        %v1387 = vmul.f32 %v931, %v1367
        %v1388 = vmul.f32 %v932, %v1372
        %v1389 = vmul.f32 %v933, %v1372
        %v1390 = vadd.f32 %v1318, %v1374
        %v1391 = vadd.f32 %v1319, %v1375
        %v1392 = vadd.f32 %v1320, %v1376
        %v1393 = vadd.f32 %v1321, %v1377
        %v1394 = vadd.f32 %v1322, %v1378
        %v1395 = vadd.f32 %v1323, %v1379
        %v1396 = vadd.f32 %v1324, %v1380
        %v1397 = vadd.f32 %v1325, %v1381
        %v1398 = vadd.f32 %v1326, %v1382
        %v1399 = vadd.f32 %v1327, %v1383
        %v1400 = vadd.f32 %v1328, %v1384
        %v1401 = vadd.f32 %v1329, %v1385
        %v1402 = vadd.f32 %v1330, %v1386
        %v1403 = vadd.f32 %v1331, %v1387
        %v1404 = vadd.f32 %v1332, %v1388
        %v1405 = vadd.f32 %v1333, %v1389
        %1407 = vset.pattern.permute.xlu0 0
        %1408 = vperm.xlu0 %1407, %v982
        %v1409 = vpop.permute.xlu0 %1408
        %1412 = vset.pattern.permute.xlu0 0
        %1413 = vperm.xlu0 %1412, %v983
        %v1414 = vpop.permute.xlu0 %1413
        %1417 = vset.pattern.permute.xlu0 0
        %1418 = vperm.xlu0 %1417, %v984
        %v1419 = vpop.permute.xlu0 %1418
        %1422 = vset.pattern.permute.xlu0 0
        %1423 = vperm.xlu0 %1422, %v985
        %v1424 = vpop.permute.xlu0 %1423
        %1427 = vset.pattern.permute.xlu0 0
        %1428 = vperm.xlu0 %1427, %v986
        %v1429 = vpop.permute.xlu0 %1428
        %1432 = vset.pattern.permute.xlu0 0
        %1433 = vperm.xlu0 %1432, %v987
        %v1434 = vpop.permute.xlu0 %1433
        %1437 = vset.pattern.permute.xlu0 0
        %1438 = vperm.xlu0 %1437, %v988
        %v1439 = vpop.permute.xlu0 %1438
        %1442 = vset.pattern.permute.xlu0 0
        %1443 = vperm.xlu0 %1442, %v989
        %v1444 = vpop.permute.xlu0 %1443
        %v1446 = vmul.f32 %v847, %v1409
        %v1447 = vmul.f32 %v848, %v1409
        %v1448 = vmul.f32 %v849, %v1414
        %v1449 = vmul.f32 %v850, %v1414
        %v1450 = vmul.f32 %v851, %v1419
        %v1451 = vmul.f32 %v852, %v1419
        %v1452 = vmul.f32 %v853, %v1424
        %v1453 = vmul.f32 %v854, %v1424
        %v1454 = vmul.f32 %v855, %v1429
        %v1455 = vmul.f32 %v856, %v1429
        %v1456 = vmul.f32 %v857, %v1434
        %v1457 = vmul.f32 %v858, %v1434
        %v1458 = vmul.f32 %v859, %v1439
        %v1459 = vmul.f32 %v860, %v1439
        %v1460 = vmul.f32 %v861, %v1444
        %v1461 = vmul.f32 %v862, %v1444
        %1463 = vset.pattern.permute.xlu0 0
        %1464 = vperm.xlu0 %1463, %v990
        %v1465 = vpop.permute.xlu0 %1464
        %1468 = vset.pattern.permute.xlu0 0
        %1469 = vperm.xlu0 %1468, %v991
        %v1470 = vpop.permute.xlu0 %1469
        %1473 = vset.pattern.permute.xlu0 0
        %1474 = vperm.xlu0 %1473, %v992
        %v1475 = vpop.permute.xlu0 %1474
        %1478 = vset.pattern.permute.xlu0 0
        %1479 = vperm.xlu0 %1478, %v993
        %v1480 = vpop.permute.xlu0 %1479
        %1483 = vset.pattern.permute.xlu0 0
        %1484 = vperm.xlu0 %1483, %v994
        %v1485 = vpop.permute.xlu0 %1484
        %1488 = vset.pattern.permute.xlu0 0
        %1489 = vperm.xlu0 %1488, %v995
        %v1490 = vpop.permute.xlu0 %1489
        %1493 = vset.pattern.permute.xlu0 0
        %1494 = vperm.xlu0 %1493, %v996
        %v1495 = vpop.permute.xlu0 %1494
        %1498 = vset.pattern.permute.xlu0 0
        %1499 = vperm.xlu0 %1498, %v997
        %v1500 = vpop.permute.xlu0 %1499
        %v1502 = vmul.f32 %v727, %v1465
        %v1503 = vmul.f32 %v729, %v1465
        %v1504 = vmul.f32 %v731, %v1470
        %v1505 = vmul.f32 %v733, %v1470
        %v1506 = vmul.f32 %v737, %v1475
        %v1507 = vmul.f32 %v739, %v1475
        %v1508 = vmul.f32 %v741, %v1480
        %v1509 = vmul.f32 %v743, %v1480
        %v1510 = vmul.f32 %v747, %v1485
        %v1511 = vmul.f32 %v749, %v1485
        %v1512 = vmul.f32 %v751, %v1490
        %v1513 = vmul.f32 %v753, %v1490
        %v1514 = vmul.f32 %v757, %v1495
        %v1515 = vmul.f32 %v759, %v1495
        %v1516 = vmul.f32 %v761, %v1500
        %v1517 = vmul.f32 %v763, %v1500
        %v1518 = vadd.f32 %v1446, %v1502
        %v1519 = vadd.f32 %v1447, %v1503
        %v1520 = vadd.f32 %v1448, %v1504
        %v1521 = vadd.f32 %v1449, %v1505
        %v1522 = vadd.f32 %v1450, %v1506
        %v1523 = vadd.f32 %v1451, %v1507
        %v1524 = vadd.f32 %v1452, %v1508
        %v1525 = vadd.f32 %v1453, %v1509
        %v1526 = vadd.f32 %v1454, %v1510
        %v1527 = vadd.f32 %v1455, %v1511
        %v1528 = vadd.f32 %v1456, %v1512
        %v1529 = vadd.f32 %v1457, %v1513
        %v1530 = vadd.f32 %v1458, %v1514
        %v1531 = vadd.f32 %v1459, %v1515
        %v1532 = vadd.f32 %v1460, %v1516
        %v1533 = vadd.f32 %v1461, %v1517
        %1535 = vset.pattern.permute.xlu0 0
        %1536 = vperm.xlu0 %1535, %v998
        %v1537 = vpop.permute.xlu0 %1536
        %1540 = vset.pattern.permute.xlu0 0
        %1541 = vperm.xlu0 %1540, %v999
        %v1542 = vpop.permute.xlu0 %1541
        %1545 = vset.pattern.permute.xlu0 0
        %1546 = vperm.xlu0 %1545, %v1000
        %v1547 = vpop.permute.xlu0 %1546
        %1550 = vset.pattern.permute.xlu0 0
        %1551 = vperm.xlu0 %1550, %v1001
        %v1552 = vpop.permute.xlu0 %1551
        %1555 = vset.pattern.permute.xlu0 0
        %1556 = vperm.xlu0 %1555, %v1002
        %v1557 = vpop.permute.xlu0 %1556
        %1560 = vset.pattern.permute.xlu0 0
        %1561 = vperm.xlu0 %1560, %v1003
        %v1562 = vpop.permute.xlu0 %1561
        %1565 = vset.pattern.permute.xlu0 0
        %1566 = vperm.xlu0 %1565, %v1004
        %v1567 = vpop.permute.xlu0 %1566
        %1570 = vset.pattern.permute.xlu0 0
        %1571 = vperm.xlu0 %1570, %v1005
        %v1572 = vpop.permute.xlu0 %1571
        %v1574 = vmul.f32 %v918, %v1537
        %v1575 = vmul.f32 %v919, %v1537
        %v1576 = vmul.f32 %v920, %v1542
        %v1577 = vmul.f32 %v921, %v1542
        %v1578 = vmul.f32 %v922, %v1547
        %v1579 = vmul.f32 %v923, %v1547
        %v1580 = vmul.f32 %v924, %v1552
        %v1581 = vmul.f32 %v925, %v1552
        %v1582 = vmul.f32 %v926, %v1557
        %v1583 = vmul.f32 %v927, %v1557
        %v1584 = vmul.f32 %v928, %v1562
        %v1585 = vmul.f32 %v929, %v1562
        %v1586 = vmul.f32 %v930, %v1567
        %v1587 = vmul.f32 %v931, %v1567
        %v1588 = vmul.f32 %v932, %v1572
        %v1589 = vmul.f32 %v933, %v1572
        %v1590 = vadd.f32 %v1518, %v1574
        %v1591 = vadd.f32 %v1519, %v1575
        %v1592 = vadd.f32 %v1520, %v1576
        %v1593 = vadd.f32 %v1521, %v1577
        %v1594 = vadd.f32 %v1522, %v1578
        %v1595 = vadd.f32 %v1523, %v1579
        %v1596 = vadd.f32 %v1524, %v1580
        %v1597 = vadd.f32 %v1525, %v1581
        %v1598 = vadd.f32 %v1526, %v1582
        %v1599 = vadd.f32 %v1527, %v1583
        %v1600 = vadd.f32 %v1528, %v1584
        %v1601 = vadd.f32 %v1529, %v1585
        %v1602 = vadd.f32 %v1530, %v1586
        %v1603 = vadd.f32 %v1531, %v1587
        %v1604 = vadd.f32 %v1532, %v1588
        %v1605 = vadd.f32 %v1533, %v1589
        %vm1606 = vcmp.ge.s32.totalorder %v766, 16
        %vm1607 = vcmp.ge.s32.totalorder %v767, 16
        %1608 = vrot.lane.b32.xlu0 %v1190, 16
        %v1609 = vpop.permute.xlu0 %1608
        %1610 = vrot.lane.b32.xlu0 %v1192, 16
        %v1611 = vpop.permute.xlu0 %1610
        %1612 = vrot.lane.b32.xlu0 %v1194, 16
        %v1613 = vpop.permute.xlu0 %1612
        %1614 = vrot.lane.b32.xlu0 %v1196, 16
        %v1615 = vpop.permute.xlu0 %1614
        %1616 = vrot.lane.b32.xlu0 %v1198, 16
        %v1617 = vpop.permute.xlu0 %1616
        %1618 = vrot.lane.b32.xlu0 %v1200, 16
        %v1619 = vpop.permute.xlu0 %1618
        %1620 = vrot.lane.b32.xlu0 %v1202, 16
        %v1621 = vpop.permute.xlu0 %1620
        %1622 = vrot.lane.b32.xlu0 %v1204, 16
        %v1623 = vpop.permute.xlu0 %1622
        %1624 = vrot.lane.b32.xlu0 %v1191, 16
        %v1625 = vpop.permute.xlu0 %1624
        %1626 = vrot.lane.b32.xlu0 %v1193, 16
        %v1627 = vpop.permute.xlu0 %1626
        %1628 = vrot.lane.b32.xlu0 %v1195, 16
        %v1629 = vpop.permute.xlu0 %1628
        %1630 = vrot.lane.b32.xlu0 %v1197, 16
        %v1631 = vpop.permute.xlu0 %1630
        %1632 = vrot.lane.b32.xlu0 %v1199, 16
        %v1633 = vpop.permute.xlu0 %1632
        %1634 = vrot.lane.b32.xlu0 %v1201, 16
        %v1635 = vpop.permute.xlu0 %1634
        %1636 = vrot.lane.b32.xlu0 %v1203, 16
        %v1637 = vpop.permute.xlu0 %1636
        %1638 = vrot.lane.b32.xlu0 %v1205, 16
        %v1639 = vpop.permute.xlu0 %1638
        %vm1640 = vcmp.lt.s32.totalorder %v766, 16
        %v1641 = vsel %vm1640, %v1609, %v1625
        %v1642 = vsel %vm1640, %v1611, %v1627
        %v1643 = vsel %vm1640, %v1613, %v1629
        %v1644 = vsel %vm1640, %v1615, %v1631
        %v1645 = vsel %vm1640, %v1617, %v1633
        %v1646 = vsel %vm1640, %v1619, %v1635
        %v1647 = vsel %vm1640, %v1621, %v1637
        %v1648 = vsel %vm1640, %v1623, %v1639
        %v1649 = vsel %vm1640, %v1625, %v1609
        %v1650 = vsel %vm1640, %v1627, %v1611
        %v1651 = vsel %vm1640, %v1629, %v1613
        %v1652 = vsel %vm1640, %v1631, %v1615
        %v1653 = vsel %vm1640, %v1633, %v1617
        %v1654 = vsel %vm1640, %v1635, %v1619
        %v1655 = vsel %vm1640, %v1637, %v1621
        %v1656 = vsel %vm1640, %v1639, %v1623
        %v1657 = vsel %vm1606, 1, 0
        %v1658 = vsel %vm1607, 1, 0
        %vm1659 = vcmp.eq.s32.totalorder %v1657, 1
        %vm1660 = vcmp.eq.s32.totalorder %v1658, 1
        %v1661 = vsel %vm1659, %v1649, 0.0
        %v1662 = vsel %vm1660, %v1641, 0.0
        %v1663 = vsel %vm1659, %v1650, 0.0
        %v1664 = vsel %vm1660, %v1642, 0.0
        %v1665 = vsel %vm1659, %v1651, 0.0
        %v1666 = vsel %vm1660, %v1643, 0.0
        %v1667 = vsel %vm1659, %v1652, 0.0
        %v1668 = vsel %vm1660, %v1644, 0.0
        %v1669 = vsel %vm1659, %v1653, 0.0
        %v1670 = vsel %vm1660, %v1645, 0.0
        %v1671 = vsel %vm1659, %v1654, 0.0
        %v1672 = vsel %vm1660, %v1646, 0.0
        %v1673 = vsel %vm1659, %v1655, 0.0
        %v1674 = vsel %vm1660, %v1647, 0.0
        %v1675 = vsel %vm1659, %v1656, 0.0
        %v1676 = vsel %vm1660, %v1648, 0.0
        %vm1677 = vcmp.lt.s32.totalorder %v766, 240
        %vm1678 = vcmp.lt.s32.totalorder %v767, 240
        %1679 = vrot.lane.b32.xlu0 %v1590, 112
        %v1680 = vpop.permute.xlu0 %1679
        %1681 = vrot.lane.b32.xlu0 %v1592, 112
        %v1682 = vpop.permute.xlu0 %1681
        %1683 = vrot.lane.b32.xlu0 %v1594, 112
        %v1684 = vpop.permute.xlu0 %1683
        %1685 = vrot.lane.b32.xlu0 %v1596, 112
        %v1686 = vpop.permute.xlu0 %1685
        %1687 = vrot.lane.b32.xlu0 %v1598, 112
        %v1688 = vpop.permute.xlu0 %1687
        %1689 = vrot.lane.b32.xlu0 %v1600, 112
        %v1690 = vpop.permute.xlu0 %1689
        %1691 = vrot.lane.b32.xlu0 %v1602, 112
        %v1692 = vpop.permute.xlu0 %1691
        %1693 = vrot.lane.b32.xlu0 %v1604, 112
        %v1694 = vpop.permute.xlu0 %1693
        %1695 = vrot.lane.b32.xlu0 %v1591, 112
        %v1696 = vpop.permute.xlu0 %1695
        %1697 = vrot.lane.b32.xlu0 %v1593, 112
        %v1698 = vpop.permute.xlu0 %1697
        %1699 = vrot.lane.b32.xlu0 %v1595, 112
        %v1700 = vpop.permute.xlu0 %1699
        %1701 = vrot.lane.b32.xlu0 %v1597, 112
        %v1702 = vpop.permute.xlu0 %1701
        %1703 = vrot.lane.b32.xlu0 %v1599, 112
        %v1704 = vpop.permute.xlu0 %1703
        %1705 = vrot.lane.b32.xlu0 %v1601, 112
        %v1706 = vpop.permute.xlu0 %1705
        %1707 = vrot.lane.b32.xlu0 %v1603, 112
        %v1708 = vpop.permute.xlu0 %1707
        %1709 = vrot.lane.b32.xlu0 %v1605, 112
        %v1710 = vpop.permute.xlu0 %1709
        %vm1711 = vcmp.lt.s32.totalorder %v766, 112
        %v1712 = vsel %vm1711, %v1680, %v1696
        %v1713 = vsel %vm1711, %v1682, %v1698
        %v1714 = vsel %vm1711, %v1684, %v1700
        %v1715 = vsel %vm1711, %v1686, %v1702
        %v1716 = vsel %vm1711, %v1688, %v1704
        %v1717 = vsel %vm1711, %v1690, %v1706
        %v1718 = vsel %vm1711, %v1692, %v1708
        %v1719 = vsel %vm1711, %v1694, %v1710
        %v1720 = vsel %vm1711, %v1696, %v1680
        %v1721 = vsel %vm1711, %v1698, %v1682
        %v1722 = vsel %vm1711, %v1700, %v1684
        %v1723 = vsel %vm1711, %v1702, %v1686
        %v1724 = vsel %vm1711, %v1704, %v1688
        %v1725 = vsel %vm1711, %v1706, %v1690
        %v1726 = vsel %vm1711, %v1708, %v1692
        %v1727 = vsel %vm1711, %v1710, %v1694
        %v1728 = vsel %vm1677, 1, 0
        %v1729 = vsel %vm1678, 1, 0
        %vm1730 = vcmp.eq.s32.totalorder %v1728, 1
        %vm1731 = vcmp.eq.s32.totalorder %v1729, 1
        %v1732 = vsel %vm1730, %v1712, 0.0
        %v1733 = vsel %vm1731, %v1720, 0.0
        %v1734 = vsel %vm1730, %v1713, 0.0
        %v1735 = vsel %vm1731, %v1721, 0.0
        %v1736 = vsel %vm1730, %v1714, 0.0
        %v1737 = vsel %vm1731, %v1722, 0.0
        %v1738 = vsel %vm1730, %v1715, 0.0
        %v1739 = vsel %vm1731, %v1723, 0.0
        %v1740 = vsel %vm1730, %v1716, 0.0
        %v1741 = vsel %vm1731, %v1724, 0.0
        %v1742 = vsel %vm1730, %v1717, 0.0
        %v1743 = vsel %vm1731, %v1725, 0.0
        %v1744 = vsel %vm1730, %v1718, 0.0
        %v1745 = vsel %vm1731, %v1726, 0.0
        %v1746 = vsel %vm1730, %v1719, 0.0
        %v1747 = vsel %vm1731, %v1727, 0.0
        %v1748 = vadd.f32 %v1390, %v1661
        %v1749 = vadd.f32 %v1391, %v1662
        %v1750 = vadd.f32 %v1392, %v1663
        %v1751 = vadd.f32 %v1393, %v1664
        %v1752 = vadd.f32 %v1394, %v1665
        %v1753 = vadd.f32 %v1395, %v1666
        %v1754 = vadd.f32 %v1396, %v1667
        %v1755 = vadd.f32 %v1397, %v1668
        %v1756 = vadd.f32 %v1398, %v1669
        %v1757 = vadd.f32 %v1399, %v1670
        %v1758 = vadd.f32 %v1400, %v1671
        %v1759 = vadd.f32 %v1401, %v1672
        %v1760 = vadd.f32 %v1402, %v1673
        %v1761 = vadd.f32 %v1403, %v1674
        %v1762 = vadd.f32 %v1404, %v1675
        %v1763 = vadd.f32 %v1405, %v1676
        %v1764 = vadd.f32 %v1748, %v1732
        %v1765 = vadd.f32 %v1749, %v1733
        %v1766 = vadd.f32 %v1750, %v1734
        %v1767 = vadd.f32 %v1751, %v1735
        %v1768 = vadd.f32 %v1752, %v1736
        %v1769 = vadd.f32 %v1753, %v1737
        %v1770 = vadd.f32 %v1754, %v1738
        %v1771 = vadd.f32 %v1755, %v1739
        %v1772 = vadd.f32 %v1756, %v1740
        %v1773 = vadd.f32 %v1757, %v1741
        %v1774 = vadd.f32 %v1758, %v1742
        %v1775 = vadd.f32 %v1759, %v1743
        %v1776 = vadd.f32 %v1760, %v1744
        %v1777 = vadd.f32 %v1761, %v1745
        %v1778 = vadd.f32 %v1762, %v1746
        %v1779 = vadd.f32 %v1763, %v1747
        %v1780 = vld [vmem:[#allocation13] sm:$0xff]
        %v1781 = vld [vmem:[#allocation13 + $0x8] sm:$0xff]
        %v1782 = vld [vmem:[#allocation13 + $0x10] sm:$0xff]
        %v1783 = vld [vmem:[#allocation13 + $0x18] sm:$0xff]
        %v1784 = vld [vmem:[#allocation13 + $0x20] sm:$0xff]
        %v1785 = vld [vmem:[#allocation13 + $0x28] sm:$0xff]
        %v1786 = vld [vmem:[#allocation13 + $0x30] sm:$0xff]
        %v1787 = vld [vmem:[#allocation13 + $0x38] sm:$0xff]
        %1789 = vset.pattern.permute.xlu0 0
        %1790 = vperm.xlu0 %1789, %v1780
        %v1791 = vpop.permute.xlu0 %1790
        %1794 = vset.pattern.permute.xlu0 0
        %1795 = vperm.xlu0 %1794, %v1781
        %v1796 = vpop.permute.xlu0 %1795
        %1799 = vset.pattern.permute.xlu0 0
        %1800 = vperm.xlu0 %1799, %v1782
        %v1801 = vpop.permute.xlu0 %1800
        %1804 = vset.pattern.permute.xlu0 0
        %1805 = vperm.xlu0 %1804, %v1783
        %v1806 = vpop.permute.xlu0 %1805
        %1809 = vset.pattern.permute.xlu0 0
        %1810 = vperm.xlu0 %1809, %v1784
        %v1811 = vpop.permute.xlu0 %1810
        %1814 = vset.pattern.permute.xlu0 0
        %1815 = vperm.xlu0 %1814, %v1785
        %v1816 = vpop.permute.xlu0 %1815
        %1819 = vset.pattern.permute.xlu0 0
        %1820 = vperm.xlu0 %1819, %v1786
        %v1821 = vpop.permute.xlu0 %1820
        %1824 = vset.pattern.permute.xlu0 0
        %1825 = vperm.xlu0 %1824, %v1787
        %v1826 = vpop.permute.xlu0 %1825
        %v1828 = vadd.f32 %v1764, %v1791
        %v1829 = vadd.f32 %v1765, %v1791
        %v1830 = vadd.f32 %v1766, %v1796
        %v1831 = vadd.f32 %v1767, %v1796
        %v1832 = vadd.f32 %v1768, %v1801
        %v1833 = vadd.f32 %v1769, %v1801
        %v1834 = vadd.f32 %v1770, %v1806
        %v1835 = vadd.f32 %v1771, %v1806
        %v1836 = vadd.f32 %v1772, %v1811
        %v1837 = vadd.f32 %v1773, %v1811
        %v1838 = vadd.f32 %v1774, %v1816
        %v1839 = vadd.f32 %v1775, %v1816
        %v1840 = vadd.f32 %v1776, %v1821
        %v1841 = vadd.f32 %v1777, %v1821
        %v1842 = vadd.f32 %v1778, %v1826
        %v1843 = vadd.f32 %v1779, %v1826
        %v1844 = vmul.f32 %v1828, 0.5
        %v1845 = vmul.f32 %v1829, 0.5
        %v1846 = vmul.f32 %v1830, 0.5
        %v1847 = vmul.f32 %v1831, 0.5
        %v1848 = vmul.f32 %v1832, 0.5
        %v1849 = vmul.f32 %v1833, 0.5
        %v1850 = vmul.f32 %v1834, 0.5
        %v1851 = vmul.f32 %v1835, 0.5
        %v1852 = vmul.f32 %v1828, 0.70710677
        %v1853 = vmul.f32 %v1829, 0.70710677
        %v1854 = vmul.f32 %v1830, 0.70710677
        %v1855 = vmul.f32 %v1831, 0.70710677
        %v1856 = vmul.f32 %v1832, 0.70710677
        %v1857 = vmul.f32 %v1833, 0.70710677
        %v1858 = vmul.f32 %v1834, 0.70710677
        %v1859 = vmul.f32 %v1835, 0.70710677
        %v1860 = verf.f32.pop %v1852
        %v1861 = verf.f32.pop %v1853
        %v1862 = verf.f32.pop %v1854
        %v1863 = verf.f32.pop %v1855
        %v1864 = verf.f32.pop %v1856
        %v1865 = verf.f32.pop %v1857
        %v1866 = verf.f32.pop %v1858
        %v1867 = verf.f32.pop %v1859
        %v1868 = vadd.f32 %v1860, 1.0
        %v1869 = vadd.f32 %v1861, 1.0
        %v1870 = vadd.f32 %v1862, 1.0
        %v1871 = vadd.f32 %v1863, 1.0
        %v1872 = vadd.f32 %v1864, 1.0
        %v1873 = vadd.f32 %v1865, 1.0
        %v1874 = vadd.f32 %v1866, 1.0
        %v1875 = vadd.f32 %v1867, 1.0
        %v1876 = vmul.f32 %v1844, %v1868
        %v1877 = vmul.f32 %v1845, %v1869
        %v1878 = vmul.f32 %v1846, %v1870
        %v1879 = vmul.f32 %v1847, %v1871
        %v1880 = vmul.f32 %v1848, %v1872
        %v1881 = vmul.f32 %v1849, %v1873
        %v1882 = vmul.f32 %v1850, %v1874
        %v1883 = vmul.f32 %v1851, %v1875
        %v1884 = vmul.f32 %v1876, %v1836
        %v1885 = vmul.f32 %v1877, %v1837
        %v1886 = vmul.f32 %v1878, %v1838
        %v1887 = vmul.f32 %v1879, %v1839
        %v1888 = vmul.f32 %v1880, %v1840
        %v1889 = vmul.f32 %v1881, %v1841
        %v1890 = vmul.f32 %v1882, %v1842
        %v1891 = vmul.f32 %v1883, %v1843
        %v1892 = vld [vmem:[#allocation14] sm:$0xf]
        %v1893 = vld [vmem:[#allocation14 + $0x4] sm:$0xf]
        %v1894 = vpack.c.bf16 %v1886, %v1884
        %v1895 = vpack.c.bf16 %v1887, %v1885
        %v1896 = vpack.c.bf16 %v1890, %v1888
        %v1897 = vpack.c.bf16 %v1891, %v1889
        %v1898 = vld [vmem:[#allocation16] sm:$0xff]
        %v1899 = vld [vmem:[#allocation16 + $0x8] sm:$0xff]
        %1901 = vset.pattern.permute.xlu0 0
        %1902 = vperm.xlu0 %1901, %v1898
        %v1903 = vpop.permute.xlu0 %1902
        %1906 = vset.pattern.permute.xlu0 0
        %1907 = vperm.xlu0 %1906, %v1899
        %v1908 = vpop.permute.xlu0 %1907
        %v1912 = vunpack.c.l.b16 %v1892
        %v1913 = vunpack.c.l.b16 %v1893
        %v1914 = vpack.c.b16 %v1913, %v1912
        %vm1915 = vcmask 261120
        %v1917 = vsel %vm1915, %v1914, 0
        %1919 = vmatprep.subr.bf16.mxu0 %v1895
        %1920 = vmatpush1.bf16.msra.mxu0 %v1894
        %1921 = vmatprep.subr.bf16.mxu0 %v1897
        %1922 = vmatpush1.bf16.msra.mxu0 %v1896
        %1923 = vmatprep.subr.bf16.mxu0 0
        %1924 = vmatpush1.bf16.msra.mxu0 0
        %1925 = vmatprep.subr.bf16.mxu0 0
        %1926 = vmatpush1.bf16.msra.mxu0 0
        %1927 = vmatprep.subr.bf16.mxu0 0
        %1928 = vmatpush1.bf16.msra.mxu0 0
        %1929 = vmatprep.subr.bf16.mxu0 0
        %1930 = vmatpush1.bf16.msra.mxu0 0
        %1931 = vmatprep.subr.bf16.mxu0 0
        %1932 = vmatpush1.bf16.msra.mxu0 0
        %1933 = vmatprep.subr.bf16.mxu0 0
        %1934 = vmatpush1.bf16.msra.mxu0 0
        %1935 = vmatprep.subr.bf16.mxu0 0
        %1936 = vmatpush1.bf16.msra.mxu0 0
        %1937 = vmatprep.subr.bf16.mxu0 0
        %1938 = vmatpush1.bf16.msra.mxu0 0
        %1939 = vmatprep.subr.bf16.mxu0 0
        %1940 = vmatpush1.bf16.msra.mxu0 0
        %1941 = vmatprep.subr.bf16.mxu0 0
        %1942 = vmatpush1.bf16.msra.mxu0 0
        %1943 = vmatprep.subr.bf16.mxu0 0
        %1944 = vmatpush1.bf16.msra.mxu0 0
        %1945 = vmatprep.subr.bf16.mxu0 0
        %1946 = vmatpush1.bf16.msra.mxu0 0
        %1947 = vmatprep.subr.bf16.mxu0 0
        %1948 = vmatpush1.bf16.msra.mxu0 0
        %1949 = vmatprep.subr.bf16.mxu0 0
        %1950 = vmatpush1.bf16.msra.mxu0 0
        %1951 = vmatprep.mubr.bf16.mxu0 0
        %1952 = vmatmul.mubr.bf16.gmra.mrb[0].mxu0 %v1917
        %v1953 = vpop.f32.mrb[0].mxu0
        %v1954 = vadd.f32 %v1903, %v1953
        %v1955 = vpop.f32.mrb[0].mxu0
        %v1956 = vadd.f32 %v1903, %v1955
        %v1957 = vpop.f32.mrb[0].mxu0
        %v1958 = vadd.f32 %v1908, %v1957
        %v1959 = vpop.f32.mrb[0].mxu0
        %v1960 = vadd.f32 %v1908, %v1959
        %1961 = vdwg.mxu0
        %v1962 = vadd.f32 %v1954, %v516
        %v1963 = vadd.f32 %v1956, %v517
        %v1964 = vadd.f32 %v1958, %v518
        %v1965 = vadd.f32 %v1960, %v519
        %1966 = vst [vmem:[%s514] sm:$0xff] %v1962
        %1967 = vst [vmem:[%s514 + $0x8] sm:$0xff] %v1963
        %1968 = vst [vmem:[%s514 + $0x10] sm:$0xff] %v1964
        %1969 = vst [vmem:[%s514 + $0x18] sm:$0xff] %v1965
        %s1970 = sand.u32 %s244, 1
        %s1971 = scalar_lea.sflag [#allocation4], %s1970
        %s1972 = sand.u32 %s244, 1
        %s1973 = smul.addr %s1972, 32
        %s1974 = scalar_lea.vmem [#allocation17], %s1973
        // Predicated region
        $region93: #{transformer_block_forward.3} parent=55 // pred_check
          %p1975 = pneg %p254
        $region94: #{transformer_block_forward.3} parent=55 // pred_check_branch
          %1977 = sbr.rel (%p1975) target = $region96
        $region95: #{transformer_block_forward.3} parent=55 // pred_region
          %s1979 = ssub.s32 512, 512
          %1980 = vsyncadd %s1971, %s1979
          %s1981 = smul.addr %s32, 4
          %s1982 = smul.addr %s1981, 128
          %s1983 = scalar_lea.hbm %s9, %s1982
          %s1984 = sshll.u32 %s1974, 4
          %s1985 = int_to_ptr.vmem [resolvable:$true] %s1984
          %1990 = dma.vmem_to_hbm [thread:$0]  %s1985, 512, %s1983, %s1971, 256, 256, 16
        $region96: #{transformer_block_forward.3} parent=55 // pred_fallthru
          _
      $region56: #{transformer_block_forward.3} parent=5 // pred_fallthru
        _
      %p1991 = scmp.le.s32.totalorder 2, %s27
      // Predicated region
      $region97: #{transformer_block_forward.3} parent=5 // pred_check
        %p1992 = pneg %p1991
      $region98: #{transformer_block_forward.3} parent=5 // pred_check_branch
        %1994 = sbr.rel (%p1992) target = $region100
      $region99: #{transformer_block_forward.3} parent=5 // pred_region
        %s1995 = ssub.s32 %s27, 2
        // Predicated region
        $region101: #{transformer_block_forward.3} parent=99 // pred_check
          %p1996 = pneg %p260
        $region102: #{transformer_block_forward.3} parent=99 // pred_check_branch
          %1998 = sbr.rel (%p1996) target = $region104
        $region103: #{transformer_block_forward.3} parent=99 // pred_region
          %s1999 = sand.u32 %s245, 1
          %s2000 = scalar_lea.sflag [#allocation4], %s1999
          %s2001 = sand.u32 %s245, 1
          %s2002 = smul.addr %s2001, 32
          %s2003 = scalar_lea.vmem [#allocation17], %s2002
          %2004 = dma.done %s2000, 512
        $region104: #{transformer_block_forward.3} parent=99 // pred_fallthru
          _
      $region100: #{transformer_block_forward.3} parent=5 // pred_fallthru
        _
    $region6: #{transformer_block_forward.3} parent=1 // loop_footer
      %s31 = sadd.s32 1, %s27
    $region7: #{transformer_block_forward.3} parent=1 // loop_footer_branch
      %26 = sbr.rel target = $region3
    $region8: #{transformer_block_forward.3} parent=1 // loop_exit
      _
    %2005 = vsyncpa [#allocation3], 1
    %s2006 = scalar_lea.sflag [#allocation3], 1
    %2007 = vsyncpa %s2006, 1
    %2008 = vsyncpa [#allocation6], 1
    %s2009 = scalar_lea.sflag [#allocation6], 1
    %2010 = vsyncpa %s2009, 1
    %2011 = vsyncpa [#allocation9], 1
    %2012 = vsyncpa [#allocation12], 1
    %2013 = vsyncpa [#allocation15], 1
    %2014 = vsyncpa [#allocation4], 1
    %s2015 = scalar_lea.sflag [#allocation4], 1
    %2016 = vsyncpa %s2015, 1

</llo_original>
